<compile_context>
chip_gen: v7x
topology: tpu7x:2x2x1
jax: 0.10.0
libtpu: 0.0.40
codegen_flags: <defaults>
</compile_context>

<pallas_src>
import math

import jax
import jax.numpy as jnp
from jax.experimental import pallas as pl
from jax.experimental.pallas import tpu as pltpu

# ----------------------------- configuration (small, consistent with module) -----------------------------
VOCAB = 128
N_LAYERS = 2
D_MODEL = 64
N_HEADS = 2
HEAD_DIM = 16
HD = N_HEADS * HEAD_DIM
EXPANSION = 4
FOURIER_HIDDEN = 16
DPB_DIM = 64          # DynamicPositionBias(dim=64, depth=2)
TEMPERATURE = 15.5    # CosineAttention temperature (learnable scalar)

_NEG_BIG = -1e30      # bounded sentinel instead of -finfo.max (identical softmax result here)
_RMS_EPS = 1e-8       # TODO(synk): RMSNorm eps not given in the source; 1e-8 assumed.


# ----------------------------- the single fused kernel -----------------------------

def _fused_decoder_kernel(temps_ref,                                   # SMEM (L,)
                          x_ref, a_ref, sa_bias_ref, ca_bias_ref,      # activations + additive masks
                          sa_norm_ref, sa_qkv_ref, sa_out_ref,         # per-layer weights, stacked on L
                          ca_norm_ref, ca_q_ref, ca_kv_ref, ca_out_ref,
                          ff_norm_ref, ff_w1_ref, ff_w2_ref,
                          on_ref, ow_ref, ob_ref,                      # out_proj weights
                          logits_ref, kv_ref):                         # outputs (both 128-lane dense)
    f32 = jnp.float32
    x = x_ref[...].astype(f32)                    # (BN, C)
    a = a_ref[...].astype(f32)                    # (BM, C)   (acoustic_norm = Identity)
    ca_bias = ca_bias_ref[...]                    # (BN, BM)  0 / -1e30 cross-batch

    def rms(t, g):                                # RMSNorm, g: (1, C)
        ms = jnp.mean(t * t, axis=-1, keepdims=True)
        return t * jax.lax.rsqrt(ms + _RMS_EPS) * g

    def l2n(t):                                   # F.normalize(p=2, dim=-1), per head slice
        return t * jax.lax.rsqrt(jnp.maximum(jnp.sum(t * t, axis=-1, keepdims=True), 1e-24))

    def softmax(d):
        m = jnp.max(d, axis=-1, keepdims=True)
        e = jnp.exp(d - m)
        return e * pl.reciprocal(jnp.sum(e, axis=-1, keepdims=True), approx=True)

    def mm(p, q):                                 # plain 2D matmul, f32 accumulation
        return jnp.dot(p, q, preferred_element_type=f32)

    def qkt(p, q):                                # p @ q.T via dot_general (contract last dims)
        return jax.lax.dot_general(p, q, (((1,), (1,)), ((), ())), preferred_element_type=f32)

    kv_pieces = []                                # [l2norm(k)_l0, v_l0, l2norm(k)_l1, v_l1]
    ca_scale = 1.0 / math.sqrt(HEAD_DIM)

    for l in range(N_LAYERS):
        # ---------------- PreNorm(CosineAttention, causal) + residual ----------------
        xn = rms(x, sa_norm_ref[l])
        qkv = mm(xn, sa_qkv_ref[l])               # (BN, 3*HD), column blocks q|k|v, head-major
        temp = temps_ref[l]
        sa_heads, kn_heads = [], []
        for h in range(N_HEADS):
            s = h * HEAD_DIM
            q_h = l2n(qkv[:, s:s + HEAD_DIM])
            k_h = l2n(qkv[:, HD + s:HD + s + HEAD_DIM])
            v_h = qkv[:, 2 * HD + s:2 * HD + s + HEAD_DIM]
            # pos_bias + causal mask + cross-batch mask pre-folded (additive) on the host
            dots = qkt(q_h, k_h) * temp + sa_bias_ref[h]          # (BN, BN)
            sa_heads.append(mm(softmax(dots), v_h))               # (BN, D)
            kn_heads.append(k_h)
        sa = jnp.concatenate(sa_heads, axis=-1)                   # (BN, HD)
        x = x + mm(sa, sa_out_ref[l])
        kv_pieces.append(jnp.concatenate(kn_heads, axis=-1))      # l2norm(k), head-major
        kv_pieces.append(qkv[:, 2 * HD:3 * HD])                   # v, already head-major

        # ---------------- PreNorm(CrossAttention) + residual ----------------
        xn = rms(x, ca_norm_ref[l])
        q = mm(xn, ca_q_ref[l])                   # (BN, HD)
        kv = mm(a, ca_kv_ref[l])                  # (BM, 2*HD), column blocks k|v, head-major
        ca_heads = []
        for h in range(N_HEADS):
            s = h * HEAD_DIM
            q_h = q[:, s:s + HEAD_DIM]
            k_h = kv[:, s:s + HEAD_DIM]
            v_h = kv[:, HD + s:HD + s + HEAD_DIM]
            dots = qkt(q_h, k_h) * ca_scale + ca_bias             # (BN, BM)
            ca_heads.append(mm(softmax(dots), v_h))
        ca = jnp.concatenate(ca_heads, axis=-1)
        x = x + mm(ca, ca_out_ref[l])

        # ---------------- PreNorm(FusedMLP) + residual ----------------
        xn = rms(x, ff_norm_ref[l])
        hmid = jax.nn.gelu(mm(xn, ff_w1_ref[l]), approximate=True)   # FusedMLP uses tanh-approx gelu
        x = x + mm(hmid, ff_w2_ref[l])

    # ---------------- out_proj: RMSNorm -> Linear(+bias); lane-dense V=128 store ----------------
    xn = rms(x, on_ref[...])
    logits_ref[...] = (mm(xn, ow_ref[...]) + ob_ref[...]).astype(logits_ref.dtype)
    # single lane-dense kv-cache store: (BN, L*2*HD) = (BN, 128)
    kv_ref[...] = jnp.concatenate(kv_pieces, axis=-1).astype(kv_ref.dtype)


def _fused_call(temps, x2, a2, sa_bias, ca_bias, sw, out_norm, out_w, out_b):
    BN, C = x2.shape
    BM = a2.shape[0]
    L = N_LAYERS
    return pl.pallas_call(
        _fused_decoder_kernel,
        out_shape=(jax.ShapeDtypeStruct((BN, VOCAB), x2.dtype),
                   jax.ShapeDtypeStruct((BN, L * 2 * HD), x2.dtype)),
        grid=(1,),
        in_specs=[
            pl.BlockSpec(memory_space=pltpu.MemorySpace.SMEM),                    # temps (L,)
            pl.BlockSpec((BN, C), lambda i: (0, 0)),                              # x (B*N, C)
            pl.BlockSpec((BM, C), lambda i: (0, 0)),                              # a (B*M, C)
            pl.BlockSpec((N_HEADS, BN, BN), lambda i: (0, 0, 0)),                 # self-attn additive bias
            pl.BlockSpec((BN, BM), lambda i: (0, 0)),                             # cross-attn additive bias
            pl.BlockSpec((L, 1, C), lambda i: (0, 0, 0)),                         # sa_norm
            pl.BlockSpec((L, C, 3 * HD), lambda i: (0, 0, 0)),                    # sa_qkv (repacked)
            pl.BlockSpec((L, HD, C), lambda i: (0, 0, 0)),                        # sa_out
            pl.BlockSpec((L, 1, C), lambda i: (0, 0, 0)),                         # ca_norm
            pl.BlockSpec((L, C, HD), lambda i: (0, 0, 0)),                        # ca_q
            pl.BlockSpec((L, C, 2 * HD), lambda i: (0, 0, 0)),                    # ca_kv (repacked)
            pl.BlockSpec((L, HD, C), lambda i: (0, 0, 0)),                        # ca_out
            pl.BlockSpec((L, 1, C), lambda i: (0, 0, 0)),                         # ff_norm
            pl.BlockSpec((L, C, C * EXPANSION), lambda i: (0, 0, 0)),             # ff_w1
            pl.BlockSpec((L, C * EXPANSION, C), lambda i: (0, 0, 0)),             # ff_w2
            pl.BlockSpec((1, C), lambda i: (0, 0)),                               # out_norm
            pl.BlockSpec((C, VOCAB), lambda i: (0, 0)),                           # out_w
            pl.BlockSpec((1, VOCAB), lambda i: (0, 0)),                           # out_b
        ],
        out_specs=(pl.BlockSpec((BN, VOCAB), lambda i: (0, 0)),
                   pl.BlockSpec((BN, L * 2 * HD), lambda i: (0, 0))),
        compiler_params=pltpu.CompilerParams(dimension_semantics=("arbitrary",)),
    )(temps, x2, a2, sa_bias, ca_bias,
      sw['sa_norm'], sw['sa_qkv'], sw['sa_out'],
      sw['ca_norm'], sw['ca_q'], sw['ca_kv'], sw['ca_out'],
      sw['ff_norm'], sw['ff_w1'], sw['ff_w2'],
      out_norm, out_w, out_b)


# ----------------------------- host-side weight stacking / repacking -----------------------------

def _stack_layer_params(layers):
    C = D_MODEL

    def repack_qkv(w):   # torch column order (h, d, qkv) -> contiguous q|k|v blocks, head-major
        return jnp.transpose(w.reshape(C, N_HEADS, HEAD_DIM, 3), (0, 3, 1, 2)).reshape(C, 3 * HD)

    def repack_kv(w):    # torch column order (h, d, kv) -> contiguous k|v blocks, head-major
        return jnp.transpose(w.reshape(C, N_HEADS, HEAD_DIM, 2), (0, 3, 1, 2)).reshape(C, 2 * HD)

    def stk(key, fn=lambda t: t):
        return jnp.stack([fn(lp[key]) for lp in layers], axis=0)

    return dict(
        temps=jnp.concatenate([lp['sa_temp'] for lp in layers]),          # (L,)
        sa_norm=stk('sa_norm', lambda t: t.reshape(1, C)),
        sa_qkv=stk('sa_qkv', repack_qkv),
        sa_out=stk('sa_out'),
        ca_norm=stk('ca_norm', lambda t: t.reshape(1, C)),
        ca_q=stk('ca_q'),
        ca_kv=stk('ca_kv', repack_kv),
        ca_out=stk('ca_out'),
        ff_norm=stk('ff_norm', lambda t: t.reshape(1, C)),
        ff_w1=stk('ff_w1'),
        ff_w2=stk('ff_w2'),
    )


# ----------------------------- host-side additive masks / bias tensors -----------------------------

def build_self_attn_bias(pos_bias, B, N):
    """(H, N, N) pos_bias -> (H, B*N, B*N) additive bias with causal + cross-batch mask folded in."""
    BN = B * N
    tiled = jnp.tile(pos_bias, (1, B, B))                      # [h, r, c] = pos_bias[h, r%N, c%N]
    r = jnp.arange(BN)
    same_batch = (r[:, None] // N) == (r[None, :] // N)
    causal = (r[None, :] % N) <= (r[:, None] % N)
    return jnp.where((same_batch & causal)[None], tiled, _NEG_BIG).astype(jnp.float32)


def build_cross_attn_bias(B, N, M):
    """(B*N, B*M) additive mask: 0 within the same batch element, -1e30 across batch elements."""
    rq = jnp.arange(B * N) // N
    rk = jnp.arange(B * M) // M
    return jnp.where(rq[:, None] == rk[None, :], 0.0, _NEG_BIG).astype(jnp.float32)


# ----------------------------- parameters -----------------------------

def init_params(key):
    def lin(k, fan_in, fan_out):
        lim = 1.0 / math.sqrt(fan_in)
        return jax.random.uniform(k, (fan_in, fan_out), jnp.float32, -lim, lim)

    keys = iter(jax.random.split(key, 64 + 16 * N_LAYERS))
    p = {
        'embed': jax.random.normal(next(keys), (VOCAB, D_MODEL), jnp.float32) * 0.02,
        # LearnableFourierPosEnc(d_model, hidden_dim=FOURIER_HIDDEN)
        'pe_w_r': jax.random.normal(next(keys), (1, FOURIER_HIDDEN // 2), jnp.float32),
        'pe_proj': lin(next(keys), FOURIER_HIDDEN, D_MODEL),
        # DynamicPositionBias(dim=64, heads=N_HEADS, depth=2): Lin(1,64)+SiLU, Lin(64,64)+SiLU, Lin(64,H)
        'dpb_w0': lin(next(keys), 1, DPB_DIM), 'dpb_b0': jnp.zeros((DPB_DIM,), jnp.float32),
        'dpb_w1': lin(next(keys), DPB_DIM, DPB_DIM), 'dpb_b1': jnp.zeros((DPB_DIM,), jnp.float32),
        'dpb_w2': lin(next(keys), DPB_DIM, N_HEADS), 'dpb_b2': jnp.zeros((N_HEADS,), jnp.float32),
        'out_norm': jnp.ones((D_MODEL,), jnp.float32),
        'out_w': lin(next(keys), D_MODEL, VOCAB),
        'out_b': jnp.zeros((VOCAB,), jnp.float32),
    }
    layers = []
    for _ in range(N_LAYERS):
        layers.append({
            'sa_norm': jnp.ones((D_MODEL,), jnp.float32),
            'sa_qkv': lin(next(keys), D_MODEL, 3 * HD),
            'sa_out': lin(next(keys), HD, D_MODEL),
            'sa_temp': jnp.array([TEMPERATURE], jnp.float32),
            'ca_norm': jnp.ones((D_MODEL,), jnp.float32),
            'ca_q': lin(next(keys), D_MODEL, HD),
            'ca_kv': lin(next(keys), D_MODEL, 2 * HD),
            'ca_out': lin(next(keys), HD, D_MODEL),
            'ff_norm': jnp.ones((D_MODEL,), jnp.float32),
            'ff_w1': lin(next(keys), D_MODEL, D_MODEL * EXPANSION),
            'ff_w2': lin(next(keys), D_MODEL * EXPANSION, D_MODEL),
        })
    p['layers'] = layers
    return p


# ----------------------------- tiny positional MLPs (plain XLA; launch overhead >> compute) ------------

def fourier_pos_enc(p, n):
    # TODO(synk): LearnableFourierPosEnc body not provided in the source; implemented as
    # learnable Fourier features (cos/sin of p*w_r) followed by a linear projection.
    pos = jnp.arange(n, dtype=jnp.float32)[:, None]                 # (N, 1)
    feats = pos * p['pe_w_r']                                       # (N, hidden//2)
    pe = jnp.concatenate([jnp.cos(feats), jnp.sin(feats)], -1) / math.sqrt(FOURIER_HIDDEN)
    return pe @ p['pe_proj']                                        # (N, d_model)


def dynamic_pos_bias(p, n):
    # create_masks_and_positions, no cache / full lengths:
    # positional_grid[r, i] = r - i ; indices = grid + (N - 1) ; pos = [-(N-1), ..., N-1]
    r = jnp.arange(n)
    idx = (r[:, None] - r[None, :]) + (n - 1)                       # (N, N) in [0, 2N-2]
    pos = jnp.arange(-(n - 1), n, dtype=jnp.float32)[:, None]       # (2N-1, 1)
    h = jax.nn.silu(pos * p['dpb_w0'] + p['dpb_b0'])                # (2N-1, 64)
    h = jax.nn.silu(h @ p['dpb_w1'] + p['dpb_b1'])                  # (2N-1, 64)
    h = h @ p['dpb_w2'] + p['dpb_b2']                               # (2N-1, H)
    return jnp.transpose(h[idx], (2, 0, 1)).astype(jnp.float32)     # (H, N, N)


# ----------------------------- forward -----------------------------

def cross_attn_decoder_forward(params, tokens, a_hidden, a_lengths):
    B, N = tokens.shape
    M = a_hidden.shape[1]
    C = D_MODEL

    x = params['embed'][tokens]                                     # nn.Embedding
    x = x + fourier_pos_enc(params, N)[None]                        # pos_enc (dropout_emb = 0)

    # acoustic_norm defaults to Identity; a_lengths all equal -> kv_mask = None path
    pos_bias = dynamic_pos_bias(params, N)                          # (H, N, N)
    sa_bias = build_self_attn_bias(pos_bias, B, N)                  # (H, B*N, B*N) incl. causal + batch mask
    ca_bias = build_cross_attn_bias(B, N, M)                        # (B*N, B*M) batch-block mask
    sw = _stack_layer_params(params['layers'])

    x2 = x.reshape(B * N, C)
    a2 = a_hidden.reshape(B * M, C)

    logits2, kv2 = _fused_call(sw['temps'], x2, a2, sa_bias, ca_bias, sw,
                               params['out_norm'].reshape(1, C),
                               params['out_w'],
                               params['out_b'].reshape(1, VOCAB))

    logits = logits2.reshape(B, N, VOCAB)
    # (B*N, L*2*H*D) -> (L, 2, B, H, N, D)  ([l2norm(k), v] per layer; attach_cache layout)
    kv = kv2.reshape(B, N, N_LAYERS, 2, N_HEADS, HEAD_DIM)
    kv_cache = jnp.transpose(kv, (2, 3, 0, 4, 1, 5))
    total_lens = jnp.full((B,), N, dtype=jnp.int32)
    return {'logits': logits, 'kv_cache': {'cache_lengths': total_lens, 'cache': kv_cache}}


# ----------------------------- main -----------------------------

if __name__ == "__main__":
    key = jax.random.PRNGKey(0)
    k_param, k_tok, k_ac = jax.random.split(key, 3)

    params = init_params(k_param)

    B, N_TXT, N_AC = 2, 8, 16
    tokens = jax.random.randint(k_tok, (B, N_TXT), 0, VOCAB, dtype=jnp.int32)
    a_hidden = jax.random.normal(k_ac, (B, N_AC, D_MODEL), jnp.float32)
    a_lengths = jnp.full((B,), N_AC, dtype=jnp.int32)

    fwd = jax.jit(cross_attn_decoder_forward)
    out = fwd(params, tokens, a_hidden, a_lengths)
    jax.block_until_ready(out['logits'])
    jax.block_until_ready(out['kv_cache']['cache'])

    assert out['logits'].shape == (B, N_TXT, VOCAB)
    assert out['kv_cache']['cache'].shape == (N_LAYERS, 2, B, N_HEADS, N_TXT, HEAD_DIM)
    assert bool(jnp.all(jnp.isfinite(out['logits'])))
    print("KERNEL_OK")
</pallas_src>

<mosaic_0001>
module attributes {stable_mosaic.version = 11 : i64} {
  func.func @_fused_decoder_kernel(%arg0: i32, %arg1: memref<2xf32, #tpu.memory_space<smem>>, %arg2: memref<16x64xf32, #tpu.memory_space<vmem>>, %arg3: memref<32x64xf32, #tpu.memory_space<vmem>>, %arg4: memref<2x16x16xf32, #tpu.memory_space<vmem>>, %arg5: memref<16x32xf32, #tpu.memory_space<vmem>>, %arg6: memref<2x1x64xf32, #tpu.memory_space<vmem>>, %arg7: memref<2x64x96xf32, #tpu.memory_space<vmem>>, %arg8: memref<2x32x64xf32, #tpu.memory_space<vmem>>, %arg9: memref<2x1x64xf32, #tpu.memory_space<vmem>>, %arg10: memref<2x64x32xf32, #tpu.memory_space<vmem>>, %arg11: memref<2x64x64xf32, #tpu.memory_space<vmem>>, %arg12: memref<2x32x64xf32, #tpu.memory_space<vmem>>, %arg13: memref<2x1x64xf32, #tpu.memory_space<vmem>>, %arg14: memref<2x64x256xf32, #tpu.memory_space<vmem>>, %arg15: memref<2x256x64xf32, #tpu.memory_space<vmem>>, %arg16: memref<1x64xf32, #tpu.memory_space<vmem>>, %arg17: memref<64x128xf32, #tpu.memory_space<vmem>>, %arg18: memref<1x128xf32, #tpu.memory_space<vmem>>, %arg19: memref<16x128xf32, #tpu.memory_space<vmem>>, %arg20: memref<16x128xf32, #tpu.memory_space<vmem>>) attributes {dimension_semantics = [#tpu.dimension_semantics<arbitrary>], iteration_bounds = array<i64: 1>, scalar_prefetch = 0 : i64, scratch_operands = 0 : i64, tpu.core_type = #tpu.core_type<tc>, window_params = [{transform_indices = @transform_0, window_bounds = array<i64: 2>}, {pipeline_mode = #tpu.pipeline_mode<synchronous>, transform_indices = @transform_1, window_bounds = array<i64: 16, 64>}, {pipeline_mode = #tpu.pipeline_mode<synchronous>, transform_indices = @transform_2, window_bounds = array<i64: 32, 64>}, {pipeline_mode = #tpu.pipeline_mode<synchronous>, transform_indices = @transform_3, window_bounds = array<i64: 2, 16, 16>}, {pipeline_mode = #tpu.pipeline_mode<synchronous>, transform_indices = @transform_4, window_bounds = array<i64: 16, 32>}, {pipeline_mode = #tpu.pipeline_mode<synchronous>, transform_indices = @transform_5, window_bounds = array<i64: 2, 1, 64>}, {pipeline_mode = #tpu.pipeline_mode<synchronous>, transform_indices = @transform_6, window_bounds = array<i64: 2, 64, 96>}, {pipeline_mode = #tpu.pipeline_mode<synchronous>, transform_indices = @transform_7, window_bounds = array<i64: 2, 32, 64>}, {pipeline_mode = #tpu.pipeline_mode<synchronous>, transform_indices = @transform_8, window_bounds = array<i64: 2, 1, 64>}, {pipeline_mode = #tpu.pipeline_mode<synchronous>, transform_indices = @transform_9, window_bounds = array<i64: 2, 64, 32>}, {pipeline_mode = #tpu.pipeline_mode<synchronous>, transform_indices = @transform_10, window_bounds = array<i64: 2, 64, 64>}, {pipeline_mode = #tpu.pipeline_mode<synchronous>, transform_indices = @transform_11, window_bounds = array<i64: 2, 32, 64>}, {pipeline_mode = #tpu.pipeline_mode<synchronous>, transform_indices = @transform_12, window_bounds = array<i64: 2, 1, 64>}, {pipeline_mode = #tpu.pipeline_mode<synchronous>, transform_indices = @transform_13, window_bounds = array<i64: 2, 64, 256>}, {pipeline_mode = #tpu.pipeline_mode<synchronous>, transform_indices = @transform_14, window_bounds = array<i64: 2, 256, 64>}, {pipeline_mode = #tpu.pipeline_mode<synchronous>, transform_indices = @transform_15, window_bounds = array<i64: 1, 64>}, {pipeline_mode = #tpu.pipeline_mode<synchronous>, transform_indices = @transform_16, window_bounds = array<i64: 64, 128>}, {pipeline_mode = #tpu.pipeline_mode<synchronous>, transform_indices = @transform_17, window_bounds = array<i64: 1, 128>}, {pipeline_mode = #tpu.pipeline_mode<synchronous>, transform_indices = @transform_18, window_bounds = array<i64: 16, 128>}, {pipeline_mode = #tpu.pipeline_mode<synchronous>, transform_indices = @transform_19, window_bounds = array<i64: 16, 128>}]} {
    %c0 = arith.constant 0 : index
    %c0_0 = arith.constant 0 : index
    %0 = vector.load %arg2[%c0, %c0_0] : memref<16x64xf32, #tpu.memory_space<vmem>>, vector<16x64xf32>
    %c0_1 = arith.constant 0 : index
    %c0_2 = arith.constant 0 : index
    %1 = vector.load %arg3[%c0_1, %c0_2] : memref<32x64xf32, #tpu.memory_space<vmem>>, vector<32x64xf32>
    %c0_3 = arith.constant 0 : index
    %c0_4 = arith.constant 0 : index
    %2 = vector.load %arg5[%c0_3, %c0_4] : memref<16x32xf32, #tpu.memory_space<vmem>>, vector<16x32xf32>
    %c0_5 = arith.constant 0 : index
    %c0_6 = arith.constant 0 : index
    %c0_7 = arith.constant 0 : index
    %3 = vector.load %arg6[%c0_5, %c0_6, %c0_7] : memref<2x1x64xf32, #tpu.memory_space<vmem>>, vector<1x1x64xf32>
    %4 = vector.shape_cast %3 : vector<1x1x64xf32> to vector<1x64xf32>
    %5 = arith.mulf %0, %0 : vector<16x64xf32>
    %cst = arith.constant dense<0.000000e+00> : vector<16xf32>
    %6 = vector.multi_reduction <add>, %5, %cst [1] : vector<16x64xf32> to vector<16xf32>
    %7 = vector.shape_cast %6 : vector<16xf32> to vector<16x1xf32>
    %cst_8 = arith.constant 6.400000e+01 : f32
    %8 = vector.broadcast %cst_8 : f32 to vector<16x1xf32>
    %9 = arith.divf %7, %8 : vector<16x1xf32>
    %cst_9 = arith.constant 9.99999993E-9 : f32
    %10 = vector.broadcast %cst_9 : f32 to vector<16x1xf32>
    %11 = arith.addf %9, %10 : vector<16x1xf32>
    %12 = math.rsqrt %11 : vector<16x1xf32>
    %13 = vector.broadcast %12 : vector<16x1xf32> to vector<16x64xf32>
    %14 = arith.mulf %0, %13 : vector<16x64xf32>
    %15 = vector.broadcast %4 : vector<1x64xf32> to vector<16x64xf32>
    %16 = arith.mulf %14, %15 : vector<16x64xf32>
    %c0_10 = arith.constant 0 : index
    %c0_11 = arith.constant 0 : index
    %c0_12 = arith.constant 0 : index
    %17 = vector.load %arg7[%c0_10, %c0_11, %c0_12] : memref<2x64x96xf32, #tpu.memory_space<vmem>>, vector<1x64x96xf32>
    %18 = vector.shape_cast %17 : vector<1x64x96xf32> to vector<64x96xf32>
    %cst_13 = arith.constant dense<0.000000e+00> : vector<16x96xf32>
    %19 = tpu.matmul %16, %18, %cst_13 {dimension_numbers = #tpu.dot_dimension_numbers<[1], [0], [0], [1], [0, 0, 1, 1], [], []>} : vector<16x64xf32>, vector<64x96xf32>, vector<16x96xf32> -> vector<16x96xf32>
    %c0_14 = arith.constant 0 : index
    %20 = memref.load %arg1[%c0_14] : memref<2xf32, #tpu.memory_space<smem>>
    %21 = vector.extract_strided_slice %19 {offsets = [0, 0], sizes = [16, 16], strides = [1, 1]} : vector<16x96xf32> to vector<16x16xf32>
    %22 = arith.mulf %21, %21 : vector<16x16xf32>
    %cst_15 = arith.constant dense<0.000000e+00> : vector<16xf32>
    %23 = vector.multi_reduction <add>, %22, %cst_15 [1] : vector<16x16xf32> to vector<16xf32>
    %24 = vector.shape_cast %23 : vector<16xf32> to vector<16x1xf32>
    %cst_16 = arith.constant 1.000000e-24 : f32
    %25 = vector.broadcast %cst_16 : f32 to vector<16x1xf32>
    %26 = arith.maximumf %24, %25 : vector<16x1xf32>
    %27 = math.rsqrt %26 : vector<16x1xf32>
    %28 = vector.broadcast %27 : vector<16x1xf32> to vector<16x16xf32>
    %29 = arith.mulf %21, %28 : vector<16x16xf32>
    %30 = vector.extract_strided_slice %19 {offsets = [0, 32], sizes = [16, 16], strides = [1, 1]} : vector<16x96xf32> to vector<16x16xf32>
    %31 = arith.mulf %30, %30 : vector<16x16xf32>
    %cst_17 = arith.constant dense<0.000000e+00> : vector<16xf32>
    %32 = vector.multi_reduction <add>, %31, %cst_17 [1] : vector<16x16xf32> to vector<16xf32>
    %33 = vector.shape_cast %32 : vector<16xf32> to vector<16x1xf32>
    %cst_18 = arith.constant 1.000000e-24 : f32
    %34 = vector.broadcast %cst_18 : f32 to vector<16x1xf32>
    %35 = arith.maximumf %33, %34 : vector<16x1xf32>
    %36 = math.rsqrt %35 : vector<16x1xf32>
    %37 = vector.broadcast %36 : vector<16x1xf32> to vector<16x16xf32>
    %38 = arith.mulf %30, %37 : vector<16x16xf32>
    %39 = vector.extract_strided_slice %19 {offsets = [0, 64], sizes = [16, 16], strides = [1, 1]} : vector<16x96xf32> to vector<16x16xf32>
    %cst_19 = arith.constant dense<0.000000e+00> : vector<16x16xf32>
    %40 = tpu.matmul %29, %38, %cst_19 {dimension_numbers = #tpu.dot_dimension_numbers<[1], [1], [0], [0], [0, 0, 1, 0], [], []>} : vector<16x16xf32>, vector<16x16xf32>, vector<16x16xf32> -> vector<16x16xf32>
    %41 = vector.broadcast %20 : f32 to vector<16x16xf32>
    %42 = arith.mulf %40, %41 : vector<16x16xf32>
    %c0_20 = arith.constant 0 : index
    %c0_21 = arith.constant 0 : index
    %c0_22 = arith.constant 0 : index
    %43 = vector.load %arg4[%c0_20, %c0_21, %c0_22] : memref<2x16x16xf32, #tpu.memory_space<vmem>>, vector<1x16x16xf32>
    %44 = vector.shape_cast %43 : vector<1x16x16xf32> to vector<16x16xf32>
    %45 = arith.addf %42, %44 : vector<16x16xf32>
    %cst_23 = arith.constant dense<0xFF800000> : vector<16xf32>
    %46 = vector.multi_reduction <maximumf>, %45, %cst_23 [1] : vector<16x16xf32> to vector<16xf32>
    %47 = vector.shape_cast %46 : vector<16xf32> to vector<16x1xf32>
    %48 = vector.broadcast %47 : vector<16x1xf32> to vector<16x16xf32>
    %49 = arith.subf %45, %48 : vector<16x16xf32>
    %50 = math.exp %49 : vector<16x16xf32>
    %cst_24 = arith.constant dense<0.000000e+00> : vector<16xf32>
    %51 = vector.multi_reduction <add>, %50, %cst_24 [1] : vector<16x16xf32> to vector<16xf32>
    %52 = vector.shape_cast %51 : vector<16xf32> to vector<16x1xf32>
    %53 = tpu.reciprocal %52 {approx = true} : vector<16x1xf32> -> vector<16x1xf32>
    %54 = vector.broadcast %53 : vector<16x1xf32> to vector<16x16xf32>
    %55 = arith.mulf %50, %54 : vector<16x16xf32>
    %cst_25 = arith.constant dense<0.000000e+00> : vector<16x16xf32>
    %56 = tpu.matmul %55, %39, %cst_25 {dimension_numbers = #tpu.dot_dimension_numbers<[1], [0], [0], [1], [0, 0, 1, 1], [], []>} : vector<16x16xf32>, vector<16x16xf32>, vector<16x16xf32> -> vector<16x16xf32>
    %57 = vector.extract_strided_slice %19 {offsets = [0, 16], sizes = [16, 16], strides = [1, 1]} : vector<16x96xf32> to vector<16x16xf32>
    %58 = arith.mulf %57, %57 : vector<16x16xf32>
    %cst_26 = arith.constant dense<0.000000e+00> : vector<16xf32>
    %59 = vector.multi_reduction <add>, %58, %cst_26 [1] : vector<16x16xf32> to vector<16xf32>
    %60 = vector.shape_cast %59 : vector<16xf32> to vector<16x1xf32>
    %cst_27 = arith.constant 1.000000e-24 : f32
    %61 = vector.broadcast %cst_27 : f32 to vector<16x1xf32>
    %62 = arith.maximumf %60, %61 : vector<16x1xf32>
    %63 = math.rsqrt %62 : vector<16x1xf32>
    %64 = vector.broadcast %63 : vector<16x1xf32> to vector<16x16xf32>
    %65 = arith.mulf %57, %64 : vector<16x16xf32>
    %66 = vector.extract_strided_slice %19 {offsets = [0, 48], sizes = [16, 16], strides = [1, 1]} : vector<16x96xf32> to vector<16x16xf32>
    %67 = arith.mulf %66, %66 : vector<16x16xf32>
    %cst_28 = arith.constant dense<0.000000e+00> : vector<16xf32>
    %68 = vector.multi_reduction <add>, %67, %cst_28 [1] : vector<16x16xf32> to vector<16xf32>
    %69 = vector.shape_cast %68 : vector<16xf32> to vector<16x1xf32>
    %cst_29 = arith.constant 1.000000e-24 : f32
    %70 = vector.broadcast %cst_29 : f32 to vector<16x1xf32>
    %71 = arith.maximumf %69, %70 : vector<16x1xf32>
    %72 = math.rsqrt %71 : vector<16x1xf32>
    %73 = vector.broadcast %72 : vector<16x1xf32> to vector<16x16xf32>
    %74 = arith.mulf %66, %73 : vector<16x16xf32>
    %75 = vector.extract_strided_slice %19 {offsets = [0, 80], sizes = [16, 16], strides = [1, 1]} : vector<16x96xf32> to vector<16x16xf32>
    %cst_30 = arith.constant dense<0.000000e+00> : vector<16x16xf32>
    %76 = tpu.matmul %65, %74, %cst_30 {dimension_numbers = #tpu.dot_dimension_numbers<[1], [1], [0], [0], [0, 0, 1, 0], [], []>} : vector<16x16xf32>, vector<16x16xf32>, vector<16x16xf32> -> vector<16x16xf32>
    %77 = vector.broadcast %20 : f32 to vector<16x16xf32>
    %78 = arith.mulf %76, %77 : vector<16x16xf32>
    %c1 = arith.constant 1 : index
    %c0_31 = arith.constant 0 : index
    %c0_32 = arith.constant 0 : index
    %79 = vector.load %arg4[%c1, %c0_31, %c0_32] : memref<2x16x16xf32, #tpu.memory_space<vmem>>, vector<1x16x16xf32>
    %80 = vector.shape_cast %79 : vector<1x16x16xf32> to vector<16x16xf32>
    %81 = arith.addf %78, %80 : vector<16x16xf32>
    %cst_33 = arith.constant dense<0xFF800000> : vector<16xf32>
    %82 = vector.multi_reduction <maximumf>, %81, %cst_33 [1] : vector<16x16xf32> to vector<16xf32>
    %83 = vector.shape_cast %82 : vector<16xf32> to vector<16x1xf32>
    %84 = vector.broadcast %83 : vector<16x1xf32> to vector<16x16xf32>
    %85 = arith.subf %81, %84 : vector<16x16xf32>
    %86 = math.exp %85 : vector<16x16xf32>
    %cst_34 = arith.constant dense<0.000000e+00> : vector<16xf32>
    %87 = vector.multi_reduction <add>, %86, %cst_34 [1] : vector<16x16xf32> to vector<16xf32>
    %88 = vector.shape_cast %87 : vector<16xf32> to vector<16x1xf32>
    %89 = tpu.reciprocal %88 {approx = true} : vector<16x1xf32> -> vector<16x1xf32>
    %90 = vector.broadcast %89 : vector<16x1xf32> to vector<16x16xf32>
    %91 = arith.mulf %86, %90 : vector<16x16xf32>
    %cst_35 = arith.constant dense<0.000000e+00> : vector<16x16xf32>
    %92 = tpu.matmul %91, %75, %cst_35 {dimension_numbers = #tpu.dot_dimension_numbers<[1], [0], [0], [1], [0, 0, 1, 1], [], []>} : vector<16x16xf32>, vector<16x16xf32>, vector<16x16xf32> -> vector<16x16xf32>
    %93 = tpu.concatenate %56, %92 in 1 : vector<16x16xf32>, vector<16x16xf32> -> vector<16x32xf32>
    %c0_36 = arith.constant 0 : index
    %c0_37 = arith.constant 0 : index
    %c0_38 = arith.constant 0 : index
    %94 = vector.load %arg8[%c0_36, %c0_37, %c0_38] : memref<2x32x64xf32, #tpu.memory_space<vmem>>, vector<1x32x64xf32>
    %95 = vector.shape_cast %94 : vector<1x32x64xf32> to vector<32x64xf32>
    %cst_39 = arith.constant dense<0.000000e+00> : vector<16x64xf32>
    %96 = tpu.matmul %93, %95, %cst_39 {dimension_numbers = #tpu.dot_dimension_numbers<[1], [0], [0], [1], [0, 0, 1, 1], [], []>} : vector<16x32xf32>, vector<32x64xf32>, vector<16x64xf32> -> vector<16x64xf32>
    %97 = arith.addf %0, %96 : vector<16x64xf32>
    %98 = tpu.concatenate %38, %74 in 1 : vector<16x16xf32>, vector<16x16xf32> -> vector<16x32xf32>
    %99 = vector.extract_strided_slice %19 {offsets = [0, 64], sizes = [16, 32], strides = [1, 1]} : vector<16x96xf32> to vector<16x32xf32>
    %c0_40 = arith.constant 0 : index
    %c0_41 = arith.constant 0 : index
    %c0_42 = arith.constant 0 : index
    %100 = vector.load %arg9[%c0_40, %c0_41, %c0_42] : memref<2x1x64xf32, #tpu.memory_space<vmem>>, vector<1x1x64xf32>
    %101 = vector.shape_cast %100 : vector<1x1x64xf32> to vector<1x64xf32>
    %102 = arith.mulf %97, %97 : vector<16x64xf32>
    %cst_43 = arith.constant dense<0.000000e+00> : vector<16xf32>
    %103 = vector.multi_reduction <add>, %102, %cst_43 [1] : vector<16x64xf32> to vector<16xf32>
    %104 = vector.shape_cast %103 : vector<16xf32> to vector<16x1xf32>
    %cst_44 = arith.constant 6.400000e+01 : f32
    %105 = vector.broadcast %cst_44 : f32 to vector<16x1xf32>
    %106 = arith.divf %104, %105 : vector<16x1xf32>
    %cst_45 = arith.constant 9.99999993E-9 : f32
    %107 = vector.broadcast %cst_45 : f32 to vector<16x1xf32>
    %108 = arith.addf %106, %107 : vector<16x1xf32>
    %109 = math.rsqrt %108 : vector<16x1xf32>
    %110 = vector.broadcast %109 : vector<16x1xf32> to vector<16x64xf32>
    %111 = arith.mulf %97, %110 : vector<16x64xf32>
    %112 = vector.broadcast %101 : vector<1x64xf32> to vector<16x64xf32>
    %113 = arith.mulf %111, %112 : vector<16x64xf32>
    %c0_46 = arith.constant 0 : index
    %c0_47 = arith.constant 0 : index
    %c0_48 = arith.constant 0 : index
    %114 = vector.load %arg10[%c0_46, %c0_47, %c0_48] : memref<2x64x32xf32, #tpu.memory_space<vmem>>, vector<1x64x32xf32>
    %115 = vector.shape_cast %114 : vector<1x64x32xf32> to vector<64x32xf32>
    %cst_49 = arith.constant dense<0.000000e+00> : vector<16x32xf32>
    %116 = tpu.matmul %113, %115, %cst_49 {dimension_numbers = #tpu.dot_dimension_numbers<[1], [0], [0], [1], [0, 0, 1, 1], [], []>} : vector<16x64xf32>, vector<64x32xf32>, vector<16x32xf32> -> vector<16x32xf32>
    %c0_50 = arith.constant 0 : index
    %c0_51 = arith.constant 0 : index
    %c0_52 = arith.constant 0 : index
    %117 = vector.load %arg11[%c0_50, %c0_51, %c0_52] : memref<2x64x64xf32, #tpu.memory_space<vmem>>, vector<1x64x64xf32>
    %118 = vector.shape_cast %117 : vector<1x64x64xf32> to vector<64x64xf32>
    %cst_53 = arith.constant dense<0.000000e+00> : vector<32x64xf32>
    %119 = tpu.matmul %1, %118, %cst_53 {dimension_numbers = #tpu.dot_dimension_numbers<[1], [0], [0], [1], [0, 0, 1, 1], [], []>} : vector<32x64xf32>, vector<64x64xf32>, vector<32x64xf32> -> vector<32x64xf32>
    %120 = vector.extract_strided_slice %116 {offsets = [0, 0], sizes = [16, 16], strides = [1, 1]} : vector<16x32xf32> to vector<16x16xf32>
    %121 = vector.extract_strided_slice %119 {offsets = [0, 0], sizes = [32, 16], strides = [1, 1]} : vector<32x64xf32> to vector<32x16xf32>
    %122 = vector.extract_strided_slice %119 {offsets = [0, 32], sizes = [32, 16], strides = [1, 1]} : vector<32x64xf32> to vector<32x16xf32>
    %cst_54 = arith.constant dense<0.000000e+00> : vector<16x32xf32>
    %123 = tpu.matmul %120, %121, %cst_54 {dimension_numbers = #tpu.dot_dimension_numbers<[1], [1], [0], [0], [0, 0, 1, 0], [], []>} : vector<16x16xf32>, vector<32x16xf32>, vector<16x32xf32> -> vector<16x32xf32>
    %cst_55 = arith.constant 2.500000e-01 : f32
    %124 = vector.broadcast %cst_55 : f32 to vector<16x32xf32>
    %125 = arith.mulf %123, %124 : vector<16x32xf32>
    %126 = arith.addf %125, %2 : vector<16x32xf32>
    %cst_56 = arith.constant dense<0xFF800000> : vector<16xf32>
    %127 = vector.multi_reduction <maximumf>, %126, %cst_56 [1] : vector<16x32xf32> to vector<16xf32>
    %128 = vector.shape_cast %127 : vector<16xf32> to vector<16x1xf32>
    %129 = vector.broadcast %128 : vector<16x1xf32> to vector<16x32xf32>
    %130 = arith.subf %126, %129 : vector<16x32xf32>
    %131 = math.exp %130 : vector<16x32xf32>
    %cst_57 = arith.constant dense<0.000000e+00> : vector<16xf32>
    %132 = vector.multi_reduction <add>, %131, %cst_57 [1] : vector<16x32xf32> to vector<16xf32>
    %133 = vector.shape_cast %132 : vector<16xf32> to vector<16x1xf32>
    %134 = tpu.reciprocal %133 {approx = true} : vector<16x1xf32> -> vector<16x1xf32>
    %135 = vector.broadcast %134 : vector<16x1xf32> to vector<16x32xf32>
    %136 = arith.mulf %131, %135 : vector<16x32xf32>
    %cst_58 = arith.constant dense<0.000000e+00> : vector<16x16xf32>
    %137 = tpu.matmul %136, %122, %cst_58 {dimension_numbers = #tpu.dot_dimension_numbers<[1], [0], [0], [1], [0, 0, 1, 1], [], []>} : vector<16x32xf32>, vector<32x16xf32>, vector<16x16xf32> -> vector<16x16xf32>
    %138 = vector.extract_strided_slice %116 {offsets = [0, 16], sizes = [16, 16], strides = [1, 1]} : vector<16x32xf32> to vector<16x16xf32>
    %139 = vector.extract_strided_slice %119 {offsets = [0, 16], sizes = [32, 16], strides = [1, 1]} : vector<32x64xf32> to vector<32x16xf32>
    %140 = vector.extract_strided_slice %119 {offsets = [0, 48], sizes = [32, 16], strides = [1, 1]} : vector<32x64xf32> to vector<32x16xf32>
    %cst_59 = arith.constant dense<0.000000e+00> : vector<16x32xf32>
    %141 = tpu.matmul %138, %139, %cst_59 {dimension_numbers = #tpu.dot_dimension_numbers<[1], [1], [0], [0], [0, 0, 1, 0], [], []>} : vector<16x16xf32>, vector<32x16xf32>, vector<16x32xf32> -> vector<16x32xf32>
    %cst_60 = arith.constant 2.500000e-01 : f32
    %142 = vector.broadcast %cst_60 : f32 to vector<16x32xf32>
    %143 = arith.mulf %141, %142 : vector<16x32xf32>
    %144 = arith.addf %143, %2 : vector<16x32xf32>
    %cst_61 = arith.constant dense<0xFF800000> : vector<16xf32>
    %145 = vector.multi_reduction <maximumf>, %144, %cst_61 [1] : vector<16x32xf32> to vector<16xf32>
    %146 = vector.shape_cast %145 : vector<16xf32> to vector<16x1xf32>
    %147 = vector.broadcast %146 : vector<16x1xf32> to vector<16x32xf32>
    %148 = arith.subf %144, %147 : vector<16x32xf32>
    %149 = math.exp %148 : vector<16x32xf32>
    %cst_62 = arith.constant dense<0.000000e+00> : vector<16xf32>
    %150 = vector.multi_reduction <add>, %149, %cst_62 [1] : vector<16x32xf32> to vector<16xf32>
    %151 = vector.shape_cast %150 : vector<16xf32> to vector<16x1xf32>
    %152 = tpu.reciprocal %151 {approx = true} : vector<16x1xf32> -> vector<16x1xf32>
    %153 = vector.broadcast %152 : vector<16x1xf32> to vector<16x32xf32>
    %154 = arith.mulf %149, %153 : vector<16x32xf32>
    %cst_63 = arith.constant dense<0.000000e+00> : vector<16x16xf32>
    %155 = tpu.matmul %154, %140, %cst_63 {dimension_numbers = #tpu.dot_dimension_numbers<[1], [0], [0], [1], [0, 0, 1, 1], [], []>} : vector<16x32xf32>, vector<32x16xf32>, vector<16x16xf32> -> vector<16x16xf32>
    %156 = tpu.concatenate %137, %155 in 1 : vector<16x16xf32>, vector<16x16xf32> -> vector<16x32xf32>
    %c0_64 = arith.constant 0 : index
    %c0_65 = arith.constant 0 : index
    %c0_66 = arith.constant 0 : index
    %157 = vector.load %arg12[%c0_64, %c0_65, %c0_66] : memref<2x32x64xf32, #tpu.memory_space<vmem>>, vector<1x32x64xf32>
    %158 = vector.shape_cast %157 : vector<1x32x64xf32> to vector<32x64xf32>
    %cst_67 = arith.constant dense<0.000000e+00> : vector<16x64xf32>
    %159 = tpu.matmul %156, %158, %cst_67 {dimension_numbers = #tpu.dot_dimension_numbers<[1], [0], [0], [1], [0, 0, 1, 1], [], []>} : vector<16x32xf32>, vector<32x64xf32>, vector<16x64xf32> -> vector<16x64xf32>
    %160 = arith.addf %97, %159 : vector<16x64xf32>
    %c0_68 = arith.constant 0 : index
    %c0_69 = arith.constant 0 : index
    %c0_70 = arith.constant 0 : index
    %161 = vector.load %arg13[%c0_68, %c0_69, %c0_70] : memref<2x1x64xf32, #tpu.memory_space<vmem>>, vector<1x1x64xf32>
    %162 = vector.shape_cast %161 : vector<1x1x64xf32> to vector<1x64xf32>
    %163 = arith.mulf %160, %160 : vector<16x64xf32>
    %cst_71 = arith.constant dense<0.000000e+00> : vector<16xf32>
    %164 = vector.multi_reduction <add>, %163, %cst_71 [1] : vector<16x64xf32> to vector<16xf32>
    %165 = vector.shape_cast %164 : vector<16xf32> to vector<16x1xf32>
    %cst_72 = arith.constant 6.400000e+01 : f32
    %166 = vector.broadcast %cst_72 : f32 to vector<16x1xf32>
    %167 = arith.divf %165, %166 : vector<16x1xf32>
    %cst_73 = arith.constant 9.99999993E-9 : f32
    %168 = vector.broadcast %cst_73 : f32 to vector<16x1xf32>
    %169 = arith.addf %167, %168 : vector<16x1xf32>
    %170 = math.rsqrt %169 : vector<16x1xf32>
    %171 = vector.broadcast %170 : vector<16x1xf32> to vector<16x64xf32>
    %172 = arith.mulf %160, %171 : vector<16x64xf32>
    %173 = vector.broadcast %162 : vector<1x64xf32> to vector<16x64xf32>
    %174 = arith.mulf %172, %173 : vector<16x64xf32>
    %c0_74 = arith.constant 0 : index
    %c0_75 = arith.constant 0 : index
    %c0_76 = arith.constant 0 : index
    %175 = vector.load %arg14[%c0_74, %c0_75, %c0_76] : memref<2x64x256xf32, #tpu.memory_space<vmem>>, vector<1x64x256xf32>
    %176 = vector.shape_cast %175 : vector<1x64x256xf32> to vector<64x256xf32>
    %cst_77 = arith.constant dense<0.000000e+00> : vector<16x256xf32>
    %177 = tpu.matmul %174, %176, %cst_77 {dimension_numbers = #tpu.dot_dimension_numbers<[1], [0], [0], [1], [0, 0, 1, 1], [], []>} : vector<16x64xf32>, vector<64x256xf32>, vector<16x256xf32> -> vector<16x256xf32>
    %178 = arith.mulf %177, %177 : vector<16x256xf32>
    %179 = arith.mulf %177, %178 : vector<16x256xf32>
    %cst_78 = arith.constant 4.471500e-02 : f32
    %180 = vector.broadcast %cst_78 : f32 to vector<16x256xf32>
    %181 = arith.mulf %180, %179 : vector<16x256xf32>
    %182 = arith.addf %177, %181 : vector<16x256xf32>
    %cst_79 = arith.constant 0.797884583 : f32
    %183 = vector.broadcast %cst_79 : f32 to vector<16x256xf32>
    %184 = arith.mulf %183, %182 : vector<16x256xf32>
    %185 = math.tanh %184 : vector<16x256xf32>
    %cst_80 = arith.constant 1.000000e+00 : f32
    %186 = vector.broadcast %cst_80 : f32 to vector<16x256xf32>
    %187 = arith.addf %186, %185 : vector<16x256xf32>
    %cst_81 = arith.constant 5.000000e-01 : f32
    %188 = vector.broadcast %cst_81 : f32 to vector<16x256xf32>
    %189 = arith.mulf %188, %187 : vector<16x256xf32>
    %190 = arith.mulf %177, %189 : vector<16x256xf32>
    %c0_82 = arith.constant 0 : index
    %c0_83 = arith.constant 0 : index
    %c0_84 = arith.constant 0 : index
    %191 = vector.load %arg15[%c0_82, %c0_83, %c0_84] : memref<2x256x64xf32, #tpu.memory_space<vmem>>, vector<1x256x64xf32>
    %192 = vector.shape_cast %191 : vector<1x256x64xf32> to vector<256x64xf32>
    %cst_85 = arith.constant dense<0.000000e+00> : vector<16x64xf32>
    %193 = tpu.matmul %190, %192, %cst_85 {dimension_numbers = #tpu.dot_dimension_numbers<[1], [0], [0], [1], [0, 0, 1, 1], [], []>} : vector<16x256xf32>, vector<256x64xf32>, vector<16x64xf32> -> vector<16x64xf32>
    %194 = arith.addf %160, %193 : vector<16x64xf32>
    %c1_86 = arith.constant 1 : index
    %c0_87 = arith.constant 0 : index
    %c0_88 = arith.constant 0 : index
    %195 = vector.load %arg6[%c1_86, %c0_87, %c0_88] : memref<2x1x64xf32, #tpu.memory_space<vmem>>, vector<1x1x64xf32>
    %196 = vector.shape_cast %195 : vector<1x1x64xf32> to vector<1x64xf32>
    %197 = arith.mulf %194, %194 : vector<16x64xf32>
    %cst_89 = arith.constant dense<0.000000e+00> : vector<16xf32>
    %198 = vector.multi_reduction <add>, %197, %cst_89 [1] : vector<16x64xf32> to vector<16xf32>
    %199 = vector.shape_cast %198 : vector<16xf32> to vector<16x1xf32>
    %cst_90 = arith.constant 6.400000e+01 : f32
    %200 = vector.broadcast %cst_90 : f32 to vector<16x1xf32>
    %201 = arith.divf %199, %200 : vector<16x1xf32>
    %cst_91 = arith.constant 9.99999993E-9 : f32
    %202 = vector.broadcast %cst_91 : f32 to vector<16x1xf32>
    %203 = arith.addf %201, %202 : vector<16x1xf32>
    %204 = math.rsqrt %203 : vector<16x1xf32>
    %205 = vector.broadcast %204 : vector<16x1xf32> to vector<16x64xf32>
    %206 = arith.mulf %194, %205 : vector<16x64xf32>
    %207 = vector.broadcast %196 : vector<1x64xf32> to vector<16x64xf32>
    %208 = arith.mulf %206, %207 : vector<16x64xf32>
    %c1_92 = arith.constant 1 : index
    %c0_93 = arith.constant 0 : index
    %c0_94 = arith.constant 0 : index
    %209 = vector.load %arg7[%c1_92, %c0_93, %c0_94] : memref<2x64x96xf32, #tpu.memory_space<vmem>>, vector<1x64x96xf32>
    %210 = vector.shape_cast %209 : vector<1x64x96xf32> to vector<64x96xf32>
    %cst_95 = arith.constant dense<0.000000e+00> : vector<16x96xf32>
    %211 = tpu.matmul %208, %210, %cst_95 {dimension_numbers = #tpu.dot_dimension_numbers<[1], [0], [0], [1], [0, 0, 1, 1], [], []>} : vector<16x64xf32>, vector<64x96xf32>, vector<16x96xf32> -> vector<16x96xf32>
    %c1_96 = arith.constant 1 : index
    %212 = memref.load %arg1[%c1_96] : memref<2xf32, #tpu.memory_space<smem>>
    %213 = vector.extract_strided_slice %211 {offsets = [0, 0], sizes = [16, 16], strides = [1, 1]} : vector<16x96xf32> to vector<16x16xf32>
    %214 = arith.mulf %213, %213 : vector<16x16xf32>
    %cst_97 = arith.constant dense<0.000000e+00> : vector<16xf32>
    %215 = vector.multi_reduction <add>, %214, %cst_97 [1] : vector<16x16xf32> to vector<16xf32>
    %216 = vector.shape_cast %215 : vector<16xf32> to vector<16x1xf32>
    %cst_98 = arith.constant 1.000000e-24 : f32
    %217 = vector.broadcast %cst_98 : f32 to vector<16x1xf32>
    %218 = arith.maximumf %216, %217 : vector<16x1xf32>
    %219 = math.rsqrt %218 : vector<16x1xf32>
    %220 = vector.broadcast %219 : vector<16x1xf32> to vector<16x16xf32>
    %221 = arith.mulf %213, %220 : vector<16x16xf32>
    %222 = vector.extract_strided_slice %211 {offsets = [0, 32], sizes = [16, 16], strides = [1, 1]} : vector<16x96xf32> to vector<16x16xf32>
    %223 = arith.mulf %222, %222 : vector<16x16xf32>
    %cst_99 = arith.constant dense<0.000000e+00> : vector<16xf32>
    %224 = vector.multi_reduction <add>, %223, %cst_99 [1] : vector<16x16xf32> to vector<16xf32>
    %225 = vector.shape_cast %224 : vector<16xf32> to vector<16x1xf32>
    %cst_100 = arith.constant 1.000000e-24 : f32
    %226 = vector.broadcast %cst_100 : f32 to vector<16x1xf32>
    %227 = arith.maximumf %225, %226 : vector<16x1xf32>
    %228 = math.rsqrt %227 : vector<16x1xf32>
    %229 = vector.broadcast %228 : vector<16x1xf32> to vector<16x16xf32>
    %230 = arith.mulf %222, %229 : vector<16x16xf32>
    %231 = vector.extract_strided_slice %211 {offsets = [0, 64], sizes = [16, 16], strides = [1, 1]} : vector<16x96xf32> to vector<16x16xf32>
    %cst_101 = arith.constant dense<0.000000e+00> : vector<16x16xf32>
    %232 = tpu.matmul %221, %230, %cst_101 {dimension_numbers = #tpu.dot_dimension_numbers<[1], [1], [0], [0], [0, 0, 1, 0], [], []>} : vector<16x16xf32>, vector<16x16xf32>, vector<16x16xf32> -> vector<16x16xf32>
    %233 = vector.broadcast %212 : f32 to vector<16x16xf32>
    %234 = arith.mulf %232, %233 : vector<16x16xf32>
    %c0_102 = arith.constant 0 : index
    %c0_103 = arith.constant 0 : index
    %c0_104 = arith.constant 0 : index
    %235 = vector.load %arg4[%c0_102, %c0_103, %c0_104] : memref<2x16x16xf32, #tpu.memory_space<vmem>>, vector<1x16x16xf32>
    %236 = vector.shape_cast %235 : vector<1x16x16xf32> to vector<16x16xf32>
    %237 = arith.addf %234, %236 : vector<16x16xf32>
    %cst_105 = arith.constant dense<0xFF800000> : vector<16xf32>
    %238 = vector.multi_reduction <maximumf>, %237, %cst_105 [1] : vector<16x16xf32> to vector<16xf32>
    %239 = vector.shape_cast %238 : vector<16xf32> to vector<16x1xf32>
    %240 = vector.broadcast %239 : vector<16x1xf32> to vector<16x16xf32>
    %241 = arith.subf %237, %240 : vector<16x16xf32>
    %242 = math.exp %241 : vector<16x16xf32>
    %cst_106 = arith.constant dense<0.000000e+00> : vector<16xf32>
    %243 = vector.multi_reduction <add>, %242, %cst_106 [1] : vector<16x16xf32> to vector<16xf32>
    %244 = vector.shape_cast %243 : vector<16xf32> to vector<16x1xf32>
    %245 = tpu.reciprocal %244 {approx = true} : vector<16x1xf32> -> vector<16x1xf32>
    %246 = vector.broadcast %245 : vector<16x1xf32> to vector<16x16xf32>
    %247 = arith.mulf %242, %246 : vector<16x16xf32>
    %cst_107 = arith.constant dense<0.000000e+00> : vector<16x16xf32>
    %248 = tpu.matmul %247, %231, %cst_107 {dimension_numbers = #tpu.dot_dimension_numbers<[1], [0], [0], [1], [0, 0, 1, 1], [], []>} : vector<16x16xf32>, vector<16x16xf32>, vector<16x16xf32> -> vector<16x16xf32>
    %249 = vector.extract_strided_slice %211 {offsets = [0, 16], sizes = [16, 16], strides = [1, 1]} : vector<16x96xf32> to vector<16x16xf32>
    %250 = arith.mulf %249, %249 : vector<16x16xf32>
    %cst_108 = arith.constant dense<0.000000e+00> : vector<16xf32>
    %251 = vector.multi_reduction <add>, %250, %cst_108 [1] : vector<16x16xf32> to vector<16xf32>
    %252 = vector.shape_cast %251 : vector<16xf32> to vector<16x1xf32>
    %cst_109 = arith.constant 1.000000e-24 : f32
    %253 = vector.broadcast %cst_109 : f32 to vector<16x1xf32>
    %254 = arith.maximumf %252, %253 : vector<16x1xf32>
    %255 = math.rsqrt %254 : vector<16x1xf32>
    %256 = vector.broadcast %255 : vector<16x1xf32> to vector<16x16xf32>
    %257 = arith.mulf %249, %256 : vector<16x16xf32>
    %258 = vector.extract_strided_slice %211 {offsets = [0, 48], sizes = [16, 16], strides = [1, 1]} : vector<16x96xf32> to vector<16x16xf32>
    %259 = arith.mulf %258, %258 : vector<16x16xf32>
    %cst_110 = arith.constant dense<0.000000e+00> : vector<16xf32>
    %260 = vector.multi_reduction <add>, %259, %cst_110 [1] : vector<16x16xf32> to vector<16xf32>
    %261 = vector.shape_cast %260 : vector<16xf32> to vector<16x1xf32>
    %cst_111 = arith.constant 1.000000e-24 : f32
    %262 = vector.broadcast %cst_111 : f32 to vector<16x1xf32>
    %263 = arith.maximumf %261, %262 : vector<16x1xf32>
    %264 = math.rsqrt %263 : vector<16x1xf32>
    %265 = vector.broadcast %264 : vector<16x1xf32> to vector<16x16xf32>
    %266 = arith.mulf %258, %265 : vector<16x16xf32>
    %267 = vector.extract_strided_slice %211 {offsets = [0, 80], sizes = [16, 16], strides = [1, 1]} : vector<16x96xf32> to vector<16x16xf32>
    %cst_112 = arith.constant dense<0.000000e+00> : vector<16x16xf32>
    %268 = tpu.matmul %257, %266, %cst_112 {dimension_numbers = #tpu.dot_dimension_numbers<[1], [1], [0], [0], [0, 0, 1, 0], [], []>} : vector<16x16xf32>, vector<16x16xf32>, vector<16x16xf32> -> vector<16x16xf32>
    %269 = vector.broadcast %212 : f32 to vector<16x16xf32>
    %270 = arith.mulf %268, %269 : vector<16x16xf32>
    %c1_113 = arith.constant 1 : index
    %c0_114 = arith.constant 0 : index
    %c0_115 = arith.constant 0 : index
    %271 = vector.load %arg4[%c1_113, %c0_114, %c0_115] : memref<2x16x16xf32, #tpu.memory_space<vmem>>, vector<1x16x16xf32>
    %272 = vector.shape_cast %271 : vector<1x16x16xf32> to vector<16x16xf32>
    %273 = arith.addf %270, %272 : vector<16x16xf32>
    %cst_116 = arith.constant dense<0xFF800000> : vector<16xf32>
    %274 = vector.multi_reduction <maximumf>, %273, %cst_116 [1] : vector<16x16xf32> to vector<16xf32>
    %275 = vector.shape_cast %274 : vector<16xf32> to vector<16x1xf32>
    %276 = vector.broadcast %275 : vector<16x1xf32> to vector<16x16xf32>
    %277 = arith.subf %273, %276 : vector<16x16xf32>
    %278 = math.exp %277 : vector<16x16xf32>
    %cst_117 = arith.constant dense<0.000000e+00> : vector<16xf32>
    %279 = vector.multi_reduction <add>, %278, %cst_117 [1] : vector<16x16xf32> to vector<16xf32>
    %280 = vector.shape_cast %279 : vector<16xf32> to vector<16x1xf32>
    %281 = tpu.reciprocal %280 {approx = true} : vector<16x1xf32> -> vector<16x1xf32>
    %282 = vector.broadcast %281 : vector<16x1xf32> to vector<16x16xf32>
    %283 = arith.mulf %278, %282 : vector<16x16xf32>
    %cst_118 = arith.constant dense<0.000000e+00> : vector<16x16xf32>
    %284 = tpu.matmul %283, %267, %cst_118 {dimension_numbers = #tpu.dot_dimension_numbers<[1], [0], [0], [1], [0, 0, 1, 1], [], []>} : vector<16x16xf32>, vector<16x16xf32>, vector<16x16xf32> -> vector<16x16xf32>
    %285 = tpu.concatenate %248, %284 in 1 : vector<16x16xf32>, vector<16x16xf32> -> vector<16x32xf32>
    %c1_119 = arith.constant 1 : index
    %c0_120 = arith.constant 0 : index
    %c0_121 = arith.constant 0 : index
    %286 = vector.load %arg8[%c1_119, %c0_120, %c0_121] : memref<2x32x64xf32, #tpu.memory_space<vmem>>, vector<1x32x64xf32>
    %287 = vector.shape_cast %286 : vector<1x32x64xf32> to vector<32x64xf32>
    %cst_122 = arith.constant dense<0.000000e+00> : vector<16x64xf32>
    %288 = tpu.matmul %285, %287, %cst_122 {dimension_numbers = #tpu.dot_dimension_numbers<[1], [0], [0], [1], [0, 0, 1, 1], [], []>} : vector<16x32xf32>, vector<32x64xf32>, vector<16x64xf32> -> vector<16x64xf32>
    %289 = arith.addf %194, %288 : vector<16x64xf32>
    %290 = tpu.concatenate %230, %266 in 1 : vector<16x16xf32>, vector<16x16xf32> -> vector<16x32xf32>
    %291 = vector.extract_strided_slice %211 {offsets = [0, 64], sizes = [16, 32], strides = [1, 1]} : vector<16x96xf32> to vector<16x32xf32>
    %c1_123 = arith.constant 1 : index
    %c0_124 = arith.constant 0 : index
    %c0_125 = arith.constant 0 : index
    %292 = vector.load %arg9[%c1_123, %c0_124, %c0_125] : memref<2x1x64xf32, #tpu.memory_space<vmem>>, vector<1x1x64xf32>
    %293 = vector.shape_cast %292 : vector<1x1x64xf32> to vector<1x64xf32>
    %294 = arith.mulf %289, %289 : vector<16x64xf32>
    %cst_126 = arith.constant dense<0.000000e+00> : vector<16xf32>
    %295 = vector.multi_reduction <add>, %294, %cst_126 [1] : vector<16x64xf32> to vector<16xf32>
    %296 = vector.shape_cast %295 : vector<16xf32> to vector<16x1xf32>
    %cst_127 = arith.constant 6.400000e+01 : f32
    %297 = vector.broadcast %cst_127 : f32 to vector<16x1xf32>
    %298 = arith.divf %296, %297 : vector<16x1xf32>
    %cst_128 = arith.constant 9.99999993E-9 : f32
    %299 = vector.broadcast %cst_128 : f32 to vector<16x1xf32>
    %300 = arith.addf %298, %299 : vector<16x1xf32>
    %301 = math.rsqrt %300 : vector<16x1xf32>
    %302 = vector.broadcast %301 : vector<16x1xf32> to vector<16x64xf32>
    %303 = arith.mulf %289, %302 : vector<16x64xf32>
    %304 = vector.broadcast %293 : vector<1x64xf32> to vector<16x64xf32>
    %305 = arith.mulf %303, %304 : vector<16x64xf32>
    %c1_129 = arith.constant 1 : index
    %c0_130 = arith.constant 0 : index
    %c0_131 = arith.constant 0 : index
    %306 = vector.load %arg10[%c1_129, %c0_130, %c0_131] : memref<2x64x32xf32, #tpu.memory_space<vmem>>, vector<1x64x32xf32>
    %307 = vector.shape_cast %306 : vector<1x64x32xf32> to vector<64x32xf32>
    %cst_132 = arith.constant dense<0.000000e+00> : vector<16x32xf32>
    %308 = tpu.matmul %305, %307, %cst_132 {dimension_numbers = #tpu.dot_dimension_numbers<[1], [0], [0], [1], [0, 0, 1, 1], [], []>} : vector<16x64xf32>, vector<64x32xf32>, vector<16x32xf32> -> vector<16x32xf32>
    %c1_133 = arith.constant 1 : index
    %c0_134 = arith.constant 0 : index
    %c0_135 = arith.constant 0 : index
    %309 = vector.load %arg11[%c1_133, %c0_134, %c0_135] : memref<2x64x64xf32, #tpu.memory_space<vmem>>, vector<1x64x64xf32>
    %310 = vector.shape_cast %309 : vector<1x64x64xf32> to vector<64x64xf32>
    %cst_136 = arith.constant dense<0.000000e+00> : vector<32x64xf32>
    %311 = tpu.matmul %1, %310, %cst_136 {dimension_numbers = #tpu.dot_dimension_numbers<[1], [0], [0], [1], [0, 0, 1, 1], [], []>} : vector<32x64xf32>, vector<64x64xf32>, vector<32x64xf32> -> vector<32x64xf32>
    %312 = vector.extract_strided_slice %308 {offsets = [0, 0], sizes = [16, 16], strides = [1, 1]} : vector<16x32xf32> to vector<16x16xf32>
    %313 = vector.extract_strided_slice %311 {offsets = [0, 0], sizes = [32, 16], strides = [1, 1]} : vector<32x64xf32> to vector<32x16xf32>
    %314 = vector.extract_strided_slice %311 {offsets = [0, 32], sizes = [32, 16], strides = [1, 1]} : vector<32x64xf32> to vector<32x16xf32>
    %cst_137 = arith.constant dense<0.000000e+00> : vector<16x32xf32>
    %315 = tpu.matmul %312, %313, %cst_137 {dimension_numbers = #tpu.dot_dimension_numbers<[1], [1], [0], [0], [0, 0, 1, 0], [], []>} : vector<16x16xf32>, vector<32x16xf32>, vector<16x32xf32> -> vector<16x32xf32>
    %cst_138 = arith.constant 2.500000e-01 : f32
    %316 = vector.broadcast %cst_138 : f32 to vector<16x32xf32>
    %317 = arith.mulf %315, %316 : vector<16x32xf32>
    %318 = arith.addf %317, %2 : vector<16x32xf32>
    %cst_139 = arith.constant dense<0xFF800000> : vector<16xf32>
    %319 = vector.multi_reduction <maximumf>, %318, %cst_139 [1] : vector<16x32xf32> to vector<16xf32>
    %320 = vector.shape_cast %319 : vector<16xf32> to vector<16x1xf32>
    %321 = vector.broadcast %320 : vector<16x1xf32> to vector<16x32xf32>
    %322 = arith.subf %318, %321 : vector<16x32xf32>
    %323 = math.exp %322 : vector<16x32xf32>
    %cst_140 = arith.constant dense<0.000000e+00> : vector<16xf32>
    %324 = vector.multi_reduction <add>, %323, %cst_140 [1] : vector<16x32xf32> to vector<16xf32>
    %325 = vector.shape_cast %324 : vector<16xf32> to vector<16x1xf32>
    %326 = tpu.reciprocal %325 {approx = true} : vector<16x1xf32> -> vector<16x1xf32>
    %327 = vector.broadcast %326 : vector<16x1xf32> to vector<16x32xf32>
    %328 = arith.mulf %323, %327 : vector<16x32xf32>
    %cst_141 = arith.constant dense<0.000000e+00> : vector<16x16xf32>
    %329 = tpu.matmul %328, %314, %cst_141 {dimension_numbers = #tpu.dot_dimension_numbers<[1], [0], [0], [1], [0, 0, 1, 1], [], []>} : vector<16x32xf32>, vector<32x16xf32>, vector<16x16xf32> -> vector<16x16xf32>
    %330 = vector.extract_strided_slice %308 {offsets = [0, 16], sizes = [16, 16], strides = [1, 1]} : vector<16x32xf32> to vector<16x16xf32>
    %331 = vector.extract_strided_slice %311 {offsets = [0, 16], sizes = [32, 16], strides = [1, 1]} : vector<32x64xf32> to vector<32x16xf32>
    %332 = vector.extract_strided_slice %311 {offsets = [0, 48], sizes = [32, 16], strides = [1, 1]} : vector<32x64xf32> to vector<32x16xf32>
    %cst_142 = arith.constant dense<0.000000e+00> : vector<16x32xf32>
    %333 = tpu.matmul %330, %331, %cst_142 {dimension_numbers = #tpu.dot_dimension_numbers<[1], [1], [0], [0], [0, 0, 1, 0], [], []>} : vector<16x16xf32>, vector<32x16xf32>, vector<16x32xf32> -> vector<16x32xf32>
    %cst_143 = arith.constant 2.500000e-01 : f32
    %334 = vector.broadcast %cst_143 : f32 to vector<16x32xf32>
    %335 = arith.mulf %333, %334 : vector<16x32xf32>
    %336 = arith.addf %335, %2 : vector<16x32xf32>
    %cst_144 = arith.constant dense<0xFF800000> : vector<16xf32>
    %337 = vector.multi_reduction <maximumf>, %336, %cst_144 [1] : vector<16x32xf32> to vector<16xf32>
    %338 = vector.shape_cast %337 : vector<16xf32> to vector<16x1xf32>
    %339 = vector.broadcast %338 : vector<16x1xf32> to vector<16x32xf32>
    %340 = arith.subf %336, %339 : vector<16x32xf32>
    %341 = math.exp %340 : vector<16x32xf32>
    %cst_145 = arith.constant dense<0.000000e+00> : vector<16xf32>
    %342 = vector.multi_reduction <add>, %341, %cst_145 [1] : vector<16x32xf32> to vector<16xf32>
    %343 = vector.shape_cast %342 : vector<16xf32> to vector<16x1xf32>
    %344 = tpu.reciprocal %343 {approx = true} : vector<16x1xf32> -> vector<16x1xf32>
    %345 = vector.broadcast %344 : vector<16x1xf32> to vector<16x32xf32>
    %346 = arith.mulf %341, %345 : vector<16x32xf32>
    %cst_146 = arith.constant dense<0.000000e+00> : vector<16x16xf32>
    %347 = tpu.matmul %346, %332, %cst_146 {dimension_numbers = #tpu.dot_dimension_numbers<[1], [0], [0], [1], [0, 0, 1, 1], [], []>} : vector<16x32xf32>, vector<32x16xf32>, vector<16x16xf32> -> vector<16x16xf32>
    %348 = tpu.concatenate %329, %347 in 1 : vector<16x16xf32>, vector<16x16xf32> -> vector<16x32xf32>
    %c1_147 = arith.constant 1 : index
    %c0_148 = arith.constant 0 : index
    %c0_149 = arith.constant 0 : index
    %349 = vector.load %arg12[%c1_147, %c0_148, %c0_149] : memref<2x32x64xf32, #tpu.memory_space<vmem>>, vector<1x32x64xf32>
    %350 = vector.shape_cast %349 : vector<1x32x64xf32> to vector<32x64xf32>
    %cst_150 = arith.constant dense<0.000000e+00> : vector<16x64xf32>
    %351 = tpu.matmul %348, %350, %cst_150 {dimension_numbers = #tpu.dot_dimension_numbers<[1], [0], [0], [1], [0, 0, 1, 1], [], []>} : vector<16x32xf32>, vector<32x64xf32>, vector<16x64xf32> -> vector<16x64xf32>
    %352 = arith.addf %289, %351 : vector<16x64xf32>
    %c1_151 = arith.constant 1 : index
    %c0_152 = arith.constant 0 : index
    %c0_153 = arith.constant 0 : index
    %353 = vector.load %arg13[%c1_151, %c0_152, %c0_153] : memref<2x1x64xf32, #tpu.memory_space<vmem>>, vector<1x1x64xf32>
    %354 = vector.shape_cast %353 : vector<1x1x64xf32> to vector<1x64xf32>
    %355 = arith.mulf %352, %352 : vector<16x64xf32>
    %cst_154 = arith.constant dense<0.000000e+00> : vector<16xf32>
    %356 = vector.multi_reduction <add>, %355, %cst_154 [1] : vector<16x64xf32> to vector<16xf32>
    %357 = vector.shape_cast %356 : vector<16xf32> to vector<16x1xf32>
    %cst_155 = arith.constant 6.400000e+01 : f32
    %358 = vector.broadcast %cst_155 : f32 to vector<16x1xf32>
    %359 = arith.divf %357, %358 : vector<16x1xf32>
    %cst_156 = arith.constant 9.99999993E-9 : f32
    %360 = vector.broadcast %cst_156 : f32 to vector<16x1xf32>
    %361 = arith.addf %359, %360 : vector<16x1xf32>
    %362 = math.rsqrt %361 : vector<16x1xf32>
    %363 = vector.broadcast %362 : vector<16x1xf32> to vector<16x64xf32>
    %364 = arith.mulf %352, %363 : vector<16x64xf32>
    %365 = vector.broadcast %354 : vector<1x64xf32> to vector<16x64xf32>
    %366 = arith.mulf %364, %365 : vector<16x64xf32>
    %c1_157 = arith.constant 1 : index
    %c0_158 = arith.constant 0 : index
    %c0_159 = arith.constant 0 : index
    %367 = vector.load %arg14[%c1_157, %c0_158, %c0_159] : memref<2x64x256xf32, #tpu.memory_space<vmem>>, vector<1x64x256xf32>
    %368 = vector.shape_cast %367 : vector<1x64x256xf32> to vector<64x256xf32>
    %cst_160 = arith.constant dense<0.000000e+00> : vector<16x256xf32>
    %369 = tpu.matmul %366, %368, %cst_160 {dimension_numbers = #tpu.dot_dimension_numbers<[1], [0], [0], [1], [0, 0, 1, 1], [], []>} : vector<16x64xf32>, vector<64x256xf32>, vector<16x256xf32> -> vector<16x256xf32>
    %370 = arith.mulf %369, %369 : vector<16x256xf32>
    %371 = arith.mulf %369, %370 : vector<16x256xf32>
    %cst_161 = arith.constant 4.471500e-02 : f32
    %372 = vector.broadcast %cst_161 : f32 to vector<16x256xf32>
    %373 = arith.mulf %372, %371 : vector<16x256xf32>
    %374 = arith.addf %369, %373 : vector<16x256xf32>
    %cst_162 = arith.constant 0.797884583 : f32
    %375 = vector.broadcast %cst_162 : f32 to vector<16x256xf32>
    %376 = arith.mulf %375, %374 : vector<16x256xf32>
    %377 = math.tanh %376 : vector<16x256xf32>
    %cst_163 = arith.constant 1.000000e+00 : f32
    %378 = vector.broadcast %cst_163 : f32 to vector<16x256xf32>
    %379 = arith.addf %378, %377 : vector<16x256xf32>
    %cst_164 = arith.constant 5.000000e-01 : f32
    %380 = vector.broadcast %cst_164 : f32 to vector<16x256xf32>
    %381 = arith.mulf %380, %379 : vector<16x256xf32>
    %382 = arith.mulf %369, %381 : vector<16x256xf32>
    %c1_165 = arith.constant 1 : index
    %c0_166 = arith.constant 0 : index
    %c0_167 = arith.constant 0 : index
    %383 = vector.load %arg15[%c1_165, %c0_166, %c0_167] : memref<2x256x64xf32, #tpu.memory_space<vmem>>, vector<1x256x64xf32>
    %384 = vector.shape_cast %383 : vector<1x256x64xf32> to vector<256x64xf32>
    %cst_168 = arith.constant dense<0.000000e+00> : vector<16x64xf32>
    %385 = tpu.matmul %382, %384, %cst_168 {dimension_numbers = #tpu.dot_dimension_numbers<[1], [0], [0], [1], [0, 0, 1, 1], [], []>} : vector<16x256xf32>, vector<256x64xf32>, vector<16x64xf32> -> vector<16x64xf32>
    %386 = arith.addf %352, %385 : vector<16x64xf32>
    %c0_169 = arith.constant 0 : index
    %c0_170 = arith.constant 0 : index
    %387 = vector.load %arg16[%c0_169, %c0_170] : memref<1x64xf32, #tpu.memory_space<vmem>>, vector<1x64xf32>
    %388 = arith.mulf %386, %386 : vector<16x64xf32>
    %cst_171 = arith.constant dense<0.000000e+00> : vector<16xf32>
    %389 = vector.multi_reduction <add>, %388, %cst_171 [1] : vector<16x64xf32> to vector<16xf32>
    %390 = vector.shape_cast %389 : vector<16xf32> to vector<16x1xf32>
    %cst_172 = arith.constant 6.400000e+01 : f32
    %391 = vector.broadcast %cst_172 : f32 to vector<16x1xf32>
    %392 = arith.divf %390, %391 : vector<16x1xf32>
    %cst_173 = arith.constant 9.99999993E-9 : f32
    %393 = vector.broadcast %cst_173 : f32 to vector<16x1xf32>
    %394 = arith.addf %392, %393 : vector<16x1xf32>
    %395 = math.rsqrt %394 : vector<16x1xf32>
    %396 = vector.broadcast %395 : vector<16x1xf32> to vector<16x64xf32>
    %397 = arith.mulf %386, %396 : vector<16x64xf32>
    %398 = vector.broadcast %387 : vector<1x64xf32> to vector<16x64xf32>
    %399 = arith.mulf %397, %398 : vector<16x64xf32>
    %c0_174 = arith.constant 0 : index
    %c0_175 = arith.constant 0 : index
    %400 = vector.load %arg17[%c0_174, %c0_175] : memref<64x128xf32, #tpu.memory_space<vmem>>, vector<64x128xf32>
    %cst_176 = arith.constant dense<0.000000e+00> : vector<16x128xf32>
    %401 = tpu.matmul %399, %400, %cst_176 {dimension_numbers = #tpu.dot_dimension_numbers<[1], [0], [0], [1], [0, 0, 1, 1], [], []>} : vector<16x64xf32>, vector<64x128xf32>, vector<16x128xf32> -> vector<16x128xf32>
    %c0_177 = arith.constant 0 : index
    %c0_178 = arith.constant 0 : index
    %402 = vector.load %arg18[%c0_177, %c0_178] : memref<1x128xf32, #tpu.memory_space<vmem>>, vector<1x128xf32>
    %403 = vector.broadcast %402 : vector<1x128xf32> to vector<16x128xf32>
    %404 = arith.addf %401, %403 : vector<16x128xf32>
    %c0_179 = arith.constant 0 : index
    %c0_180 = arith.constant 0 : index
    %405 = vector.load %arg19[%c0_179, %c0_180] : memref<16x128xf32, #tpu.memory_space<vmem>>, vector<16x128xf32>
    tpu.vector_store %arg19[%c0_179, %c0_180], %404 {strides = array<i32>} : memref<16x128xf32, #tpu.memory_space<vmem>>, vector<16x128xf32>,
    %406 = tpu.concatenate %98, %99, %290, %291 in 1 : vector<16x32xf32>, vector<16x32xf32>, vector<16x32xf32>, vector<16x32xf32> -> vector<16x128xf32>
    %c0_181 = arith.constant 0 : index
    %c0_182 = arith.constant 0 : index
    %407 = vector.load %arg20[%c0_181, %c0_182] : memref<16x128xf32, #tpu.memory_space<vmem>>, vector<16x128xf32>
    tpu.vector_store %arg20[%c0_181, %c0_182], %406 {strides = array<i32>} : memref<16x128xf32, #tpu.memory_space<vmem>>, vector<16x128xf32>,
    return
  }
  func.func @transform_0(%arg0: i32) -> i32 {
    %c0_i32 = arith.constant 0 : i32
    %c0_i32_0 = arith.constant 0 : i32
    return %c0_i32 : i32
  }
  func.func @transform_1(%arg0: i32) -> (i32, i32) {
    %c0_i32 = arith.constant 0 : i32
    %c0_i32_0 = arith.constant 0 : i32
    %c0_i32_1 = arith.constant 0 : i32
    return %c0_i32, %c0_i32_0 : i32, i32
  }
  func.func @transform_2(%arg0: i32) -> (i32, i32) {
    %c0_i32 = arith.constant 0 : i32
    %c0_i32_0 = arith.constant 0 : i32
    %c0_i32_1 = arith.constant 0 : i32
    return %c0_i32, %c0_i32_0 : i32, i32
  }
  func.func @transform_3(%arg0: i32) -> (i32, i32, i32) {
    %c0_i32 = arith.constant 0 : i32
    %c0_i32_0 = arith.constant 0 : i32
    %c0_i32_1 = arith.constant 0 : i32
    %c0_i32_2 = arith.constant 0 : i32
    return %c0_i32, %c0_i32_0, %c0_i32_1 : i32, i32, i32
  }
  func.func @transform_4(%arg0: i32) -> (i32, i32) {
    %c0_i32 = arith.constant 0 : i32
    %c0_i32_0 = arith.constant 0 : i32
    %c0_i32_1 = arith.constant 0 : i32
    return %c0_i32, %c0_i32_0 : i32, i32
  }
  func.func @transform_5(%arg0: i32) -> (i32, i32, i32) {
    %c0_i32 = arith.constant 0 : i32
    %c0_i32_0 = arith.constant 0 : i32
    %c0_i32_1 = arith.constant 0 : i32
    %c0_i32_2 = arith.constant 0 : i32
    return %c0_i32, %c0_i32_0, %c0_i32_1 : i32, i32, i32
  }
  func.func @transform_6(%arg0: i32) -> (i32, i32, i32) {
    %c0_i32 = arith.constant 0 : i32
    %c0_i32_0 = arith.constant 0 : i32
    %c0_i32_1 = arith.constant 0 : i32
    %c0_i32_2 = arith.constant 0 : i32
    return %c0_i32, %c0_i32_0, %c0_i32_1 : i32, i32, i32
  }
  func.func @transform_7(%arg0: i32) -> (i32, i32, i32) {
    %c0_i32 = arith.constant 0 : i32
    %c0_i32_0 = arith.constant 0 : i32
    %c0_i32_1 = arith.constant 0 : i32
    %c0_i32_2 = arith.constant 0 : i32
    return %c0_i32, %c0_i32_0, %c0_i32_1 : i32, i32, i32
  }
  func.func @transform_8(%arg0: i32) -> (i32, i32, i32) {
    %c0_i32 = arith.constant 0 : i32
    %c0_i32_0 = arith.constant 0 : i32
    %c0_i32_1 = arith.constant 0 : i32
    %c0_i32_2 = arith.constant 0 : i32
    return %c0_i32, %c0_i32_0, %c0_i32_1 : i32, i32, i32
  }
  func.func @transform_9(%arg0: i32) -> (i32, i32, i32) {
    %c0_i32 = arith.constant 0 : i32
    %c0_i32_0 = arith.constant 0 : i32
    %c0_i32_1 = arith.constant 0 : i32
    %c0_i32_2 = arith.constant 0 : i32
    return %c0_i32, %c0_i32_0, %c0_i32_1 : i32, i32, i32
  }
  func.func @transform_10(%arg0: i32) -> (i32, i32, i32) {
    %c0_i32 = arith.constant 0 : i32
    %c0_i32_0 = arith.constant 0 : i32
    %c0_i32_1 = arith.constant 0 : i32
    %c0_i32_2 = arith.constant 0 : i32
    return %c0_i32, %c0_i32_0, %c0_i32_1 : i32, i32, i32
  }
  func.func @transform_11(%arg0: i32) -> (i32, i32, i32) {
    %c0_i32 = arith.constant 0 : i32
    %c0_i32_0 = arith.constant 0 : i32
    %c0_i32_1 = arith.constant 0 : i32
    %c0_i32_2 = arith.constant 0 : i32
    return %c0_i32, %c0_i32_0, %c0_i32_1 : i32, i32, i32
  }
  func.func @transform_12(%arg0: i32) -> (i32, i32, i32) {
    %c0_i32 = arith.constant 0 : i32
    %c0_i32_0 = arith.constant 0 : i32
    %c0_i32_1 = arith.constant 0 : i32
    %c0_i32_2 = arith.constant 0 : i32
    return %c0_i32, %c0_i32_0, %c0_i32_1 : i32, i32, i32
  }
  func.func @transform_13(%arg0: i32) -> (i32, i32, i32) {
    %c0_i32 = arith.constant 0 : i32
    %c0_i32_0 = arith.constant 0 : i32
    %c0_i32_1 = arith.constant 0 : i32
    %c0_i32_2 = arith.constant 0 : i32
    return %c0_i32, %c0_i32_0, %c0_i32_1 : i32, i32, i32
  }
  func.func @transform_14(%arg0: i32) -> (i32, i32, i32) {
    %c0_i32 = arith.constant 0 : i32
    %c0_i32_0 = arith.constant 0 : i32
    %c0_i32_1 = arith.constant 0 : i32
    %c0_i32_2 = arith.constant 0 : i32
    return %c0_i32, %c0_i32_0, %c0_i32_1 : i32, i32, i32
  }
  func.func @transform_15(%arg0: i32) -> (i32, i32) {
    %c0_i32 = arith.constant 0 : i32
    %c0_i32_0 = arith.constant 0 : i32
    %c0_i32_1 = arith.constant 0 : i32
    return %c0_i32, %c0_i32_0 : i32, i32
  }
  func.func @transform_16(%arg0: i32) -> (i32, i32) {
    %c0_i32 = arith.constant 0 : i32
    %c0_i32_0 = arith.constant 0 : i32
    %c0_i32_1 = arith.constant 0 : i32
    return %c0_i32, %c0_i32_0 : i32, i32
  }
  func.func @transform_17(%arg0: i32) -> (i32, i32) {
    %c0_i32 = arith.constant 0 : i32
    %c0_i32_0 = arith.constant 0 : i32
    %c0_i32_1 = arith.constant 0 : i32
    return %c0_i32, %c0_i32_0 : i32, i32
  }
  func.func @transform_18(%arg0: i32) -> (i32, i32) {
    %c0_i32 = arith.constant 0 : i32
    %c0_i32_0 = arith.constant 0 : i32
    %c0_i32_1 = arith.constant 0 : i32
    return %c0_i32, %c0_i32_0 : i32, i32
  }
  func.func @transform_19(%arg0: i32) -> (i32, i32) {
    %c0_i32 = arith.constant 0 : i32
    %c0_i32_0 = arith.constant 0 : i32
    %c0_i32_1 = arith.constant 0 : i32
    return %c0_i32, %c0_i32_0 : i32, i32
  }
}

</mosaic_0001>

<llo_original>
// kernel: tile.9
$region0: #{tile.9}
  %s0 = inlined_call_operand.vmem [shape: f32[2,2,8,2,8], index: 0, kind: input, shape index: {}]
  %s1 = inlined_call_operand.vmem [shape: f32[2,16,16], index: 1, kind: output, shape index: {}]
  $region1: #{tile.9} parent=0
    #allocation0 [shape = 'u8[131072]{0}', space=vmem, size = 0x20000, scoped, tag = 'scoped mem for input reshape']
    %s3 = sshllo.u32 0, 2
    %s4 = smul.addr 2, 31
    %s5 = scalar_lea.vmem %s0, %s4
    %v6 = vld [vmem:[%s5] sm:%s3]
    %s7 = scalar_lea.vmem [#allocation0], 248
    %8 = vst [vmem:[%s7] sm:%s3] %v6
    %s9 = smul.addr 2, 30
    %s10 = scalar_lea.vmem %s0, %s9
    %v11 = vld [vmem:[%s10] sm:%s3]
    %s12 = scalar_lea.vmem [#allocation0], 240
    %13 = vst [vmem:[%s12] sm:%s3] %v11
    %s14 = smul.addr 2, 29
    %s15 = scalar_lea.vmem %s0, %s14
    %v16 = vld [vmem:[%s15] sm:%s3]
    %s17 = scalar_lea.vmem [#allocation0], 232
    %18 = vst [vmem:[%s17] sm:%s3] %v16
    %s19 = smul.addr 2, 28
    %s20 = scalar_lea.vmem %s0, %s19
    %v21 = vld [vmem:[%s20] sm:%s3]
    %s22 = scalar_lea.vmem [#allocation0], 224
    %23 = vst [vmem:[%s22] sm:%s3] %v21
    %s24 = smul.addr 2, 27
    %s25 = scalar_lea.vmem %s0, %s24
    %v26 = vld [vmem:[%s25] sm:%s3]
    %s27 = scalar_lea.vmem [#allocation0], 216
    %28 = vst [vmem:[%s27] sm:%s3] %v26
    %s29 = smul.addr 2, 26
    %s30 = scalar_lea.vmem %s0, %s29
    %v31 = vld [vmem:[%s30] sm:%s3]
    %s32 = scalar_lea.vmem [#allocation0], 208
    %33 = vst [vmem:[%s32] sm:%s3] %v31
    %s34 = smul.addr 2, 25
    %s35 = scalar_lea.vmem %s0, %s34
    %v36 = vld [vmem:[%s35] sm:%s3]
    %s37 = scalar_lea.vmem [#allocation0], 200
    %38 = vst [vmem:[%s37] sm:%s3] %v36
    %s39 = smul.addr 2, 24
    %s40 = scalar_lea.vmem %s0, %s39
    %v41 = vld [vmem:[%s40] sm:%s3]
    %s42 = scalar_lea.vmem [#allocation0], 192
    %43 = vst [vmem:[%s42] sm:%s3] %v41
    %s44 = smul.addr 2, 23
    %s45 = scalar_lea.vmem %s0, %s44
    %v46 = vld [vmem:[%s45] sm:%s3]
    %s47 = scalar_lea.vmem [#allocation0], 184
    %48 = vst [vmem:[%s47] sm:%s3] %v46
    %s49 = smul.addr 2, 22
    %s50 = scalar_lea.vmem %s0, %s49
    %v51 = vld [vmem:[%s50] sm:%s3]
    %s52 = scalar_lea.vmem [#allocation0], 176
    %53 = vst [vmem:[%s52] sm:%s3] %v51
    %s54 = smul.addr 2, 21
    %s55 = scalar_lea.vmem %s0, %s54
    %v56 = vld [vmem:[%s55] sm:%s3]
    %s57 = scalar_lea.vmem [#allocation0], 168
    %58 = vst [vmem:[%s57] sm:%s3] %v56
    %s59 = smul.addr 2, 20
    %s60 = scalar_lea.vmem %s0, %s59
    %v61 = vld [vmem:[%s60] sm:%s3]
    %s62 = scalar_lea.vmem [#allocation0], 160
    %63 = vst [vmem:[%s62] sm:%s3] %v61
    %s64 = smul.addr 2, 19
    %s65 = scalar_lea.vmem %s0, %s64
    %v66 = vld [vmem:[%s65] sm:%s3]
    %s67 = scalar_lea.vmem [#allocation0], 152
    %68 = vst [vmem:[%s67] sm:%s3] %v66
    %s69 = smul.addr 2, 18
    %s70 = scalar_lea.vmem %s0, %s69
    %v71 = vld [vmem:[%s70] sm:%s3]
    %s72 = scalar_lea.vmem [#allocation0], 144
    %73 = vst [vmem:[%s72] sm:%s3] %v71
    %s74 = smul.addr 2, 17
    %s75 = scalar_lea.vmem %s0, %s74
    %v76 = vld [vmem:[%s75] sm:%s3]
    %s77 = scalar_lea.vmem [#allocation0], 136
    %78 = vst [vmem:[%s77] sm:%s3] %v76
    %s79 = smul.addr 2, 16
    %s80 = scalar_lea.vmem %s0, %s79
    %v81 = vld [vmem:[%s80] sm:%s3]
    %s82 = scalar_lea.vmem [#allocation0], 128
    %83 = vst [vmem:[%s82] sm:%s3] %v81
    %s84 = smul.addr 2, 15
    %s85 = scalar_lea.vmem %s0, %s84
    %v86 = vld [vmem:[%s85] sm:%s3]
    %s87 = scalar_lea.vmem [#allocation0], 120
    %88 = vst [vmem:[%s87] sm:%s3] %v86
    %s89 = smul.addr 2, 14
    %s90 = scalar_lea.vmem %s0, %s89
    %v91 = vld [vmem:[%s90] sm:%s3]
    %s92 = scalar_lea.vmem [#allocation0], 112
    %93 = vst [vmem:[%s92] sm:%s3] %v91
    %s94 = smul.addr 2, 13
    %s95 = scalar_lea.vmem %s0, %s94
    %v96 = vld [vmem:[%s95] sm:%s3]
    %s97 = scalar_lea.vmem [#allocation0], 104
    %98 = vst [vmem:[%s97] sm:%s3] %v96
    %s99 = smul.addr 2, 12
    %s100 = scalar_lea.vmem %s0, %s99
    %v101 = vld [vmem:[%s100] sm:%s3]
    %s102 = scalar_lea.vmem [#allocation0], 96
    %103 = vst [vmem:[%s102] sm:%s3] %v101
    %s104 = smul.addr 2, 11
    %s105 = scalar_lea.vmem %s0, %s104
    %v106 = vld [vmem:[%s105] sm:%s3]
    %s107 = scalar_lea.vmem [#allocation0], 88
    %108 = vst [vmem:[%s107] sm:%s3] %v106
    %s109 = smul.addr 2, 10
    %s110 = scalar_lea.vmem %s0, %s109
    %v111 = vld [vmem:[%s110] sm:%s3]
    %s112 = scalar_lea.vmem [#allocation0], 80
    %113 = vst [vmem:[%s112] sm:%s3] %v111
    %s114 = smul.addr 2, 9
    %s115 = scalar_lea.vmem %s0, %s114
    %v116 = vld [vmem:[%s115] sm:%s3]
    %s117 = scalar_lea.vmem [#allocation0], 72
    %118 = vst [vmem:[%s117] sm:%s3] %v116
    %s119 = smul.addr 2, 8
    %s120 = scalar_lea.vmem %s0, %s119
    %v121 = vld [vmem:[%s120] sm:%s3]
    %s122 = scalar_lea.vmem [#allocation0], 64
    %123 = vst [vmem:[%s122] sm:%s3] %v121
    %s124 = smul.addr 2, 7
    %s125 = scalar_lea.vmem %s0, %s124
    %v126 = vld [vmem:[%s125] sm:%s3]
    %s127 = scalar_lea.vmem [#allocation0], 56
    %128 = vst [vmem:[%s127] sm:%s3] %v126
    %s129 = smul.addr 2, 6
    %s130 = scalar_lea.vmem %s0, %s129
    %v131 = vld [vmem:[%s130] sm:%s3]
    %s132 = scalar_lea.vmem [#allocation0], 48
    %133 = vst [vmem:[%s132] sm:%s3] %v131
    %s134 = smul.addr 2, 5
    %s135 = scalar_lea.vmem %s0, %s134
    %v136 = vld [vmem:[%s135] sm:%s3]
    %s137 = scalar_lea.vmem [#allocation0], 40
    %138 = vst [vmem:[%s137] sm:%s3] %v136
    %s139 = smul.addr 2, 4
    %s140 = scalar_lea.vmem %s0, %s139
    %v141 = vld [vmem:[%s140] sm:%s3]
    %s142 = scalar_lea.vmem [#allocation0], 32
    %143 = vst [vmem:[%s142] sm:%s3] %v141
    %s144 = smul.addr 2, 3
    %s145 = scalar_lea.vmem %s0, %s144
    %v146 = vld [vmem:[%s145] sm:%s3]
    %s147 = scalar_lea.vmem [#allocation0], 24
    %148 = vst [vmem:[%s147] sm:%s3] %v146
    %s149 = smul.addr 2, 2
    %s150 = scalar_lea.vmem %s0, %s149
    %v151 = vld [vmem:[%s150] sm:%s3]
    %s152 = scalar_lea.vmem [#allocation0], 16
    %153 = vst [vmem:[%s152] sm:%s3] %v151
    %s154 = scalar_lea.vmem %s0, 2
    %v155 = vld [vmem:[%s154] sm:%s3]
    %s156 = scalar_lea.vmem [#allocation0], 8
    %157 = vst [vmem:[%s156] sm:%s3] %v155
    %v158 = vld [vmem:[%s0] sm:%s3]
    %159 = vst [vmem:[#allocation0] sm:%s3] %v158
    %v160 = vld [vmem:[#allocation0] ss:$8 sm:$0xf]
    %v161 = vld [vmem:[#allocation0] ss:$8 sm:$0xf0]
    %vm162 = vcmask 1047556
    %v163 = vsel %vm162, %v161, %v160
    %vm164 = vcmask 64512
    %165 = vst.msk [vmem:[%s1] sm:$0xff] %vm164, %v163
    %s166 = scalar_lea.vmem [#allocation0], 64
    %v167 = vld [vmem:[%s166] ss:$8 sm:$0xf]
    %s168 = scalar_lea.vmem [#allocation0], 64
    %v169 = vld [vmem:[%s168] ss:$8 sm:$0xf0]
    %vm170 = vcmask 1047556
    %v171 = vsel %vm170, %v169, %v167
    %vm172 = vcmask 64512
    %s173 = scalar_lea.vmem %s1, 8
    %174 = vst.msk [vmem:[%s173] sm:$0xff] %vm172, %v171
    %s175 = scalar_lea.vmem [#allocation0], 128
    %v176 = vld [vmem:[%s175] ss:$8 sm:$0xf]
    %s177 = scalar_lea.vmem [#allocation0], 128
    %v178 = vld [vmem:[%s177] ss:$8 sm:$0xf0]
    %vm179 = vcmask 1047556
    %v180 = vsel %vm179, %v178, %v176
    %vm181 = vcmask 64512
    %s182 = scalar_lea.vmem %s1, 16
    %183 = vst.msk [vmem:[%s182] sm:$0xff] %vm181, %v180
    %s184 = scalar_lea.vmem [#allocation0], 192
    %v185 = vld [vmem:[%s184] ss:$8 sm:$0xf]
    %s186 = scalar_lea.vmem [#allocation0], 192
    %v187 = vld [vmem:[%s186] ss:$8 sm:$0xf0]
    %vm188 = vcmask 1047556
    %v189 = vsel %vm188, %v187, %v185
    %vm190 = vcmask 64512
    %s191 = scalar_lea.vmem %s1, 24
    %192 = vst.msk [vmem:[%s191] sm:$0xff] %vm190, %v189
    %s193 = scalar_lea.vmem [#allocation0], 1
    %v194 = vld [vmem:[%s193] ss:$8 sm:$0xf]
    %s195 = scalar_lea.vmem [#allocation0], 1
    %v196 = vld [vmem:[%s195] ss:$8 sm:$0xf0]
    %vm197 = vcmask 1047556
    %v198 = vsel %vm197, %v196, %v194
    %199 = vrot.lane.b32.xlu0 %v198, 8
    %v200 = vpop.permute.xlu0 %199
    %vm201 = vcmask 130112
    %202 = vst.msk [vmem:[%s1] sm:$0xff] %vm201, %v200
    %s203 = scalar_lea.vmem [#allocation0], 65
    %v204 = vld [vmem:[%s203] ss:$8 sm:$0xf]
    %s205 = scalar_lea.vmem [#allocation0], 65
    %v206 = vld [vmem:[%s205] ss:$8 sm:$0xf0]
    %vm207 = vcmask 1047556
    %v208 = vsel %vm207, %v206, %v204
    %209 = vrot.lane.b32.xlu0 %v208, 8
    %v210 = vpop.permute.xlu0 %209
    %vm211 = vcmask 130112
    %s212 = scalar_lea.vmem %s1, 8
    %213 = vst.msk [vmem:[%s212] sm:$0xff] %vm211, %v210
    %s214 = scalar_lea.vmem [#allocation0], 129
    %v215 = vld [vmem:[%s214] ss:$8 sm:$0xf]
    %s216 = scalar_lea.vmem [#allocation0], 129
    %v217 = vld [vmem:[%s216] ss:$8 sm:$0xf0]
    %vm218 = vcmask 1047556
    %v219 = vsel %vm218, %v217, %v215
    %220 = vrot.lane.b32.xlu0 %v219, 8
    %v221 = vpop.permute.xlu0 %220
    %vm222 = vcmask 130112
    %s223 = scalar_lea.vmem %s1, 16
    %224 = vst.msk [vmem:[%s223] sm:$0xff] %vm222, %v221
    %s225 = scalar_lea.vmem [#allocation0], 193
    %v226 = vld [vmem:[%s225] ss:$8 sm:$0xf]
    %s227 = scalar_lea.vmem [#allocation0], 193
    %v228 = vld [vmem:[%s227] ss:$8 sm:$0xf0]
    %vm229 = vcmask 1047556
    %v230 = vsel %vm229, %v228, %v226
    %231 = vrot.lane.b32.xlu0 %v230, 8
    %v232 = vpop.permute.xlu0 %231
    %vm233 = vcmask 130112
    %s234 = scalar_lea.vmem %s1, 24
    %235 = vst.msk [vmem:[%s234] sm:$0xff] %vm233, %v232

// kernel: cross_attn_decoder_forward.1
$region0: #{cross_attn_decoder_forward.1}
  #allocation0 [shape = 'u32[]', space=smem, size = 0x4, offset = 0x4, fixed_abs, tag = 'smem constant byte address 0x4 - core index']
  #allocation1 [shape = 'u32[144,128]{1,0:T(1,128)}', space=vmem, size = 0x12000, scoped, tag = 'internal scratch']
  %s0 = inlined_call_operand.vmem [shape: f32[2], index: 0, kind: input, shape index: {}]
  %s1 = inlined_call_operand.vmem [shape: f32[16,64], index: 1, kind: input, shape index: {}]
  %s2 = inlined_call_operand.vmem [shape: f32[32,64], index: 2, kind: input, shape index: {}]
  %s3 = inlined_call_operand.vmem [shape: f32[2,16,16], index: 3, kind: input, shape index: {}]
  %s4 = inlined_call_operand.vmem [shape: f32[16,32], index: 4, kind: input, shape index: {}]
  %s5 = inlined_call_operand.vmem [shape: f32[2,1,64], index: 5, kind: input, shape index: {}]
  %s6 = inlined_call_operand.vmem [shape: f32[2,64,96], index: 6, kind: input, shape index: {}]
  %s7 = inlined_call_operand.vmem [shape: f32[2,32,64], index: 7, kind: input, shape index: {}]
  %s8 = inlined_call_operand.vmem [shape: f32[2,1,64], index: 8, kind: input, shape index: {}]
  %s9 = inlined_call_operand.vmem [shape: f32[2,64,32], index: 9, kind: input, shape index: {}]
  %s10 = inlined_call_operand.vmem [shape: f32[2,64,64], index: 10, kind: input, shape index: {}]
  %s11 = inlined_call_operand.vmem [shape: f32[2,32,64], index: 11, kind: input, shape index: {}]
  %s12 = inlined_call_operand.vmem [shape: f32[2,1,64], index: 12, kind: input, shape index: {}]
  %s13 = inlined_call_operand.vmem [shape: f32[2,64,256], index: 13, kind: input, shape index: {}]
  %s14 = inlined_call_operand.vmem [shape: f32[2,256,64], index: 14, kind: input, shape index: {}]
  %s15 = inlined_call_operand.vmem [shape: f32[1,64], index: 15, kind: input, shape index: {}]
  %s16 = inlined_call_operand.vmem [shape: f32[64,128], index: 16, kind: input, shape index: {}]
  %s17 = inlined_call_operand.vmem [shape: f32[1,128], index: 17, kind: input, shape index: {}]
  %s18 = inlined_call_operand.hbm [shape: f32[16,128], index: 18, kind: output, shape index: {0}]
  %s19 = inlined_call_operand.vmem [shape: f32[16,128], index: 19, kind: output, shape index: {1}]
  %20 = xla_tuple %s18, %s19
  %s21 = sld [smem:[#allocation0]]
  $region94: #{cross_attn_decoder_forward.1} parent=0
    _
  %s23 = ssub.s32 1, %s21
  %s24 = scalar_select 0, %s23, %s21
  $region1: #{cross_attn_decoder_forward.1} parent=0
    #allocation2 [shape = 'u8[512]{0}', space=smem, size = 0x200, scoped, tag = 'input window, operand 0, single buffered']
    #allocation3 [shape = 's32[1]{0}', space=sflag, size = 0x4, scoped, tag = 'scoped memory for cross_attn_decoder_forward.1']
    #allocation4 [shape = 's32[1]{0}', space=sflag, size = 0x4, scoped, tag = 'scoped memory for cross_attn_decoder_forward.1']
    #allocation5 [shape = 'u8[8192]{0}', space=vmem, size = 0x2000, scoped, tag = 'output window, operand 0, single buffered']
    %25 = vsyncpa [#allocation4], 0
    %26 = vsyncpa [#allocation3], 0
    // Predicated region
    $region2: #{cross_attn_decoder_forward.1} parent=1 // pred_check
      _
    $region3: #{cross_attn_decoder_forward.1} parent=1 // pred_check_branch
      %28 = sbr.rel (0) target = $region5
    $region4: #{cross_attn_decoder_forward.1} parent=1 // pred_region
      %s30 = ssub.s32 16, 16
      %31 = vsyncadd [#allocation4], %s30
      %s33 = sshll.u32 %s0, 4
      %s34 = int_to_ptr.vmem [resolvable:$true] %s33
      %36 = dma.vmem_to_smem %s34, 16, [#allocation2], [#allocation4]
    $region5: #{cross_attn_decoder_forward.1} parent=1 // pred_fallthru
      _
    // Predicated region
    $region6: #{cross_attn_decoder_forward.1} parent=1 // pred_check
      _
    $region7: #{cross_attn_decoder_forward.1} parent=1 // pred_check_branch
      %38 = sbr.rel (0) target = $region9
    $region8: #{cross_attn_decoder_forward.1} parent=1 // pred_region
      _
    $region9: #{cross_attn_decoder_forward.1} parent=1 // pred_fallthru
      _
    // Predicated region
    $region10: #{cross_attn_decoder_forward.1} parent=1 // pred_check
      _
    $region11: #{cross_attn_decoder_forward.1} parent=1 // pred_check_branch
      %40 = sbr.rel (0) target = $region13
    $region12: #{cross_attn_decoder_forward.1} parent=1 // pred_region
      _
    $region13: #{cross_attn_decoder_forward.1} parent=1 // pred_fallthru
      _
    // Predicated region
    $region14: #{cross_attn_decoder_forward.1} parent=1 // pred_check
      _
    $region15: #{cross_attn_decoder_forward.1} parent=1 // pred_check_branch
      %42 = sbr.rel (0) target = $region17
    $region16: #{cross_attn_decoder_forward.1} parent=1 // pred_region
      _
    $region17: #{cross_attn_decoder_forward.1} parent=1 // pred_fallthru
      _
    // Predicated region
    $region18: #{cross_attn_decoder_forward.1} parent=1 // pred_check
      _
    $region19: #{cross_attn_decoder_forward.1} parent=1 // pred_check_branch
      %44 = sbr.rel (0) target = $region21
    $region20: #{cross_attn_decoder_forward.1} parent=1 // pred_region
      _
    $region21: #{cross_attn_decoder_forward.1} parent=1 // pred_fallthru
      _
    // Predicated region
    $region22: #{cross_attn_decoder_forward.1} parent=1 // pred_check
      _
    $region23: #{cross_attn_decoder_forward.1} parent=1 // pred_check_branch
      %46 = sbr.rel (0) target = $region25
    $region24: #{cross_attn_decoder_forward.1} parent=1 // pred_region
      _
    $region25: #{cross_attn_decoder_forward.1} parent=1 // pred_fallthru
      _
    // Predicated region
    $region26: #{cross_attn_decoder_forward.1} parent=1 // pred_check
      _
    $region27: #{cross_attn_decoder_forward.1} parent=1 // pred_check_branch
      %48 = sbr.rel (0) target = $region29
    $region28: #{cross_attn_decoder_forward.1} parent=1 // pred_region
      _
    $region29: #{cross_attn_decoder_forward.1} parent=1 // pred_fallthru
      _
    // Predicated region
    $region30: #{cross_attn_decoder_forward.1} parent=1 // pred_check
      _
    $region31: #{cross_attn_decoder_forward.1} parent=1 // pred_check_branch
      %50 = sbr.rel (0) target = $region33
    $region32: #{cross_attn_decoder_forward.1} parent=1 // pred_region
      _
    $region33: #{cross_attn_decoder_forward.1} parent=1 // pred_fallthru
      _
    // Predicated region
    $region34: #{cross_attn_decoder_forward.1} parent=1 // pred_check
      _
    $region35: #{cross_attn_decoder_forward.1} parent=1 // pred_check_branch
      %52 = sbr.rel (0) target = $region37
    $region36: #{cross_attn_decoder_forward.1} parent=1 // pred_region
      _
    $region37: #{cross_attn_decoder_forward.1} parent=1 // pred_fallthru
      _
    // Predicated region
    $region38: #{cross_attn_decoder_forward.1} parent=1 // pred_check
      _
    $region39: #{cross_attn_decoder_forward.1} parent=1 // pred_check_branch
      %54 = sbr.rel (0) target = $region41
    $region40: #{cross_attn_decoder_forward.1} parent=1 // pred_region
      _
    $region41: #{cross_attn_decoder_forward.1} parent=1 // pred_fallthru
      _
    // Predicated region
    $region42: #{cross_attn_decoder_forward.1} parent=1 // pred_check
      _
    $region43: #{cross_attn_decoder_forward.1} parent=1 // pred_check_branch
      %56 = sbr.rel (0) target = $region45
    $region44: #{cross_attn_decoder_forward.1} parent=1 // pred_region
      _
    $region45: #{cross_attn_decoder_forward.1} parent=1 // pred_fallthru
      _
    // Predicated region
    $region46: #{cross_attn_decoder_forward.1} parent=1 // pred_check
      _
    $region47: #{cross_attn_decoder_forward.1} parent=1 // pred_check_branch
      %58 = sbr.rel (0) target = $region49
    $region48: #{cross_attn_decoder_forward.1} parent=1 // pred_region
      _
    $region49: #{cross_attn_decoder_forward.1} parent=1 // pred_fallthru
      _
    // Predicated region
    $region50: #{cross_attn_decoder_forward.1} parent=1 // pred_check
      _
    $region51: #{cross_attn_decoder_forward.1} parent=1 // pred_check_branch
      %60 = sbr.rel (0) target = $region53
    $region52: #{cross_attn_decoder_forward.1} parent=1 // pred_region
      _
    $region53: #{cross_attn_decoder_forward.1} parent=1 // pred_fallthru
      _
    // Predicated region
    $region54: #{cross_attn_decoder_forward.1} parent=1 // pred_check
      _
    $region55: #{cross_attn_decoder_forward.1} parent=1 // pred_check_branch
      %62 = sbr.rel (0) target = $region57
    $region56: #{cross_attn_decoder_forward.1} parent=1 // pred_region
      _
    $region57: #{cross_attn_decoder_forward.1} parent=1 // pred_fallthru
      _
    // Predicated region
    $region58: #{cross_attn_decoder_forward.1} parent=1 // pred_check
      _
    $region59: #{cross_attn_decoder_forward.1} parent=1 // pred_check_branch
      %64 = sbr.rel (0) target = $region61
    $region60: #{cross_attn_decoder_forward.1} parent=1 // pred_region
      _
    $region61: #{cross_attn_decoder_forward.1} parent=1 // pred_fallthru
      _
    // Predicated region
    $region62: #{cross_attn_decoder_forward.1} parent=1 // pred_check
      _
    $region63: #{cross_attn_decoder_forward.1} parent=1 // pred_check_branch
      %66 = sbr.rel (0) target = $region65
    $region64: #{cross_attn_decoder_forward.1} parent=1 // pred_region
      _
    $region65: #{cross_attn_decoder_forward.1} parent=1 // pred_fallthru
      _
    // Predicated region
    $region66: #{cross_attn_decoder_forward.1} parent=1 // pred_check
      _
    $region67: #{cross_attn_decoder_forward.1} parent=1 // pred_check_branch
      %68 = sbr.rel (0) target = $region69
    $region68: #{cross_attn_decoder_forward.1} parent=1 // pred_region
      _
    $region69: #{cross_attn_decoder_forward.1} parent=1 // pred_fallthru
      _
    // Predicated region
    $region70: #{cross_attn_decoder_forward.1} parent=1 // pred_check
      _
    $region71: #{cross_attn_decoder_forward.1} parent=1 // pred_check_branch
      %70 = sbr.rel (0) target = $region73
    $region72: #{cross_attn_decoder_forward.1} parent=1 // pred_region
      _
    $region73: #{cross_attn_decoder_forward.1} parent=1 // pred_fallthru
      _
    // Predicated region
    $region74: #{cross_attn_decoder_forward.1} parent=1 // pred_check
      _
    $region75: #{cross_attn_decoder_forward.1} parent=1 // pred_check_branch
      %72 = sbr.rel (0) target = $region77
    $region76: #{cross_attn_decoder_forward.1} parent=1 // pred_region
      %73 = dma.done [#allocation4], 16
    $region77: #{cross_attn_decoder_forward.1} parent=1 // pred_fallthru
      _
    %74 = sfence
    %v75 = vld [vmem:[%s1] sm:$0xff]
    %v76 = vld [vmem:[%s1 + $0x8] sm:$0xff]
    %v77 = vld [vmem:[%s2] sm:$0xff]
    %v78 = vld [vmem:[%s2 + $0x8] sm:$0xff]
    %v79 = vld [vmem:[%s2 + $0x10] sm:$0xff]
    %v80 = vld [vmem:[%s2 + $0x18] sm:$0xff]
    %v81 = vld [vmem:[%s4] sm:$0xff]
    %v82 = vld [vmem:[%s4 + $0x8] sm:$0xff]
    %v83 = vld [vmem:[%s5] sm:$0x1]
    %v84 = vmul.f32 %v75, %v75
    %v85 = vmul.f32 %v76, %v76
    %vm86 = vcmask 523264
    %v87 = vsel %vm86, %v84, 0.0
    %88 = vadd.xlane.f32.xlu0 %v87
    %v89 = vpop.xlane.xlu0 %88
    %v90 = vsel %vm86, %v85, 0.0
    %91 = vadd.xlane.f32.xlu0 %v90
    %v92 = vpop.xlane.xlu0 %91
    %v93 = vrcp.pop 64.0
    %v94 = vmul.f32 %v89, %v93
    %v95 = vmul.f32 %v92, %v93
    %v96 = vadd.f32 %v94, 1e-08
    %v97 = vadd.f32 %v95, 1e-08
    %v98 = vrsqrt.pop %v96
    %v99 = vrsqrt.pop %v97
    %v100 = vmul.f32 %v75, %v98
    %v101 = vmul.f32 %v76, %v99
    %v103 = vlaneseq
    %v104 = vshrl.u32 %v103, 7
    %v105 = vsub.s32 0, %v104
    %v106 = vrot.slane %v83, %v105
    %v108 = vmul.f32 %v100, %v106
    %v109 = vmul.f32 %v101, %v106
    %v110 = vld [vmem:[%s6] sm:$0xff]
    %v111 = vld [vmem:[%s6 + $0x8] sm:$0xff]
    %v112 = vld [vmem:[%s6 + $0x10] sm:$0xff]
    %v113 = vld [vmem:[%s6 + $0x18] sm:$0xff]
    %v114 = vld [vmem:[%s6 + $0x20] sm:$0xff]
    %v115 = vld [vmem:[%s6 + $0x28] sm:$0xff]
    %v116 = vld [vmem:[%s6 + $0x30] sm:$0xff]
    %v117 = vld [vmem:[%s6 + $0x38] sm:$0xff]
    %v119 = vsel %vm86, %v108, 0
    %v122 = vsel %vm86, %v109, 0
    %124 = vmatprep.subr.mxu0 0.0
    %125 = vmatpush1.msra.mxu0 %v110
    %126 = vmatprep.subr.mxu0 0.0
    %127 = vmatpush1.msra.mxu0 %v111
    %128 = vmatprep.subr.mxu0 0.0
    %129 = vmatpush1.msra.mxu0 %v112
    %130 = vmatprep.subr.mxu0 0.0
    %131 = vmatpush1.msra.mxu0 %v113
    %132 = vmatprep.subr.mxu0 0.0
    %133 = vmatpush1.msra.mxu0 %v114
    %134 = vmatprep.subr.mxu0 0.0
    %135 = vmatpush1.msra.mxu0 %v115
    %136 = vmatprep.subr.mxu0 0.0
    %137 = vmatpush1.msra.mxu0 %v116
    %138 = vmatprep.subr.mxu0 0.0
    %139 = vmatpush1.msra.mxu0 %v117
    %140 = vmatprep.subr.mxu0 0.0
    %141 = vmatpush1.msra.mxu0 0.0
    %142 = vmatprep.subr.mxu0 0.0
    %143 = vmatpush1.msra.mxu0 0.0
    %144 = vmatprep.subr.mxu0 0.0
    %145 = vmatpush1.msra.mxu0 0.0
    %146 = vmatprep.subr.mxu0 0.0
    %147 = vmatpush1.msra.mxu0 0.0
    %148 = vmatprep.subr.mxu0 0.0
    %149 = vmatpush1.msra.mxu0 0.0
    %150 = vmatprep.subr.mxu0 0.0
    %151 = vmatpush1.msra.mxu0 0.0
    %152 = vmatprep.subr.mxu0 0.0
    %153 = vmatpush1.msra.mxu0 0.0
    %154 = vmatprep.subr.mxu0 0.0
    %155 = vmatpush1.msra.mxu0 0.0
    %156 = vmatprep.subr.mxu0 0.0
    %157 = vmatpush1.msra.mxu0 0.0
    %158 = vmatprep.subr.mxu0 0.0
    %159 = vmatpush1.msra.mxu0 0.0
    %160 = vmatprep.subr.mxu0 0.0
    %161 = vmatpush1.msra.mxu0 0.0
    %162 = vmatprep.subr.mxu0 0.0
    %163 = vmatpush1.msra.mxu0 0.0
    %164 = vmatprep.subr.mxu0 0.0
    %165 = vmatpush1.msra.mxu0 0.0
    %166 = vmatprep.subr.mxu0 0.0
    %167 = vmatpush1.msra.mxu0 0.0
    %168 = vmatprep.subr.mxu0 0.0
    %169 = vmatpush1.msra.mxu0 0.0
    %170 = vmatprep.subr.mxu0 0.0
    %171 = vmatpush1.msra.mxu0 0.0
    %172 = vmatprep.subr.mxu0 0.0
    %173 = vmatpush1.msra.mxu0 0.0
    %174 = vmatprep.subr.mxu0 0.0
    %175 = vmatpush1.msra.mxu0 0.0
    %176 = vmatprep.subr.mxu0 0.0
    %177 = vmatpush1.msra.mxu0 0.0
    %178 = vmatprep.subr.mxu0 0.0
    %179 = vmatpush1.msra.mxu0 0.0
    %180 = vmatprep.subr.mxu0 0.0
    %181 = vmatpush1.msra.mxu0 0.0
    %182 = vmatprep.subr.mxu0 0.0
    %183 = vmatpush1.msra.mxu0 0.0
    %184 = vmatprep.subr.mxu0 0.0
    %185 = vmatpush1.msra.mxu0 0.0
    %186 = vmatprep.subr.mxu0 0.0
    %187 = vmatpush1.msra.mxu0 0.0
    %188 = vmatprep.mubr.f32.mxu0 0.0
    %189 = vmatmul.mubr.f32.gmra.mrb[0].mxu0 %v119
    %v190 = vpop.f32.mrb[0].mxu0
    %v191 = vadd.f32 0.0, %v190
    %v192 = vpop.f32.mrb[0].mxu0
    %193 = vmatprep.mubr.f32.mxu0 0.0
    %194 = vmatmul.mubr.f32.gmra.mrb[0].mxu0 %v122
    %v195 = vpop.f32.mrb[0].mxu0
    %v196 = vadd.f32 0.0, %v195
    %v197 = vpop.f32.mrb[0].mxu0
    %198 = vdwg.mxu0
    %s199 = sld [smem:[#allocation2]]
    %v200 = vmul.f32 %v191, %v191
    %v201 = vmul.f32 %v196, %v196
    %vm202 = vcmask 130048
    %v203 = vsel %vm202, %v200, 0.0
    %204 = vadd.xlane.f32.xlu0 %v203
    %v205 = vpop.xlane.xlu0 %204
    %v206 = vsel %vm202, %v201, 0.0
    %207 = vadd.xlane.f32.xlu0 %v206
    %v208 = vpop.xlane.xlu0 %207
    %v209 = vmax.f32 %v205, 1e-24
    %v210 = vmax.f32 %v208, 1e-24
    %v211 = vrsqrt.pop %v209
    %v212 = vrsqrt.pop %v210
    %v213 = vmul.f32 %v191, %v211
    %v214 = vmul.f32 %v196, %v212
    %217 = vrot.lane.b32.xlu0 %v200, 96
    %v218 = vpop.permute.xlu0 %217
    %219 = vrot.lane.b32.xlu0 %v201, 96
    %v220 = vpop.permute.xlu0 %219
    %v223 = vsel %vm202, %v218, 0.0
    %224 = vadd.xlane.f32.xlu0 %v223
    %v225 = vpop.xlane.xlu0 %224
    %v226 = vsel %vm202, %v220, 0.0
    %227 = vadd.xlane.f32.xlu0 %v226
    %v228 = vpop.xlane.xlu0 %227
    %v229 = vmax.f32 %v225, 1e-24
    %v230 = vmax.f32 %v228, 1e-24
    %v231 = vrsqrt.pop %v229
    %v232 = vrsqrt.pop %v230
    %v233 = vmul.f32 %v191, %v231
    %v234 = vmul.f32 %v196, %v232
    %237 = vrot.lane.b32.xlu0 %v233, 96
    %v238 = vpop.permute.xlu0 %237
    %239 = vrot.lane.b32.xlu0 %v234, 96
    %v240 = vpop.permute.xlu0 %239
    %v242 = vsel %vm202, %v213, 0
    %v245 = vsel %vm202, %v214, 0
    %v247 = vsel %vm202, %v238, 0
    %v249 = vsel %vm202, %v240, 0
    %251 = vmatprep.subr.mxu0 0.0
    %252 = vmatpush1.xpose.msra.mxu0 %v247
    %253 = vmatprep.subr.mxu0 0.0
    %254 = vmatpush1.xpose.msra.mxu0 %v249
    %255 = vmatprep.subr.mxu0 0.0
    %256 = vmatpush1.xpose.msra.mxu0 0.0
    %257 = vmatprep.subr.mxu0 0.0
    %258 = vmatpush1.xpose.msra.mxu0 0.0
    %259 = vmatprep.subr.mxu0 0.0
    %260 = vmatpush1.xpose.msra.mxu0 0.0
    %261 = vmatprep.subr.mxu0 0.0
    %262 = vmatpush1.xpose.msra.mxu0 0.0
    %263 = vmatprep.subr.mxu0 0.0
    %264 = vmatpush1.xpose.msra.mxu0 0.0
    %265 = vmatprep.subr.mxu0 0.0
    %266 = vmatpush1.xpose.msra.mxu0 0.0
    %267 = vmatprep.subr.mxu0 0.0
    %268 = vmatpush1.xpose.msra.mxu0 0.0
    %269 = vmatprep.subr.mxu0 0.0
    %270 = vmatpush1.xpose.msra.mxu0 0.0
    %271 = vmatprep.subr.mxu0 0.0
    %272 = vmatpush1.xpose.msra.mxu0 0.0
    %273 = vmatprep.subr.mxu0 0.0
    %274 = vmatpush1.xpose.msra.mxu0 0.0
    %275 = vmatprep.subr.mxu0 0.0
    %276 = vmatpush1.xpose.msra.mxu0 0.0
    %277 = vmatprep.subr.mxu0 0.0
    %278 = vmatpush1.xpose.msra.mxu0 0.0
    %279 = vmatprep.subr.mxu0 0.0
    %280 = vmatpush1.xpose.msra.mxu0 0.0
    %281 = vmatprep.subr.mxu0 0.0
    %282 = vmatpush1.xpose.msra.mxu0 0.0
    %283 = vmatprep.subr.mxu0 0.0
    %284 = vmatpush1.xpose.msra.mxu0 0.0
    %285 = vmatprep.subr.mxu0 0.0
    %286 = vmatpush1.xpose.msra.mxu0 0.0
    %287 = vmatprep.subr.mxu0 0.0
    %288 = vmatpush1.xpose.msra.mxu0 0.0
    %289 = vmatprep.subr.mxu0 0.0
    %290 = vmatpush1.xpose.msra.mxu0 0.0
    %291 = vmatprep.subr.mxu0 0.0
    %292 = vmatpush1.xpose.msra.mxu0 0.0
    %293 = vmatprep.subr.mxu0 0.0
    %294 = vmatpush1.xpose.msra.mxu0 0.0
    %295 = vmatprep.subr.mxu0 0.0
    %296 = vmatpush1.xpose.msra.mxu0 0.0
    %297 = vmatprep.subr.mxu0 0.0
    %298 = vmatpush1.xpose.msra.mxu0 0.0
    %299 = vmatprep.subr.mxu0 0.0
    %300 = vmatpush1.xpose.msra.mxu0 0.0
    %301 = vmatprep.subr.mxu0 0.0
    %302 = vmatpush1.xpose.msra.mxu0 0.0
    %303 = vmatprep.subr.mxu0 0.0
    %304 = vmatpush1.xpose.msra.mxu0 0.0
    %305 = vmatprep.subr.mxu0 0.0
    %306 = vmatpush1.xpose.msra.mxu0 0.0
    %307 = vmatprep.subr.mxu0 0.0
    %308 = vmatpush1.xpose.msra.mxu0 0.0
    %309 = vmatprep.subr.mxu0 0.0
    %310 = vmatpush1.xpose.msra.mxu0 0.0
    %311 = vmatprep.subr.mxu0 0.0
    %312 = vmatpush1.xpose.msra.mxu0 0.0
    %313 = vmatprep.subr.mxu0 0.0
    %314 = vmatpush1.xpose.msra.mxu0 0.0
    %315 = vmatprep.mubr.f32.mxu0 0.0
    %316 = vmatmul.mubr.f32.gmra.mrb[0].mxu0 %v242
    %v317 = vpop.f32.mrb[0].mxu0
    %v318 = vadd.f32 0.0, %v317
    %v319 = vpop.f32.mrb[0].mxu0
    %320 = vmatprep.mubr.f32.mxu0 0.0
    %321 = vmatmul.mubr.f32.gmra.mrb[0].mxu0 %v245
    %v322 = vpop.f32.mrb[0].mxu0
    %v323 = vadd.f32 0.0, %v322
    %v324 = vpop.f32.mrb[0].mxu0
    %325 = vdwg.mxu0
    %v326 = vstv %s199
    %v327 = vmul.f32 %v318, %v326
    %v328 = vmul.f32 %v323, %v326
    %v329 = vld [vmem:[%s3] sm:$0xff]
    %v330 = vld [vmem:[%s3 + $0x8] sm:$0xff]
    %v331 = vadd.f32 %v327, %v329
    %v332 = vadd.f32 %v328, %v330
    %v333 = vsel %vm202, %v331, -inf
    %334 = vmax.xlane.f32.xlu0 %v333
    %v335 = vpop.xlane.xlu0 %334
    %v336 = vsel %vm202, %v332, -inf
    %337 = vmax.xlane.f32.xlu0 %v336
    %v338 = vpop.xlane.xlu0 %337
    %v339 = vsub.f32 %v331, %v335
    %v340 = vsub.f32 %v332, %v338
    %v341 = vmul.f32 %v339, 1.442695
    %v342 = vpow.pop %v341
    %v343 = vmul.f32 %v340, 1.442695
    %v344 = vpow.pop %v343
    %v345 = vsel %vm202, %v342, 0.0
    %346 = vadd.xlane.f32.xlu0 %v345
    %v347 = vpop.xlane.xlu0 %346
    %v348 = vsel %vm202, %v344, 0.0
    %349 = vadd.xlane.f32.xlu0 %v348
    %v350 = vpop.xlane.xlu0 %349
    %v351 = vrcp.pop %v347
    %v352 = vrcp.pop %v350
    %v353 = vmul.f32 %v342, %v351
    %v354 = vmul.f32 %v344, %v352
    %357 = vrot.lane.b32.xlu0 %v191, 64
    %v358 = vpop.permute.xlu0 %357
    %359 = vrot.lane.b32.xlu0 %v196, 64
    %v360 = vpop.permute.xlu0 %359
    %v364 = vsel %vm202, %v353, 0
    %v367 = vsel %vm202, %v354, 0
    %369 = vmatprep.subr.mxu0 0.0
    %370 = vmatpush1.msra.mxu0 %v358
    %371 = vmatprep.subr.mxu0 0.0
    %372 = vmatpush1.msra.mxu0 %v360
    %373 = vmatprep.subr.mxu0 0.0
    %374 = vmatpush1.msra.mxu0 0.0
    %375 = vmatprep.subr.mxu0 0.0
    %376 = vmatpush1.msra.mxu0 0.0
    %377 = vmatprep.subr.mxu0 0.0
    %378 = vmatpush1.msra.mxu0 0.0
    %379 = vmatprep.subr.mxu0 0.0
    %380 = vmatpush1.msra.mxu0 0.0
    %381 = vmatprep.subr.mxu0 0.0
    %382 = vmatpush1.msra.mxu0 0.0
    %383 = vmatprep.subr.mxu0 0.0
    %384 = vmatpush1.msra.mxu0 0.0
    %385 = vmatprep.subr.mxu0 0.0
    %386 = vmatpush1.msra.mxu0 0.0
    %387 = vmatprep.subr.mxu0 0.0
    %388 = vmatpush1.msra.mxu0 0.0
    %389 = vmatprep.subr.mxu0 0.0
    %390 = vmatpush1.msra.mxu0 0.0
    %391 = vmatprep.subr.mxu0 0.0
    %392 = vmatpush1.msra.mxu0 0.0
    %393 = vmatprep.subr.mxu0 0.0
    %394 = vmatpush1.msra.mxu0 0.0
    %395 = vmatprep.subr.mxu0 0.0
    %396 = vmatpush1.msra.mxu0 0.0
    %397 = vmatprep.subr.mxu0 0.0
    %398 = vmatpush1.msra.mxu0 0.0
    %399 = vmatprep.subr.mxu0 0.0
    %400 = vmatpush1.msra.mxu0 0.0
    %401 = vmatprep.subr.mxu0 0.0
    %402 = vmatpush1.msra.mxu0 0.0
    %403 = vmatprep.subr.mxu0 0.0
    %404 = vmatpush1.msra.mxu0 0.0
    %405 = vmatprep.subr.mxu0 0.0
    %406 = vmatpush1.msra.mxu0 0.0
    %407 = vmatprep.subr.mxu0 0.0
    %408 = vmatpush1.msra.mxu0 0.0
    %409 = vmatprep.subr.mxu0 0.0
    %410 = vmatpush1.msra.mxu0 0.0
    %411 = vmatprep.subr.mxu0 0.0
    %412 = vmatpush1.msra.mxu0 0.0
    %413 = vmatprep.subr.mxu0 0.0
    %414 = vmatpush1.msra.mxu0 0.0
    %415 = vmatprep.subr.mxu0 0.0
    %416 = vmatpush1.msra.mxu0 0.0
    %417 = vmatprep.subr.mxu0 0.0
    %418 = vmatpush1.msra.mxu0 0.0
    %419 = vmatprep.subr.mxu0 0.0
    %420 = vmatpush1.msra.mxu0 0.0
    %421 = vmatprep.subr.mxu0 0.0
    %422 = vmatpush1.msra.mxu0 0.0
    %423 = vmatprep.subr.mxu0 0.0
    %424 = vmatpush1.msra.mxu0 0.0
    %425 = vmatprep.subr.mxu0 0.0
    %426 = vmatpush1.msra.mxu0 0.0
    %427 = vmatprep.subr.mxu0 0.0
    %428 = vmatpush1.msra.mxu0 0.0
    %429 = vmatprep.subr.mxu0 0.0
    %430 = vmatpush1.msra.mxu0 0.0
    %431 = vmatprep.subr.mxu0 0.0
    %432 = vmatpush1.msra.mxu0 0.0
    %433 = vmatprep.mubr.f32.mxu0 0.0
    %434 = vmatmul.mubr.f32.gmra.mrb[0].mxu0 %v364
    %v435 = vpop.f32.mrb[0].mxu0
    %v436 = vadd.f32 0.0, %v435
    %v437 = vpop.f32.mrb[0].mxu0
    %438 = vmatprep.mubr.f32.mxu0 0.0
    %439 = vmatmul.mubr.f32.gmra.mrb[0].mxu0 %v367
    %v440 = vpop.f32.mrb[0].mxu0
    %v441 = vadd.f32 0.0, %v440
    %v442 = vpop.f32.mrb[0].mxu0
    %443 = vdwg.mxu0
    %444 = vrot.lane.b32.xlu0 %v200, 112
    %v445 = vpop.permute.xlu0 %444
    %446 = vrot.lane.b32.xlu0 %v201, 112
    %v447 = vpop.permute.xlu0 %446
    %v450 = vsel %vm202, %v445, 0.0
    %451 = vadd.xlane.f32.xlu0 %v450
    %v452 = vpop.xlane.xlu0 %451
    %v453 = vsel %vm202, %v447, 0.0
    %454 = vadd.xlane.f32.xlu0 %v453
    %v455 = vpop.xlane.xlu0 %454
    %v456 = vmax.f32 %v452, 1e-24
    %v457 = vmax.f32 %v455, 1e-24
    %v458 = vrsqrt.pop %v456
    %v459 = vrsqrt.pop %v457
    %v460 = vmul.f32 %v191, %v458
    %v461 = vmul.f32 %v196, %v459
    %462 = vrot.lane.b32.xlu0 %v200, 80
    %v463 = vpop.permute.xlu0 %462
    %464 = vrot.lane.b32.xlu0 %v201, 80
    %v465 = vpop.permute.xlu0 %464
    %v468 = vsel %vm202, %v463, 0.0
    %469 = vadd.xlane.f32.xlu0 %v468
    %v470 = vpop.xlane.xlu0 %469
    %v471 = vsel %vm202, %v465, 0.0
    %472 = vadd.xlane.f32.xlu0 %v471
    %v473 = vpop.xlane.xlu0 %472
    %v474 = vmax.f32 %v470, 1e-24
    %v475 = vmax.f32 %v473, 1e-24
    %v476 = vrsqrt.pop %v474
    %v477 = vrsqrt.pop %v475
    %v478 = vmul.f32 %v191, %v476
    %v479 = vmul.f32 %v196, %v477
    %482 = vrot.lane.b32.xlu0 %v460, 112
    %v483 = vpop.permute.xlu0 %482
    %484 = vrot.lane.b32.xlu0 %v461, 112
    %v485 = vpop.permute.xlu0 %484
    %488 = vrot.lane.b32.xlu0 %v478, 80
    %v489 = vpop.permute.xlu0 %488
    %490 = vrot.lane.b32.xlu0 %v479, 80
    %v491 = vpop.permute.xlu0 %490
    %v492 = vsel %vm202, %v483, 0
    %v494 = vsel %vm202, %v485, 0
    %v496 = vsel %vm202, %v489, 0
    %v498 = vsel %vm202, %v491, 0
    %500 = vmatprep.subr.mxu0 0.0
    %501 = vmatpush1.xpose.msra.mxu0 %v496
    %502 = vmatprep.subr.mxu0 0.0
    %503 = vmatpush1.xpose.msra.mxu0 %v498
    %504 = vmatprep.subr.mxu0 0.0
    %505 = vmatpush1.xpose.msra.mxu0 0.0
    %506 = vmatprep.subr.mxu0 0.0
    %507 = vmatpush1.xpose.msra.mxu0 0.0
    %508 = vmatprep.subr.mxu0 0.0
    %509 = vmatpush1.xpose.msra.mxu0 0.0
    %510 = vmatprep.subr.mxu0 0.0
    %511 = vmatpush1.xpose.msra.mxu0 0.0
    %512 = vmatprep.subr.mxu0 0.0
    %513 = vmatpush1.xpose.msra.mxu0 0.0
    %514 = vmatprep.subr.mxu0 0.0
    %515 = vmatpush1.xpose.msra.mxu0 0.0
    %516 = vmatprep.subr.mxu0 0.0
    %517 = vmatpush1.xpose.msra.mxu0 0.0
    %518 = vmatprep.subr.mxu0 0.0
    %519 = vmatpush1.xpose.msra.mxu0 0.0
    %520 = vmatprep.subr.mxu0 0.0
    %521 = vmatpush1.xpose.msra.mxu0 0.0
    %522 = vmatprep.subr.mxu0 0.0
    %523 = vmatpush1.xpose.msra.mxu0 0.0
    %524 = vmatprep.subr.mxu0 0.0
    %525 = vmatpush1.xpose.msra.mxu0 0.0
    %526 = vmatprep.subr.mxu0 0.0
    %527 = vmatpush1.xpose.msra.mxu0 0.0
    %528 = vmatprep.subr.mxu0 0.0
    %529 = vmatpush1.xpose.msra.mxu0 0.0
    %530 = vmatprep.subr.mxu0 0.0
    %531 = vmatpush1.xpose.msra.mxu0 0.0
    %532 = vmatprep.subr.mxu0 0.0
    %533 = vmatpush1.xpose.msra.mxu0 0.0
    %534 = vmatprep.subr.mxu0 0.0
    %535 = vmatpush1.xpose.msra.mxu0 0.0
    %536 = vmatprep.subr.mxu0 0.0
    %537 = vmatpush1.xpose.msra.mxu0 0.0
    %538 = vmatprep.subr.mxu0 0.0
    %539 = vmatpush1.xpose.msra.mxu0 0.0
    %540 = vmatprep.subr.mxu0 0.0
    %541 = vmatpush1.xpose.msra.mxu0 0.0
    %542 = vmatprep.subr.mxu0 0.0
    %543 = vmatpush1.xpose.msra.mxu0 0.0
    %544 = vmatprep.subr.mxu0 0.0
    %545 = vmatpush1.xpose.msra.mxu0 0.0
    %546 = vmatprep.subr.mxu0 0.0
    %547 = vmatpush1.xpose.msra.mxu0 0.0
    %548 = vmatprep.subr.mxu0 0.0
    %549 = vmatpush1.xpose.msra.mxu0 0.0
    %550 = vmatprep.subr.mxu0 0.0
    %551 = vmatpush1.xpose.msra.mxu0 0.0
    %552 = vmatprep.subr.mxu0 0.0
    %553 = vmatpush1.xpose.msra.mxu0 0.0
    %554 = vmatprep.subr.mxu0 0.0
    %555 = vmatpush1.xpose.msra.mxu0 0.0
    %556 = vmatprep.subr.mxu0 0.0
    %557 = vmatpush1.xpose.msra.mxu0 0.0
    %558 = vmatprep.subr.mxu0 0.0
    %559 = vmatpush1.xpose.msra.mxu0 0.0
    %560 = vmatprep.subr.mxu0 0.0
    %561 = vmatpush1.xpose.msra.mxu0 0.0
    %562 = vmatprep.subr.mxu0 0.0
    %563 = vmatpush1.xpose.msra.mxu0 0.0
    %564 = vmatprep.mubr.f32.mxu0 0.0
    %565 = vmatmul.mubr.f32.gmra.mrb[0].mxu0 %v492
    %v566 = vpop.f32.mrb[0].mxu0
    %v567 = vadd.f32 0.0, %v566
    %v568 = vpop.f32.mrb[0].mxu0
    %569 = vmatprep.mubr.f32.mxu0 0.0
    %570 = vmatmul.mubr.f32.gmra.mrb[0].mxu0 %v494
    %v571 = vpop.f32.mrb[0].mxu0
    %v572 = vadd.f32 0.0, %v571
    %v573 = vpop.f32.mrb[0].mxu0
    %574 = vdwg.mxu0
    %v575 = vmul.f32 %v567, %v326
    %v576 = vmul.f32 %v572, %v326
    %s577 = scalar_lea.vmem %s3, 16
    %v578 = vld [vmem:[%s577] sm:$0xff]
    %v579 = vld [vmem:[%s577 + $0x8] sm:$0xff]
    %v580 = vadd.f32 %v575, %v578
    %v581 = vadd.f32 %v576, %v579
    %v582 = vsel %vm202, %v580, -inf
    %583 = vmax.xlane.f32.xlu0 %v582
    %v584 = vpop.xlane.xlu0 %583
    %v585 = vsel %vm202, %v581, -inf
    %586 = vmax.xlane.f32.xlu0 %v585
    %v587 = vpop.xlane.xlu0 %586
    %v588 = vsub.f32 %v580, %v584
    %v589 = vsub.f32 %v581, %v587
    %v590 = vmul.f32 %v588, 1.442695
    %v591 = vpow.pop %v590
    %v592 = vmul.f32 %v589, 1.442695
    %v593 = vpow.pop %v592
    %v594 = vsel %vm202, %v591, 0.0
    %595 = vadd.xlane.f32.xlu0 %v594
    %v596 = vpop.xlane.xlu0 %595
    %v597 = vsel %vm202, %v593, 0.0
    %598 = vadd.xlane.f32.xlu0 %v597
    %v599 = vpop.xlane.xlu0 %598
    %v600 = vrcp.pop %v596
    %v601 = vrcp.pop %v599
    %v602 = vmul.f32 %v591, %v600
    %v603 = vmul.f32 %v593, %v601
    %604 = vrot.lane.b32.xlu0 %v191, 48
    %v605 = vpop.permute.xlu0 %604
    %606 = vrot.lane.b32.xlu0 %v196, 48
    %v607 = vpop.permute.xlu0 %606
    %v611 = vsel %vm202, %v602, 0
    %v614 = vsel %vm202, %v603, 0
    %616 = vmatprep.subr.mxu0 0.0
    %617 = vmatpush1.msra.mxu0 %v605
    %618 = vmatprep.subr.mxu0 0.0
    %619 = vmatpush1.msra.mxu0 %v607
    %620 = vmatprep.subr.mxu0 0.0
    %621 = vmatpush1.msra.mxu0 0.0
    %622 = vmatprep.subr.mxu0 0.0
    %623 = vmatpush1.msra.mxu0 0.0
    %624 = vmatprep.subr.mxu0 0.0
    %625 = vmatpush1.msra.mxu0 0.0
    %626 = vmatprep.subr.mxu0 0.0
    %627 = vmatpush1.msra.mxu0 0.0
    %628 = vmatprep.subr.mxu0 0.0
    %629 = vmatpush1.msra.mxu0 0.0
    %630 = vmatprep.subr.mxu0 0.0
    %631 = vmatpush1.msra.mxu0 0.0
    %632 = vmatprep.subr.mxu0 0.0
    %633 = vmatpush1.msra.mxu0 0.0
    %634 = vmatprep.subr.mxu0 0.0
    %635 = vmatpush1.msra.mxu0 0.0
    %636 = vmatprep.subr.mxu0 0.0
    %637 = vmatpush1.msra.mxu0 0.0
    %638 = vmatprep.subr.mxu0 0.0
    %639 = vmatpush1.msra.mxu0 0.0
    %640 = vmatprep.subr.mxu0 0.0
    %641 = vmatpush1.msra.mxu0 0.0
    %642 = vmatprep.subr.mxu0 0.0
    %643 = vmatpush1.msra.mxu0 0.0
    %644 = vmatprep.subr.mxu0 0.0
    %645 = vmatpush1.msra.mxu0 0.0
    %646 = vmatprep.subr.mxu0 0.0
    %647 = vmatpush1.msra.mxu0 0.0
    %648 = vmatprep.subr.mxu0 0.0
    %649 = vmatpush1.msra.mxu0 0.0
    %650 = vmatprep.subr.mxu0 0.0
    %651 = vmatpush1.msra.mxu0 0.0
    %652 = vmatprep.subr.mxu0 0.0
    %653 = vmatpush1.msra.mxu0 0.0
    %654 = vmatprep.subr.mxu0 0.0
    %655 = vmatpush1.msra.mxu0 0.0
    %656 = vmatprep.subr.mxu0 0.0
    %657 = vmatpush1.msra.mxu0 0.0
    %658 = vmatprep.subr.mxu0 0.0
    %659 = vmatpush1.msra.mxu0 0.0
    %660 = vmatprep.subr.mxu0 0.0
    %661 = vmatpush1.msra.mxu0 0.0
    %662 = vmatprep.subr.mxu0 0.0
    %663 = vmatpush1.msra.mxu0 0.0
    %664 = vmatprep.subr.mxu0 0.0
    %665 = vmatpush1.msra.mxu0 0.0
    %666 = vmatprep.subr.mxu0 0.0
    %667 = vmatpush1.msra.mxu0 0.0
    %668 = vmatprep.subr.mxu0 0.0
    %669 = vmatpush1.msra.mxu0 0.0
    %670 = vmatprep.subr.mxu0 0.0
    %671 = vmatpush1.msra.mxu0 0.0
    %672 = vmatprep.subr.mxu0 0.0
    %673 = vmatpush1.msra.mxu0 0.0
    %674 = vmatprep.subr.mxu0 0.0
    %675 = vmatpush1.msra.mxu0 0.0
    %676 = vmatprep.subr.mxu0 0.0
    %677 = vmatpush1.msra.mxu0 0.0
    %678 = vmatprep.subr.mxu0 0.0
    %679 = vmatpush1.msra.mxu0 0.0
    %680 = vmatprep.mubr.f32.mxu0 0.0
    %681 = vmatmul.mubr.f32.gmra.mrb[0].mxu0 %v611
    %v682 = vpop.f32.mrb[0].mxu0
    %v683 = vadd.f32 0.0, %v682
    %v684 = vpop.f32.mrb[0].mxu0
    %685 = vmatprep.mubr.f32.mxu0 0.0
    %686 = vmatmul.mubr.f32.gmra.mrb[0].mxu0 %v614
    %v687 = vpop.f32.mrb[0].mxu0
    %v688 = vadd.f32 0.0, %v687
    %v689 = vpop.f32.mrb[0].mxu0
    %690 = vdwg.mxu0
    %693 = vrot.lane.b32.xlu0 %v683, 16
    %v694 = vpop.permute.xlu0 %693
    %695 = vrot.lane.b32.xlu0 %v688, 16
    %v696 = vpop.permute.xlu0 %695
    %v699 = vsel %vm202, %v436, %v694
    %v700 = vsel %vm202, %v441, %v696
    %v701 = vld [vmem:[%s7] sm:$0xff]
    %v702 = vld [vmem:[%s7 + $0x8] sm:$0xff]
    %v703 = vld [vmem:[%s7 + $0x10] sm:$0xff]
    %v704 = vld [vmem:[%s7 + $0x18] sm:$0xff]
    %vm705 = vcmask 261120
    %v707 = vsel %vm705, %v699, 0
    %v710 = vsel %vm705, %v700, 0
    %712 = vmatprep.subr.mxu0 0.0
    %713 = vmatpush1.msra.mxu0 %v701
    %714 = vmatprep.subr.mxu0 0.0
    %715 = vmatpush1.msra.mxu0 %v702
    %716 = vmatprep.subr.mxu0 0.0
    %717 = vmatpush1.msra.mxu0 %v703
    %718 = vmatprep.subr.mxu0 0.0
    %719 = vmatpush1.msra.mxu0 %v704
    %720 = vmatprep.subr.mxu0 0.0
    %721 = vmatpush1.msra.mxu0 0.0
    %722 = vmatprep.subr.mxu0 0.0
    %723 = vmatpush1.msra.mxu0 0.0
    %724 = vmatprep.subr.mxu0 0.0
    %725 = vmatpush1.msra.mxu0 0.0
    %726 = vmatprep.subr.mxu0 0.0
    %727 = vmatpush1.msra.mxu0 0.0
    %728 = vmatprep.subr.mxu0 0.0
    %729 = vmatpush1.msra.mxu0 0.0
    %730 = vmatprep.subr.mxu0 0.0
    %731 = vmatpush1.msra.mxu0 0.0
    %732 = vmatprep.subr.mxu0 0.0
    %733 = vmatpush1.msra.mxu0 0.0
    %734 = vmatprep.subr.mxu0 0.0
    %735 = vmatpush1.msra.mxu0 0.0
    %736 = vmatprep.subr.mxu0 0.0
    %737 = vmatpush1.msra.mxu0 0.0
    %738 = vmatprep.subr.mxu0 0.0
    %739 = vmatpush1.msra.mxu0 0.0
    %740 = vmatprep.subr.mxu0 0.0
    %741 = vmatpush1.msra.mxu0 0.0
    %742 = vmatprep.subr.mxu0 0.0
    %743 = vmatpush1.msra.mxu0 0.0
    %744 = vmatprep.subr.mxu0 0.0
    %745 = vmatpush1.msra.mxu0 0.0
    %746 = vmatprep.subr.mxu0 0.0
    %747 = vmatpush1.msra.mxu0 0.0
    %748 = vmatprep.subr.mxu0 0.0
    %749 = vmatpush1.msra.mxu0 0.0
    %750 = vmatprep.subr.mxu0 0.0
    %751 = vmatpush1.msra.mxu0 0.0
    %752 = vmatprep.subr.mxu0 0.0
    %753 = vmatpush1.msra.mxu0 0.0
    %754 = vmatprep.subr.mxu0 0.0
    %755 = vmatpush1.msra.mxu0 0.0
    %756 = vmatprep.subr.mxu0 0.0
    %757 = vmatpush1.msra.mxu0 0.0
    %758 = vmatprep.subr.mxu0 0.0
    %759 = vmatpush1.msra.mxu0 0.0
    %760 = vmatprep.subr.mxu0 0.0
    %761 = vmatpush1.msra.mxu0 0.0
    %762 = vmatprep.subr.mxu0 0.0
    %763 = vmatpush1.msra.mxu0 0.0
    %764 = vmatprep.subr.mxu0 0.0
    %765 = vmatpush1.msra.mxu0 0.0
    %766 = vmatprep.subr.mxu0 0.0
    %767 = vmatpush1.msra.mxu0 0.0
    %768 = vmatprep.subr.mxu0 0.0
    %769 = vmatpush1.msra.mxu0 0.0
    %770 = vmatprep.subr.mxu0 0.0
    %771 = vmatpush1.msra.mxu0 0.0
    %772 = vmatprep.subr.mxu0 0.0
    %773 = vmatpush1.msra.mxu0 0.0
    %774 = vmatprep.subr.mxu0 0.0
    %775 = vmatpush1.msra.mxu0 0.0
    %776 = vmatprep.mubr.f32.mxu0 0.0
    %777 = vmatmul.mubr.f32.gmra.mrb[0].mxu0 %v707
    %v778 = vpop.f32.mrb[0].mxu0
    %v779 = vadd.f32 0.0, %v778
    %v780 = vpop.f32.mrb[0].mxu0
    %781 = vmatprep.mubr.f32.mxu0 0.0
    %782 = vmatmul.mubr.f32.gmra.mrb[0].mxu0 %v710
    %v783 = vpop.f32.mrb[0].mxu0
    %v784 = vadd.f32 0.0, %v783
    %v785 = vpop.f32.mrb[0].mxu0
    %786 = vdwg.mxu0
    %v787 = vadd.f32 %v75, %v779
    %v788 = vadd.f32 %v76, %v784
    %791 = vrot.lane.b32.xlu0 %v478, 96
    %v792 = vpop.permute.xlu0 %791
    %793 = vrot.lane.b32.xlu0 %v479, 96
    %v794 = vpop.permute.xlu0 %793
    %v797 = vsel %vm202, %v238, %v792
    %v798 = vsel %vm202, %v240, %v794
    %v799 = vld [vmem:[%s8] sm:$0x1]
    %v800 = vmul.f32 %v787, %v787
    %v801 = vmul.f32 %v788, %v788
    %v802 = vsel %vm86, %v800, 0.0
    %803 = vadd.xlane.f32.xlu0 %v802
    %v804 = vpop.xlane.xlu0 %803
    %v805 = vsel %vm86, %v801, 0.0
    %806 = vadd.xlane.f32.xlu0 %v805
    %v807 = vpop.xlane.xlu0 %806
    %v808 = vmul.f32 %v804, %v93
    %v809 = vmul.f32 %v807, %v93
    %v810 = vadd.f32 %v808, 1e-08
    %v811 = vadd.f32 %v809, 1e-08
    %v812 = vrsqrt.pop %v810
    %v813 = vrsqrt.pop %v811
    %v814 = vmul.f32 %v787, %v812
    %v815 = vmul.f32 %v788, %v813
    %v817 = vlaneseq
    %v818 = vshrl.u32 %v817, 7
    %v819 = vsub.s32 0, %v818
    %v820 = vrot.slane %v799, %v819
    %v822 = vmul.f32 %v814, %v820
    %v823 = vmul.f32 %v815, %v820
    %v824 = vld [vmem:[%s9] sm:$0xff]
    %v825 = vld [vmem:[%s9 + $0x8] sm:$0xff]
    %v826 = vld [vmem:[%s9 + $0x10] sm:$0xff]
    %v827 = vld [vmem:[%s9 + $0x18] sm:$0xff]
    %v828 = vld [vmem:[%s9 + $0x20] sm:$0xff]
    %v829 = vld [vmem:[%s9 + $0x28] sm:$0xff]
    %v830 = vld [vmem:[%s9 + $0x30] sm:$0xff]
    %v831 = vld [vmem:[%s9 + $0x38] sm:$0xff]
    %v833 = vsel %vm86, %v822, 0
    %v836 = vsel %vm86, %v823, 0
    %838 = vmatprep.subr.mxu0 0.0
    %839 = vmatpush1.msra.mxu0 %v824
    %840 = vmatprep.subr.mxu0 0.0
    %841 = vmatpush1.msra.mxu0 %v825
    %842 = vmatprep.subr.mxu0 0.0
    %843 = vmatpush1.msra.mxu0 %v826
    %844 = vmatprep.subr.mxu0 0.0
    %845 = vmatpush1.msra.mxu0 %v827
    %846 = vmatprep.subr.mxu0 0.0
    %847 = vmatpush1.msra.mxu0 %v828
    %848 = vmatprep.subr.mxu0 0.0
    %849 = vmatpush1.msra.mxu0 %v829
    %850 = vmatprep.subr.mxu0 0.0
    %851 = vmatpush1.msra.mxu0 %v830
    %852 = vmatprep.subr.mxu0 0.0
    %853 = vmatpush1.msra.mxu0 %v831
    %854 = vmatprep.subr.mxu0 0.0
    %855 = vmatpush1.msra.mxu0 0.0
    %856 = vmatprep.subr.mxu0 0.0
    %857 = vmatpush1.msra.mxu0 0.0
    %858 = vmatprep.subr.mxu0 0.0
    %859 = vmatpush1.msra.mxu0 0.0
    %860 = vmatprep.subr.mxu0 0.0
    %861 = vmatpush1.msra.mxu0 0.0
    %862 = vmatprep.subr.mxu0 0.0
    %863 = vmatpush1.msra.mxu0 0.0
    %864 = vmatprep.subr.mxu0 0.0
    %865 = vmatpush1.msra.mxu0 0.0
    %866 = vmatprep.subr.mxu0 0.0
    %867 = vmatpush1.msra.mxu0 0.0
    %868 = vmatprep.subr.mxu0 0.0
    %869 = vmatpush1.msra.mxu0 0.0
    %870 = vmatprep.subr.mxu0 0.0
    %871 = vmatpush1.msra.mxu0 0.0
    %872 = vmatprep.subr.mxu0 0.0
    %873 = vmatpush1.msra.mxu0 0.0
    %874 = vmatprep.subr.mxu0 0.0
    %875 = vmatpush1.msra.mxu0 0.0
    %876 = vmatprep.subr.mxu0 0.0
    %877 = vmatpush1.msra.mxu0 0.0
    %878 = vmatprep.subr.mxu0 0.0
    %879 = vmatpush1.msra.mxu0 0.0
    %880 = vmatprep.subr.mxu0 0.0
    %881 = vmatpush1.msra.mxu0 0.0
    %882 = vmatprep.subr.mxu0 0.0
    %883 = vmatpush1.msra.mxu0 0.0
    %884 = vmatprep.subr.mxu0 0.0
    %885 = vmatpush1.msra.mxu0 0.0
    %886 = vmatprep.subr.mxu0 0.0
    %887 = vmatpush1.msra.mxu0 0.0
    %888 = vmatprep.subr.mxu0 0.0
    %889 = vmatpush1.msra.mxu0 0.0
    %890 = vmatprep.subr.mxu0 0.0
    %891 = vmatpush1.msra.mxu0 0.0
    %892 = vmatprep.subr.mxu0 0.0
    %893 = vmatpush1.msra.mxu0 0.0
    %894 = vmatprep.subr.mxu0 0.0
    %895 = vmatpush1.msra.mxu0 0.0
    %896 = vmatprep.subr.mxu0 0.0
    %897 = vmatpush1.msra.mxu0 0.0
    %898 = vmatprep.subr.mxu0 0.0
    %899 = vmatpush1.msra.mxu0 0.0
    %900 = vmatprep.subr.mxu0 0.0
    %901 = vmatpush1.msra.mxu0 0.0
    %902 = vmatprep.mubr.f32.mxu0 0.0
    %903 = vmatmul.mubr.f32.gmra.mrb[0].mxu0 %v833
    %v904 = vpop.f32.mrb[0].mxu0
    %v905 = vadd.f32 0.0, %v904
    %v906 = vpop.f32.mrb[0].mxu0
    %907 = vmatprep.mubr.f32.mxu0 0.0
    %908 = vmatmul.mubr.f32.gmra.mrb[0].mxu0 %v836
    %v909 = vpop.f32.mrb[0].mxu0
    %v910 = vadd.f32 0.0, %v909
    %v911 = vpop.f32.mrb[0].mxu0
    %912 = vdwg.mxu0
    %v913 = vld [vmem:[%s10] sm:$0xff]
    %v914 = vld [vmem:[%s10 + $0x8] sm:$0xff]
    %v915 = vld [vmem:[%s10 + $0x10] sm:$0xff]
    %v916 = vld [vmem:[%s10 + $0x18] sm:$0xff]
    %v917 = vld [vmem:[%s10 + $0x20] sm:$0xff]
    %v918 = vld [vmem:[%s10 + $0x28] sm:$0xff]
    %v919 = vld [vmem:[%s10 + $0x30] sm:$0xff]
    %v920 = vld [vmem:[%s10 + $0x38] sm:$0xff]
    %v922 = vsel %vm86, %v77, 0
    %v925 = vsel %vm86, %v78, 0
    %v928 = vsel %vm86, %v79, 0
    %v931 = vsel %vm86, %v80, 0
    %933 = vmatprep.subr.mxu0 0.0
    %934 = vmatpush1.msra.mxu0 %v913
    %935 = vmatprep.subr.mxu0 0.0
    %936 = vmatpush1.msra.mxu0 %v914
    %937 = vmatprep.subr.mxu0 0.0
    %938 = vmatpush1.msra.mxu0 %v915
    %939 = vmatprep.subr.mxu0 0.0
    %940 = vmatpush1.msra.mxu0 %v916
    %941 = vmatprep.subr.mxu0 0.0
    %942 = vmatpush1.msra.mxu0 %v917
    %943 = vmatprep.subr.mxu0 0.0
    %944 = vmatpush1.msra.mxu0 %v918
    %945 = vmatprep.subr.mxu0 0.0
    %946 = vmatpush1.msra.mxu0 %v919
    %947 = vmatprep.subr.mxu0 0.0
    %948 = vmatpush1.msra.mxu0 %v920
    %949 = vmatprep.subr.mxu0 0.0
    %950 = vmatpush1.msra.mxu0 0.0
    %951 = vmatprep.subr.mxu0 0.0
    %952 = vmatpush1.msra.mxu0 0.0
    %953 = vmatprep.subr.mxu0 0.0
    %954 = vmatpush1.msra.mxu0 0.0
    %955 = vmatprep.subr.mxu0 0.0
    %956 = vmatpush1.msra.mxu0 0.0
    %957 = vmatprep.subr.mxu0 0.0
    %958 = vmatpush1.msra.mxu0 0.0
    %959 = vmatprep.subr.mxu0 0.0
    %960 = vmatpush1.msra.mxu0 0.0
    %961 = vmatprep.subr.mxu0 0.0
    %962 = vmatpush1.msra.mxu0 0.0
    %963 = vmatprep.subr.mxu0 0.0
    %964 = vmatpush1.msra.mxu0 0.0
    %965 = vmatprep.subr.mxu0 0.0
    %966 = vmatpush1.msra.mxu0 0.0
    %967 = vmatprep.subr.mxu0 0.0
    %968 = vmatpush1.msra.mxu0 0.0
    %969 = vmatprep.subr.mxu0 0.0
    %970 = vmatpush1.msra.mxu0 0.0
    %971 = vmatprep.subr.mxu0 0.0
    %972 = vmatpush1.msra.mxu0 0.0
    %973 = vmatprep.subr.mxu0 0.0
    %974 = vmatpush1.msra.mxu0 0.0
    %975 = vmatprep.subr.mxu0 0.0
    %976 = vmatpush1.msra.mxu0 0.0
    %977 = vmatprep.subr.mxu0 0.0
    %978 = vmatpush1.msra.mxu0 0.0
    %979 = vmatprep.subr.mxu0 0.0
    %980 = vmatpush1.msra.mxu0 0.0
    %981 = vmatprep.subr.mxu0 0.0
    %982 = vmatpush1.msra.mxu0 0.0
    %983 = vmatprep.subr.mxu0 0.0
    %984 = vmatpush1.msra.mxu0 0.0
    %985 = vmatprep.subr.mxu0 0.0
    %986 = vmatpush1.msra.mxu0 0.0
    %987 = vmatprep.subr.mxu0 0.0
    %988 = vmatpush1.msra.mxu0 0.0
    %989 = vmatprep.subr.mxu0 0.0
    %990 = vmatpush1.msra.mxu0 0.0
    %991 = vmatprep.subr.mxu0 0.0
    %992 = vmatpush1.msra.mxu0 0.0
    %993 = vmatprep.subr.mxu0 0.0
    %994 = vmatpush1.msra.mxu0 0.0
    %995 = vmatprep.subr.mxu0 0.0
    %996 = vmatpush1.msra.mxu0 0.0
    %997 = vmatprep.mubr.f32.mxu0 0.0
    %998 = vmatmul.mubr.f32.gmra.mrb[0].mxu0 %v922
    %v999 = vpop.f32.mrb[0].mxu0
    %v1000 = vadd.f32 0.0, %v999
    %v1001 = vpop.f32.mrb[0].mxu0
    %1002 = vmatprep.mubr.f32.mxu0 0.0
    %1003 = vmatmul.mubr.f32.gmra.mrb[0].mxu0 %v925
    %v1004 = vpop.f32.mrb[0].mxu0
    %v1005 = vadd.f32 0.0, %v1004
    %v1006 = vpop.f32.mrb[0].mxu0
    %1007 = vmatprep.mubr.f32.mxu0 0.0
    %1008 = vmatmul.mubr.f32.gmra.mrb[0].mxu0 %v928
    %v1009 = vpop.f32.mrb[0].mxu0
    %v1010 = vadd.f32 0.0, %v1009
    %v1011 = vpop.f32.mrb[0].mxu0
    %1012 = vmatprep.mubr.f32.mxu0 0.0
    %1013 = vmatmul.mubr.f32.gmra.mrb[0].mxu0 %v931
    %v1014 = vpop.f32.mrb[0].mxu0
    %v1015 = vadd.f32 0.0, %v1014
    %v1016 = vpop.f32.mrb[0].mxu0
    %1017 = vdwg.mxu0
    %v1019 = vsel %vm202, %v905, 0
    %v1022 = vsel %vm202, %v910, 0
    %v1025 = vsel %vm202, %v1000, 0
    %v1028 = vsel %vm202, %v1005, 0
    %v1031 = vsel %vm202, %v1010, 0
    %v1034 = vsel %vm202, %v1015, 0
    %1036 = vmatprep.subr.mxu0 0.0
    %1037 = vmatpush1.xpose.msra.mxu0 %v1025
    %1038 = vmatprep.subr.mxu0 0.0
    %1039 = vmatpush1.xpose.msra.mxu0 %v1028
    %1040 = vmatprep.subr.mxu0 0.0
    %1041 = vmatpush1.xpose.msra.mxu0 %v1031
    %1042 = vmatprep.subr.mxu0 0.0
    %1043 = vmatpush1.xpose.msra.mxu0 %v1034
    %1044 = vmatprep.subr.mxu0 0.0
    %1045 = vmatpush1.xpose.msra.mxu0 0.0
    %1046 = vmatprep.subr.mxu0 0.0
    %1047 = vmatpush1.xpose.msra.mxu0 0.0
    %1048 = vmatprep.subr.mxu0 0.0
    %1049 = vmatpush1.xpose.msra.mxu0 0.0
    %1050 = vmatprep.subr.mxu0 0.0
    %1051 = vmatpush1.xpose.msra.mxu0 0.0
    %1052 = vmatprep.subr.mxu0 0.0
    %1053 = vmatpush1.xpose.msra.mxu0 0.0
    %1054 = vmatprep.subr.mxu0 0.0
    %1055 = vmatpush1.xpose.msra.mxu0 0.0
    %1056 = vmatprep.subr.mxu0 0.0
    %1057 = vmatpush1.xpose.msra.mxu0 0.0
    %1058 = vmatprep.subr.mxu0 0.0
    %1059 = vmatpush1.xpose.msra.mxu0 0.0
    %1060 = vmatprep.subr.mxu0 0.0
    %1061 = vmatpush1.xpose.msra.mxu0 0.0
    %1062 = vmatprep.subr.mxu0 0.0
    %1063 = vmatpush1.xpose.msra.mxu0 0.0
    %1064 = vmatprep.subr.mxu0 0.0
    %1065 = vmatpush1.xpose.msra.mxu0 0.0
    %1066 = vmatprep.subr.mxu0 0.0
    %1067 = vmatpush1.xpose.msra.mxu0 0.0
    %1068 = vmatprep.subr.mxu0 0.0
    %1069 = vmatpush1.xpose.msra.mxu0 0.0
    %1070 = vmatprep.subr.mxu0 0.0
    %1071 = vmatpush1.xpose.msra.mxu0 0.0
    %1072 = vmatprep.subr.mxu0 0.0
    %1073 = vmatpush1.xpose.msra.mxu0 0.0
    %1074 = vmatprep.subr.mxu0 0.0
    %1075 = vmatpush1.xpose.msra.mxu0 0.0
    %1076 = vmatprep.subr.mxu0 0.0
    %1077 = vmatpush1.xpose.msra.mxu0 0.0
    %1078 = vmatprep.subr.mxu0 0.0
    %1079 = vmatpush1.xpose.msra.mxu0 0.0
    %1080 = vmatprep.subr.mxu0 0.0
    %1081 = vmatpush1.xpose.msra.mxu0 0.0
    %1082 = vmatprep.subr.mxu0 0.0
    %1083 = vmatpush1.xpose.msra.mxu0 0.0
    %1084 = vmatprep.subr.mxu0 0.0
    %1085 = vmatpush1.xpose.msra.mxu0 0.0
    %1086 = vmatprep.subr.mxu0 0.0
    %1087 = vmatpush1.xpose.msra.mxu0 0.0
    %1088 = vmatprep.subr.mxu0 0.0
    %1089 = vmatpush1.xpose.msra.mxu0 0.0
    %1090 = vmatprep.subr.mxu0 0.0
    %1091 = vmatpush1.xpose.msra.mxu0 0.0
    %1092 = vmatprep.subr.mxu0 0.0
    %1093 = vmatpush1.xpose.msra.mxu0 0.0
    %1094 = vmatprep.subr.mxu0 0.0
    %1095 = vmatpush1.xpose.msra.mxu0 0.0
    %1096 = vmatprep.subr.mxu0 0.0
    %1097 = vmatpush1.xpose.msra.mxu0 0.0
    %1098 = vmatprep.subr.mxu0 0.0
    %1099 = vmatpush1.xpose.msra.mxu0 0.0
    %1100 = vmatprep.mubr.f32.mxu0 0.0
    %1101 = vmatmul.mubr.f32.gmra.mrb[0].mxu0 %v1019
    %v1102 = vpop.f32.mrb[0].mxu0
    %v1103 = vadd.f32 0.0, %v1102
    %v1104 = vpop.f32.mrb[0].mxu0
    %1105 = vmatprep.mubr.f32.mxu0 0.0
    %1106 = vmatmul.mubr.f32.gmra.mrb[0].mxu0 %v1022
    %v1107 = vpop.f32.mrb[0].mxu0
    %v1108 = vadd.f32 0.0, %v1107
    %v1109 = vpop.f32.mrb[0].mxu0
    %1110 = vdwg.mxu0
    %v1111 = vmul.f32 %v1103, 0.25
    %v1112 = vmul.f32 %v1108, 0.25
    %v1113 = vadd.f32 %v1111, %v81
    %v1114 = vadd.f32 %v1112, %v82
    %v1115 = vsel %vm705, %v1113, -inf
    %1116 = vmax.xlane.f32.xlu0 %v1115
    %v1117 = vpop.xlane.xlu0 %1116
    %v1118 = vsel %vm705, %v1114, -inf
    %1119 = vmax.xlane.f32.xlu0 %v1118
    %v1120 = vpop.xlane.xlu0 %1119
    %v1121 = vsub.f32 %v1113, %v1117
    %v1122 = vsub.f32 %v1114, %v1120
    %v1123 = vmul.f32 %v1121, 1.442695
    %v1124 = vpow.pop %v1123
    %v1125 = vmul.f32 %v1122, 1.442695
    %v1126 = vpow.pop %v1125
    %v1127 = vsel %vm705, %v1124, 0.0
    %1128 = vadd.xlane.f32.xlu0 %v1127
    %v1129 = vpop.xlane.xlu0 %1128
    %v1130 = vsel %vm705, %v1126, 0.0
    %1131 = vadd.xlane.f32.xlu0 %v1130
    %v1132 = vpop.xlane.xlu0 %1131
    %v1133 = vrcp.pop %v1129
    %v1134 = vrcp.pop %v1132
    %v1135 = vmul.f32 %v1124, %v1133
    %v1136 = vmul.f32 %v1126, %v1134
    %1137 = vrot.lane.b32.xlu0 %v1000, 96
    %v1138 = vpop.permute.xlu0 %1137
    %1139 = vrot.lane.b32.xlu0 %v1005, 96
    %v1140 = vpop.permute.xlu0 %1139
    %1141 = vrot.lane.b32.xlu0 %v1010, 96
    %v1142 = vpop.permute.xlu0 %1141
    %1143 = vrot.lane.b32.xlu0 %v1015, 96
    %v1144 = vpop.permute.xlu0 %1143
    %v1150 = vsel %vm705, %v1135, 0
    %v1153 = vsel %vm705, %v1136, 0
    %1155 = vmatprep.subr.mxu0 0.0
    %1156 = vmatpush1.msra.mxu0 %v1138
    %1157 = vmatprep.subr.mxu0 0.0
    %1158 = vmatpush1.msra.mxu0 %v1140
    %1159 = vmatprep.subr.mxu0 0.0
    %1160 = vmatpush1.msra.mxu0 %v1142
    %1161 = vmatprep.subr.mxu0 0.0
    %1162 = vmatpush1.msra.mxu0 %v1144
    %1163 = vmatprep.subr.mxu0 0.0
    %1164 = vmatpush1.msra.mxu0 0.0
    %1165 = vmatprep.subr.mxu0 0.0
    %1166 = vmatpush1.msra.mxu0 0.0
    %1167 = vmatprep.subr.mxu0 0.0
    %1168 = vmatpush1.msra.mxu0 0.0
    %1169 = vmatprep.subr.mxu0 0.0
    %1170 = vmatpush1.msra.mxu0 0.0
    %1171 = vmatprep.subr.mxu0 0.0
    %1172 = vmatpush1.msra.mxu0 0.0
    %1173 = vmatprep.subr.mxu0 0.0
    %1174 = vmatpush1.msra.mxu0 0.0
    %1175 = vmatprep.subr.mxu0 0.0
    %1176 = vmatpush1.msra.mxu0 0.0
    %1177 = vmatprep.subr.mxu0 0.0
    %1178 = vmatpush1.msra.mxu0 0.0
    %1179 = vmatprep.subr.mxu0 0.0
    %1180 = vmatpush1.msra.mxu0 0.0
    %1181 = vmatprep.subr.mxu0 0.0
    %1182 = vmatpush1.msra.mxu0 0.0
    %1183 = vmatprep.subr.mxu0 0.0
    %1184 = vmatpush1.msra.mxu0 0.0
    %1185 = vmatprep.subr.mxu0 0.0
    %1186 = vmatpush1.msra.mxu0 0.0
    %1187 = vmatprep.subr.mxu0 0.0
    %1188 = vmatpush1.msra.mxu0 0.0
    %1189 = vmatprep.subr.mxu0 0.0
    %1190 = vmatpush1.msra.mxu0 0.0
    %1191 = vmatprep.subr.mxu0 0.0
    %1192 = vmatpush1.msra.mxu0 0.0
    %1193 = vmatprep.subr.mxu0 0.0
    %1194 = vmatpush1.msra.mxu0 0.0
    %1195 = vmatprep.subr.mxu0 0.0
    %1196 = vmatpush1.msra.mxu0 0.0
    %1197 = vmatprep.subr.mxu0 0.0
    %1198 = vmatpush1.msra.mxu0 0.0
    %1199 = vmatprep.subr.mxu0 0.0
    %1200 = vmatpush1.msra.mxu0 0.0
    %1201 = vmatprep.subr.mxu0 0.0
    %1202 = vmatpush1.msra.mxu0 0.0
    %1203 = vmatprep.subr.mxu0 0.0
    %1204 = vmatpush1.msra.mxu0 0.0
    %1205 = vmatprep.subr.mxu0 0.0
    %1206 = vmatpush1.msra.mxu0 0.0
    %1207 = vmatprep.subr.mxu0 0.0
    %1208 = vmatpush1.msra.mxu0 0.0
    %1209 = vmatprep.subr.mxu0 0.0
    %1210 = vmatpush1.msra.mxu0 0.0
    %1211 = vmatprep.subr.mxu0 0.0
    %1212 = vmatpush1.msra.mxu0 0.0
    %1213 = vmatprep.subr.mxu0 0.0
    %1214 = vmatpush1.msra.mxu0 0.0
    %1215 = vmatprep.subr.mxu0 0.0
    %1216 = vmatpush1.msra.mxu0 0.0
    %1217 = vmatprep.subr.mxu0 0.0
    %1218 = vmatpush1.msra.mxu0 0.0
    %1219 = vmatprep.mubr.f32.mxu0 0.0
    %1220 = vmatmul.mubr.f32.gmra.mrb[0].mxu0 %v1150
    %v1221 = vpop.f32.mrb[0].mxu0
    %v1222 = vadd.f32 0.0, %v1221
    %v1223 = vpop.f32.mrb[0].mxu0
    %1224 = vmatprep.mubr.f32.mxu0 0.0
    %1225 = vmatmul.mubr.f32.gmra.mrb[0].mxu0 %v1153
    %v1226 = vpop.f32.mrb[0].mxu0
    %v1227 = vadd.f32 0.0, %v1226
    %v1228 = vpop.f32.mrb[0].mxu0
    %1229 = vdwg.mxu0
    %1230 = vrot.lane.b32.xlu0 %v905, 112
    %v1231 = vpop.permute.xlu0 %1230
    %1232 = vrot.lane.b32.xlu0 %v910, 112
    %v1233 = vpop.permute.xlu0 %1232
    %1234 = vrot.lane.b32.xlu0 %v1000, 112
    %v1235 = vpop.permute.xlu0 %1234
    %1236 = vrot.lane.b32.xlu0 %v1005, 112
    %v1237 = vpop.permute.xlu0 %1236
    %1238 = vrot.lane.b32.xlu0 %v1010, 112
    %v1239 = vpop.permute.xlu0 %1238
    %1240 = vrot.lane.b32.xlu0 %v1015, 112
    %v1241 = vpop.permute.xlu0 %1240
    %v1242 = vsel %vm202, %v1231, 0
    %v1244 = vsel %vm202, %v1233, 0
    %v1246 = vsel %vm202, %v1235, 0
    %v1248 = vsel %vm202, %v1237, 0
    %v1250 = vsel %vm202, %v1239, 0
    %v1252 = vsel %vm202, %v1241, 0
    %1254 = vmatprep.subr.mxu0 0.0
    %1255 = vmatpush1.xpose.msra.mxu0 %v1246
    %1256 = vmatprep.subr.mxu0 0.0
    %1257 = vmatpush1.xpose.msra.mxu0 %v1248
    %1258 = vmatprep.subr.mxu0 0.0
    %1259 = vmatpush1.xpose.msra.mxu0 %v1250
    %1260 = vmatprep.subr.mxu0 0.0
    %1261 = vmatpush1.xpose.msra.mxu0 %v1252
    %1262 = vmatprep.subr.mxu0 0.0
    %1263 = vmatpush1.xpose.msra.mxu0 0.0
    %1264 = vmatprep.subr.mxu0 0.0
    %1265 = vmatpush1.xpose.msra.mxu0 0.0
    %1266 = vmatprep.subr.mxu0 0.0
    %1267 = vmatpush1.xpose.msra.mxu0 0.0
    %1268 = vmatprep.subr.mxu0 0.0
    %1269 = vmatpush1.xpose.msra.mxu0 0.0
    %1270 = vmatprep.subr.mxu0 0.0
    %1271 = vmatpush1.xpose.msra.mxu0 0.0
    %1272 = vmatprep.subr.mxu0 0.0
    %1273 = vmatpush1.xpose.msra.mxu0 0.0
    %1274 = vmatprep.subr.mxu0 0.0
    %1275 = vmatpush1.xpose.msra.mxu0 0.0
    %1276 = vmatprep.subr.mxu0 0.0
    %1277 = vmatpush1.xpose.msra.mxu0 0.0
    %1278 = vmatprep.subr.mxu0 0.0
    %1279 = vmatpush1.xpose.msra.mxu0 0.0
    %1280 = vmatprep.subr.mxu0 0.0
    %1281 = vmatpush1.xpose.msra.mxu0 0.0
    %1282 = vmatprep.subr.mxu0 0.0
    %1283 = vmatpush1.xpose.msra.mxu0 0.0
    %1284 = vmatprep.subr.mxu0 0.0
    %1285 = vmatpush1.xpose.msra.mxu0 0.0
    %1286 = vmatprep.subr.mxu0 0.0
    %1287 = vmatpush1.xpose.msra.mxu0 0.0
    %1288 = vmatprep.subr.mxu0 0.0
    %1289 = vmatpush1.xpose.msra.mxu0 0.0
    %1290 = vmatprep.subr.mxu0 0.0
    %1291 = vmatpush1.xpose.msra.mxu0 0.0
    %1292 = vmatprep.subr.mxu0 0.0
    %1293 = vmatpush1.xpose.msra.mxu0 0.0
    %1294 = vmatprep.subr.mxu0 0.0
    %1295 = vmatpush1.xpose.msra.mxu0 0.0
    %1296 = vmatprep.subr.mxu0 0.0
    %1297 = vmatpush1.xpose.msra.mxu0 0.0
    %1298 = vmatprep.subr.mxu0 0.0
    %1299 = vmatpush1.xpose.msra.mxu0 0.0
    %1300 = vmatprep.subr.mxu0 0.0
    %1301 = vmatpush1.xpose.msra.mxu0 0.0
    %1302 = vmatprep.subr.mxu0 0.0
    %1303 = vmatpush1.xpose.msra.mxu0 0.0
    %1304 = vmatprep.subr.mxu0 0.0
    %1305 = vmatpush1.xpose.msra.mxu0 0.0
    %1306 = vmatprep.subr.mxu0 0.0
    %1307 = vmatpush1.xpose.msra.mxu0 0.0
    %1308 = vmatprep.subr.mxu0 0.0
    %1309 = vmatpush1.xpose.msra.mxu0 0.0
    %1310 = vmatprep.subr.mxu0 0.0
    %1311 = vmatpush1.xpose.msra.mxu0 0.0
    %1312 = vmatprep.subr.mxu0 0.0
    %1313 = vmatpush1.xpose.msra.mxu0 0.0
    %1314 = vmatprep.subr.mxu0 0.0
    %1315 = vmatpush1.xpose.msra.mxu0 0.0
    %1316 = vmatprep.subr.mxu0 0.0
    %1317 = vmatpush1.xpose.msra.mxu0 0.0
    %1318 = vmatprep.mubr.f32.mxu0 0.0
    %1319 = vmatmul.mubr.f32.gmra.mrb[0].mxu0 %v1242
    %v1320 = vpop.f32.mrb[0].mxu0
    %v1321 = vadd.f32 0.0, %v1320
    %v1322 = vpop.f32.mrb[0].mxu0
    %1323 = vmatprep.mubr.f32.mxu0 0.0
    %1324 = vmatmul.mubr.f32.gmra.mrb[0].mxu0 %v1244
    %v1325 = vpop.f32.mrb[0].mxu0
    %v1326 = vadd.f32 0.0, %v1325
    %v1327 = vpop.f32.mrb[0].mxu0
    %1328 = vdwg.mxu0
    %v1329 = vmul.f32 %v1321, 0.25
    %v1330 = vmul.f32 %v1326, 0.25
    %v1331 = vadd.f32 %v1329, %v81
    %v1332 = vadd.f32 %v1330, %v82
    %v1333 = vsel %vm705, %v1331, -inf
    %1334 = vmax.xlane.f32.xlu0 %v1333
    %v1335 = vpop.xlane.xlu0 %1334
    %v1336 = vsel %vm705, %v1332, -inf
    %1337 = vmax.xlane.f32.xlu0 %v1336
    %v1338 = vpop.xlane.xlu0 %1337
    %v1339 = vsub.f32 %v1331, %v1335
    %v1340 = vsub.f32 %v1332, %v1338
    %v1341 = vmul.f32 %v1339, 1.442695
    %v1342 = vpow.pop %v1341
    %v1343 = vmul.f32 %v1340, 1.442695
    %v1344 = vpow.pop %v1343
    %v1345 = vsel %vm705, %v1342, 0.0
    %1346 = vadd.xlane.f32.xlu0 %v1345
    %v1347 = vpop.xlane.xlu0 %1346
    %v1348 = vsel %vm705, %v1344, 0.0
    %1349 = vadd.xlane.f32.xlu0 %v1348
    %v1350 = vpop.xlane.xlu0 %1349
    %v1351 = vrcp.pop %v1347
    %v1352 = vrcp.pop %v1350
    %v1353 = vmul.f32 %v1342, %v1351
    %v1354 = vmul.f32 %v1344, %v1352
    %1355 = vrot.lane.b32.xlu0 %v1000, 80
    %v1356 = vpop.permute.xlu0 %1355
    %1357 = vrot.lane.b32.xlu0 %v1005, 80
    %v1358 = vpop.permute.xlu0 %1357
    %1359 = vrot.lane.b32.xlu0 %v1010, 80
    %v1360 = vpop.permute.xlu0 %1359
    %1361 = vrot.lane.b32.xlu0 %v1015, 80
    %v1362 = vpop.permute.xlu0 %1361
    %v1368 = vsel %vm705, %v1353, 0
    %v1371 = vsel %vm705, %v1354, 0
    %1373 = vmatprep.subr.mxu0 0.0
    %1374 = vmatpush1.msra.mxu0 %v1356
    %1375 = vmatprep.subr.mxu0 0.0
    %1376 = vmatpush1.msra.mxu0 %v1358
    %1377 = vmatprep.subr.mxu0 0.0
    %1378 = vmatpush1.msra.mxu0 %v1360
    %1379 = vmatprep.subr.mxu0 0.0
    %1380 = vmatpush1.msra.mxu0 %v1362
    %1381 = vmatprep.subr.mxu0 0.0
    %1382 = vmatpush1.msra.mxu0 0.0
    %1383 = vmatprep.subr.mxu0 0.0
    %1384 = vmatpush1.msra.mxu0 0.0
    %1385 = vmatprep.subr.mxu0 0.0
    %1386 = vmatpush1.msra.mxu0 0.0
    %1387 = vmatprep.subr.mxu0 0.0
    %1388 = vmatpush1.msra.mxu0 0.0
    %1389 = vmatprep.subr.mxu0 0.0
    %1390 = vmatpush1.msra.mxu0 0.0
    %1391 = vmatprep.subr.mxu0 0.0
    %1392 = vmatpush1.msra.mxu0 0.0
    %1393 = vmatprep.subr.mxu0 0.0
    %1394 = vmatpush1.msra.mxu0 0.0
    %1395 = vmatprep.subr.mxu0 0.0
    %1396 = vmatpush1.msra.mxu0 0.0
    %1397 = vmatprep.subr.mxu0 0.0
    %1398 = vmatpush1.msra.mxu0 0.0
    %1399 = vmatprep.subr.mxu0 0.0
    %1400 = vmatpush1.msra.mxu0 0.0
    %1401 = vmatprep.subr.mxu0 0.0
    %1402 = vmatpush1.msra.mxu0 0.0
    %1403 = vmatprep.subr.mxu0 0.0
    %1404 = vmatpush1.msra.mxu0 0.0
    %1405 = vmatprep.subr.mxu0 0.0
    %1406 = vmatpush1.msra.mxu0 0.0
    %1407 = vmatprep.subr.mxu0 0.0
    %1408 = vmatpush1.msra.mxu0 0.0
    %1409 = vmatprep.subr.mxu0 0.0
    %1410 = vmatpush1.msra.mxu0 0.0
    %1411 = vmatprep.subr.mxu0 0.0
    %1412 = vmatpush1.msra.mxu0 0.0
    %1413 = vmatprep.subr.mxu0 0.0
    %1414 = vmatpush1.msra.mxu0 0.0
    %1415 = vmatprep.subr.mxu0 0.0
    %1416 = vmatpush1.msra.mxu0 0.0
    %1417 = vmatprep.subr.mxu0 0.0
    %1418 = vmatpush1.msra.mxu0 0.0
    %1419 = vmatprep.subr.mxu0 0.0
    %1420 = vmatpush1.msra.mxu0 0.0
    %1421 = vmatprep.subr.mxu0 0.0
    %1422 = vmatpush1.msra.mxu0 0.0
    %1423 = vmatprep.subr.mxu0 0.0
    %1424 = vmatpush1.msra.mxu0 0.0
    %1425 = vmatprep.subr.mxu0 0.0
    %1426 = vmatpush1.msra.mxu0 0.0
    %1427 = vmatprep.subr.mxu0 0.0
    %1428 = vmatpush1.msra.mxu0 0.0
    %1429 = vmatprep.subr.mxu0 0.0
    %1430 = vmatpush1.msra.mxu0 0.0
    %1431 = vmatprep.subr.mxu0 0.0
    %1432 = vmatpush1.msra.mxu0 0.0
    %1433 = vmatprep.subr.mxu0 0.0
    %1434 = vmatpush1.msra.mxu0 0.0
    %1435 = vmatprep.subr.mxu0 0.0
    %1436 = vmatpush1.msra.mxu0 0.0
    %1437 = vmatprep.mubr.f32.mxu0 0.0
    %1438 = vmatmul.mubr.f32.gmra.mrb[0].mxu0 %v1368
    %v1439 = vpop.f32.mrb[0].mxu0
    %v1440 = vadd.f32 0.0, %v1439
    %v1441 = vpop.f32.mrb[0].mxu0
    %1442 = vmatprep.mubr.f32.mxu0 0.0
    %1443 = vmatmul.mubr.f32.gmra.mrb[0].mxu0 %v1371
    %v1444 = vpop.f32.mrb[0].mxu0
    %v1445 = vadd.f32 0.0, %v1444
    %v1446 = vpop.f32.mrb[0].mxu0
    %1447 = vdwg.mxu0
    %1450 = vrot.lane.b32.xlu0 %v1440, 16
    %v1451 = vpop.permute.xlu0 %1450
    %1452 = vrot.lane.b32.xlu0 %v1445, 16
    %v1453 = vpop.permute.xlu0 %1452
    %v1456 = vsel %vm202, %v1222, %v1451
    %v1457 = vsel %vm202, %v1227, %v1453
    %v1458 = vld [vmem:[%s11] sm:$0xff]
    %v1459 = vld [vmem:[%s11 + $0x8] sm:$0xff]
    %v1460 = vld [vmem:[%s11 + $0x10] sm:$0xff]
    %v1461 = vld [vmem:[%s11 + $0x18] sm:$0xff]
    %v1463 = vsel %vm705, %v1456, 0
    %v1466 = vsel %vm705, %v1457, 0
    %1468 = vmatprep.subr.mxu0 0.0
    %1469 = vmatpush1.msra.mxu0 %v1458
    %1470 = vmatprep.subr.mxu0 0.0
    %1471 = vmatpush1.msra.mxu0 %v1459
    %1472 = vmatprep.subr.mxu0 0.0
    %1473 = vmatpush1.msra.mxu0 %v1460
    %1474 = vmatprep.subr.mxu0 0.0
    %1475 = vmatpush1.msra.mxu0 %v1461
    %1476 = vmatprep.subr.mxu0 0.0
    %1477 = vmatpush1.msra.mxu0 0.0
    %1478 = vmatprep.subr.mxu0 0.0
    %1479 = vmatpush1.msra.mxu0 0.0
    %1480 = vmatprep.subr.mxu0 0.0
    %1481 = vmatpush1.msra.mxu0 0.0
    %1482 = vmatprep.subr.mxu0 0.0
    %1483 = vmatpush1.msra.mxu0 0.0
    %1484 = vmatprep.subr.mxu0 0.0
    %1485 = vmatpush1.msra.mxu0 0.0
    %1486 = vmatprep.subr.mxu0 0.0
    %1487 = vmatpush1.msra.mxu0 0.0
    %1488 = vmatprep.subr.mxu0 0.0
    %1489 = vmatpush1.msra.mxu0 0.0
    %1490 = vmatprep.subr.mxu0 0.0
    %1491 = vmatpush1.msra.mxu0 0.0
    %1492 = vmatprep.subr.mxu0 0.0
    %1493 = vmatpush1.msra.mxu0 0.0
    %1494 = vmatprep.subr.mxu0 0.0
    %1495 = vmatpush1.msra.mxu0 0.0
    %1496 = vmatprep.subr.mxu0 0.0
    %1497 = vmatpush1.msra.mxu0 0.0
    %1498 = vmatprep.subr.mxu0 0.0
    %1499 = vmatpush1.msra.mxu0 0.0
    %1500 = vmatprep.subr.mxu0 0.0
    %1501 = vmatpush1.msra.mxu0 0.0
    %1502 = vmatprep.subr.mxu0 0.0
    %1503 = vmatpush1.msra.mxu0 0.0
    %1504 = vmatprep.subr.mxu0 0.0
    %1505 = vmatpush1.msra.mxu0 0.0
    %1506 = vmatprep.subr.mxu0 0.0
    %1507 = vmatpush1.msra.mxu0 0.0
    %1508 = vmatprep.subr.mxu0 0.0
    %1509 = vmatpush1.msra.mxu0 0.0
    %1510 = vmatprep.subr.mxu0 0.0
    %1511 = vmatpush1.msra.mxu0 0.0
    %1512 = vmatprep.subr.mxu0 0.0
    %1513 = vmatpush1.msra.mxu0 0.0
    %1514 = vmatprep.subr.mxu0 0.0
    %1515 = vmatpush1.msra.mxu0 0.0
    %1516 = vmatprep.subr.mxu0 0.0
    %1517 = vmatpush1.msra.mxu0 0.0
    %1518 = vmatprep.subr.mxu0 0.0
    %1519 = vmatpush1.msra.mxu0 0.0
    %1520 = vmatprep.subr.mxu0 0.0
    %1521 = vmatpush1.msra.mxu0 0.0
    %1522 = vmatprep.subr.mxu0 0.0
    %1523 = vmatpush1.msra.mxu0 0.0
    %1524 = vmatprep.subr.mxu0 0.0
    %1525 = vmatpush1.msra.mxu0 0.0
    %1526 = vmatprep.subr.mxu0 0.0
    %1527 = vmatpush1.msra.mxu0 0.0
    %1528 = vmatprep.subr.mxu0 0.0
    %1529 = vmatpush1.msra.mxu0 0.0
    %1530 = vmatprep.subr.mxu0 0.0
    %1531 = vmatpush1.msra.mxu0 0.0
    %1532 = vmatprep.mubr.f32.mxu0 0.0
    %1533 = vmatmul.mubr.f32.gmra.mrb[0].mxu0 %v1463
    %v1534 = vpop.f32.mrb[0].mxu0
    %v1535 = vadd.f32 0.0, %v1534
    %v1536 = vpop.f32.mrb[0].mxu0
    %1537 = vmatprep.mubr.f32.mxu0 0.0
    %1538 = vmatmul.mubr.f32.gmra.mrb[0].mxu0 %v1466
    %v1539 = vpop.f32.mrb[0].mxu0
    %v1540 = vadd.f32 0.0, %v1539
    %v1541 = vpop.f32.mrb[0].mxu0
    %1542 = vdwg.mxu0
    %v1543 = vadd.f32 %v787, %v1535
    %v1544 = vadd.f32 %v788, %v1540
    %v1545 = vld [vmem:[%s12] sm:$0x1]
    %v1546 = vmul.f32 %v1543, %v1543
    %v1547 = vmul.f32 %v1544, %v1544
    %v1548 = vsel %vm86, %v1546, 0.0
    %1549 = vadd.xlane.f32.xlu0 %v1548
    %v1550 = vpop.xlane.xlu0 %1549
    %v1551 = vsel %vm86, %v1547, 0.0
    %1552 = vadd.xlane.f32.xlu0 %v1551
    %v1553 = vpop.xlane.xlu0 %1552
    %v1554 = vmul.f32 %v1550, %v93
    %v1555 = vmul.f32 %v1553, %v93
    %v1556 = vadd.f32 %v1554, 1e-08
    %v1557 = vadd.f32 %v1555, 1e-08
    %v1558 = vrsqrt.pop %v1556
    %v1559 = vrsqrt.pop %v1557
    %v1560 = vmul.f32 %v1543, %v1558
    %v1561 = vmul.f32 %v1544, %v1559
    %v1563 = vlaneseq
    %v1564 = vshrl.u32 %v1563, 7
    %v1565 = vsub.s32 0, %v1564
    %v1566 = vrot.slane %v1545, %v1565
    %v1568 = vmul.f32 %v1560, %v1566
    %v1569 = vmul.f32 %v1561, %v1566
    %v1570 = vld [vmem:[%s13] sm:$0xff]
    %v1571 = vld [vmem:[%s13 + $0x8] sm:$0xff]
    %v1572 = vld [vmem:[%s13 + $0x10] sm:$0xff]
    %v1573 = vld [vmem:[%s13 + $0x18] sm:$0xff]
    %v1574 = vld [vmem:[%s13 + $0x20] sm:$0xff]
    %v1575 = vld [vmem:[%s13 + $0x28] sm:$0xff]
    %v1576 = vld [vmem:[%s13 + $0x30] sm:$0xff]
    %v1577 = vld [vmem:[%s13 + $0x38] sm:$0xff]
    %v1578 = vld [vmem:[%s13 + $0x40] sm:$0xff]
    %v1579 = vld [vmem:[%s13 + $0x48] sm:$0xff]
    %v1580 = vld [vmem:[%s13 + $0x50] sm:$0xff]
    %v1581 = vld [vmem:[%s13 + $0x58] sm:$0xff]
    %v1582 = vld [vmem:[%s13 + $0x60] sm:$0xff]
    %v1583 = vld [vmem:[%s13 + $0x68] sm:$0xff]
    %v1584 = vld [vmem:[%s13 + $0x70] sm:$0xff]
    %v1585 = vld [vmem:[%s13 + $0x78] sm:$0xff]
    %v1587 = vsel %vm86, %v1568, 0
    %v1590 = vsel %vm86, %v1569, 0
    %1592 = vmatprep.subr.mxu0 %v1571
    %1593 = vmatpush1.msra.mxu0 %v1570
    %1594 = vmatprep.subr.mxu0 %v1573
    %1595 = vmatpush1.msra.mxu0 %v1572
    %1596 = vmatprep.subr.mxu0 %v1575
    %1597 = vmatpush1.msra.mxu0 %v1574
    %1598 = vmatprep.subr.mxu0 %v1577
    %1599 = vmatpush1.msra.mxu0 %v1576
    %1600 = vmatprep.subr.mxu0 %v1579
    %1601 = vmatpush1.msra.mxu0 %v1578
    %1602 = vmatprep.subr.mxu0 %v1581
    %1603 = vmatpush1.msra.mxu0 %v1580
    %1604 = vmatprep.subr.mxu0 %v1583
    %1605 = vmatpush1.msra.mxu0 %v1582
    %1606 = vmatprep.subr.mxu0 %v1585
    %1607 = vmatpush1.msra.mxu0 %v1584
    %1608 = vmatprep.subr.mxu0 0.0
    %1609 = vmatpush1.msra.mxu0 0.0
    %1610 = vmatprep.subr.mxu0 0.0
    %1611 = vmatpush1.msra.mxu0 0.0
    %1612 = vmatprep.subr.mxu0 0.0
    %1613 = vmatpush1.msra.mxu0 0.0
    %1614 = vmatprep.subr.mxu0 0.0
    %1615 = vmatpush1.msra.mxu0 0.0
    %1616 = vmatprep.subr.mxu0 0.0
    %1617 = vmatpush1.msra.mxu0 0.0
    %1618 = vmatprep.subr.mxu0 0.0
    %1619 = vmatpush1.msra.mxu0 0.0
    %1620 = vmatprep.subr.mxu0 0.0
    %1621 = vmatpush1.msra.mxu0 0.0
    %1622 = vmatprep.subr.mxu0 0.0
    %1623 = vmatpush1.msra.mxu0 0.0
    %1624 = vmatprep.subr.mxu0 0.0
    %1625 = vmatpush1.msra.mxu0 0.0
    %1626 = vmatprep.subr.mxu0 0.0
    %1627 = vmatpush1.msra.mxu0 0.0
    %1628 = vmatprep.subr.mxu0 0.0
    %1629 = vmatpush1.msra.mxu0 0.0
    %1630 = vmatprep.subr.mxu0 0.0
    %1631 = vmatpush1.msra.mxu0 0.0
    %1632 = vmatprep.subr.mxu0 0.0
    %1633 = vmatpush1.msra.mxu0 0.0
    %1634 = vmatprep.subr.mxu0 0.0
    %1635 = vmatpush1.msra.mxu0 0.0
    %1636 = vmatprep.subr.mxu0 0.0
    %1637 = vmatpush1.msra.mxu0 0.0
    %1638 = vmatprep.subr.mxu0 0.0
    %1639 = vmatpush1.msra.mxu0 0.0
    %1640 = vmatprep.subr.mxu0 0.0
    %1641 = vmatpush1.msra.mxu0 0.0
    %1642 = vmatprep.subr.mxu0 0.0
    %1643 = vmatpush1.msra.mxu0 0.0
    %1644 = vmatprep.subr.mxu0 0.0
    %1645 = vmatpush1.msra.mxu0 0.0
    %1646 = vmatprep.subr.mxu0 0.0
    %1647 = vmatpush1.msra.mxu0 0.0
    %1648 = vmatprep.subr.mxu0 0.0
    %1649 = vmatpush1.msra.mxu0 0.0
    %1650 = vmatprep.subr.mxu0 0.0
    %1651 = vmatpush1.msra.mxu0 0.0
    %1652 = vmatprep.subr.mxu0 0.0
    %1653 = vmatpush1.msra.mxu0 0.0
    %1654 = vmatprep.subr.mxu0 0.0
    %1655 = vmatpush1.msra.mxu0 0.0
    %1656 = vmatprep.mubr.f32.mxu0 0.0
    %1657 = vmatmul.mubr.f32.gmra.mrb[0].mxu0 %v1587
    %v1658 = vpop.f32.mrb[0].mxu0
    %v1659 = vadd.f32 0.0, %v1658
    %v1660 = vpop.f32.mrb[0].mxu0
    %v1661 = vadd.f32 0.0, %v1660
    %1662 = vmatprep.mubr.f32.mxu0 0.0
    %1663 = vmatmul.mubr.f32.gmra.mrb[0].mxu0 %v1590
    %v1664 = vpop.f32.mrb[0].mxu0
    %v1665 = vadd.f32 0.0, %v1664
    %v1666 = vpop.f32.mrb[0].mxu0
    %v1667 = vadd.f32 0.0, %v1666
    %1668 = vdwg.mxu0
    %v1669 = vmul.f32 %v1659, %v1659
    %v1670 = vmul.f32 %v1661, %v1661
    %v1671 = vmul.f32 %v1665, %v1665
    %v1672 = vmul.f32 %v1667, %v1667
    %v1673 = vmul.f32 %v1659, %v1669
    %v1674 = vmul.f32 %v1661, %v1670
    %v1675 = vmul.f32 %v1665, %v1671
    %v1676 = vmul.f32 %v1667, %v1672
    %v1677 = vmul.f32 %v1673, 0.044715
    %v1678 = vmul.f32 %v1674, 0.044715
    %v1679 = vmul.f32 %v1675, 0.044715
    %v1680 = vmul.f32 %v1676, 0.044715
    %v1681 = vadd.f32 %v1659, %v1677
    %v1682 = vadd.f32 %v1661, %v1678
    %v1683 = vadd.f32 %v1665, %v1679
    %v1684 = vadd.f32 %v1667, %v1680
    %v1685 = vmul.f32 %v1681, 0.7978846
    %v1686 = vmul.f32 %v1682, 0.7978846
    %v1687 = vmul.f32 %v1683, 0.7978846
    %v1688 = vmul.f32 %v1684, 0.7978846
    %v1689 = vtanh.pop %v1685
    %v1690 = vtanh.pop %v1686
    %v1691 = vtanh.pop %v1687
    %v1692 = vtanh.pop %v1688
    %v1693 = vadd.f32 %v1689, 1.0
    %v1694 = vadd.f32 %v1690, 1.0
    %v1695 = vadd.f32 %v1691, 1.0
    %v1696 = vadd.f32 %v1692, 1.0
    %v1697 = vmul.f32 %v1693, 0.5
    %v1698 = vmul.f32 %v1694, 0.5
    %v1699 = vmul.f32 %v1695, 0.5
    %v1700 = vmul.f32 %v1696, 0.5
    %v1701 = vmul.f32 %v1659, %v1697
    %v1702 = vmul.f32 %v1661, %v1698
    %v1703 = vmul.f32 %v1665, %v1699
    %v1704 = vmul.f32 %v1667, %v1700
    %v1705 = vld [vmem:[%s14] sm:$0xff]
    %v1706 = vld [vmem:[%s14 + $0x8] sm:$0xff]
    %v1707 = vld [vmem:[%s14 + $0x10] sm:$0xff]
    %v1708 = vld [vmem:[%s14 + $0x18] sm:$0xff]
    %v1709 = vld [vmem:[%s14 + $0x20] sm:$0xff]
    %v1710 = vld [vmem:[%s14 + $0x28] sm:$0xff]
    %v1711 = vld [vmem:[%s14 + $0x30] sm:$0xff]
    %v1712 = vld [vmem:[%s14 + $0x38] sm:$0xff]
    %v1713 = vld [vmem:[%s14 + $0x40] sm:$0xff]
    %v1714 = vld [vmem:[%s14 + $0x48] sm:$0xff]
    %v1715 = vld [vmem:[%s14 + $0x50] sm:$0xff]
    %v1716 = vld [vmem:[%s14 + $0x58] sm:$0xff]
    %v1717 = vld [vmem:[%s14 + $0x60] sm:$0xff]
    %v1718 = vld [vmem:[%s14 + $0x68] sm:$0xff]
    %v1719 = vld [vmem:[%s14 + $0x70] sm:$0xff]
    %v1720 = vld [vmem:[%s14 + $0x78] sm:$0xff]
    %v1721 = vld [vmem:[%s14 + $0x80] sm:$0xff]
    %v1722 = vld [vmem:[%s14 + $0x88] sm:$0xff]
    %v1723 = vld [vmem:[%s14 + $0x90] sm:$0xff]
    %v1724 = vld [vmem:[%s14 + $0x98] sm:$0xff]
    %v1725 = vld [vmem:[%s14 + $0xa0] sm:$0xff]
    %v1726 = vld [vmem:[%s14 + $0xa8] sm:$0xff]
    %v1727 = vld [vmem:[%s14 + $0xb0] sm:$0xff]
    %v1728 = vld [vmem:[%s14 + $0xb8] sm:$0xff]
    %v1729 = vld [vmem:[%s14 + $0xc0] sm:$0xff]
    %v1730 = vld [vmem:[%s14 + $0xc8] sm:$0xff]
    %v1731 = vld [vmem:[%s14 + $0xd0] sm:$0xff]
    %v1732 = vld [vmem:[%s14 + $0xd8] sm:$0xff]
    %v1733 = vld [vmem:[%s14 + $0xe0] sm:$0xff]
    %v1734 = vld [vmem:[%s14 + $0xe8] sm:$0xff]
    %v1735 = vld [vmem:[%s14 + $0xf0] sm:$0xff]
    %v1736 = vld [vmem:[%s14 + $0xf8] sm:$0xff]
    %1737 = vmatprep.subr.mxu0 0.0
    %1738 = vmatpush1.msra.mxu0 %v1705
    %1739 = vmatprep.subr.mxu0 0.0
    %1740 = vmatpush1.msra.mxu0 %v1706
    %1741 = vmatprep.subr.mxu0 0.0
    %1742 = vmatpush1.msra.mxu0 %v1707
    %1743 = vmatprep.subr.mxu0 0.0
    %1744 = vmatpush1.msra.mxu0 %v1708
    %1745 = vmatprep.subr.mxu0 0.0
    %1746 = vmatpush1.msra.mxu0 %v1709
    %1747 = vmatprep.subr.mxu0 0.0
    %1748 = vmatpush1.msra.mxu0 %v1710
    %1749 = vmatprep.subr.mxu0 0.0
    %1750 = vmatpush1.msra.mxu0 %v1711
    %1751 = vmatprep.subr.mxu0 0.0
    %1752 = vmatpush1.msra.mxu0 %v1712
    %1753 = vmatprep.subr.mxu0 0.0
    %1754 = vmatpush1.msra.mxu0 %v1713
    %1755 = vmatprep.subr.mxu0 0.0
    %1756 = vmatpush1.msra.mxu0 %v1714
    %1757 = vmatprep.subr.mxu0 0.0
    %1758 = vmatpush1.msra.mxu0 %v1715
    %1759 = vmatprep.subr.mxu0 0.0
    %1760 = vmatpush1.msra.mxu0 %v1716
    %1761 = vmatprep.subr.mxu0 0.0
    %1762 = vmatpush1.msra.mxu0 %v1717
    %1763 = vmatprep.subr.mxu0 0.0
    %1764 = vmatpush1.msra.mxu0 %v1718
    %1765 = vmatprep.subr.mxu0 0.0
    %1766 = vmatpush1.msra.mxu0 %v1719
    %1767 = vmatprep.subr.mxu0 0.0
    %1768 = vmatpush1.msra.mxu0 %v1720
    %1769 = vmatprep.subr.mxu0 0.0
    %1770 = vmatpush1.msra.mxu0 %v1721
    %1771 = vmatprep.subr.mxu0 0.0
    %1772 = vmatpush1.msra.mxu0 %v1722
    %1773 = vmatprep.subr.mxu0 0.0
    %1774 = vmatpush1.msra.mxu0 %v1723
    %1775 = vmatprep.subr.mxu0 0.0
    %1776 = vmatpush1.msra.mxu0 %v1724
    %1777 = vmatprep.subr.mxu0 0.0
    %1778 = vmatpush1.msra.mxu0 %v1725
    %1779 = vmatprep.subr.mxu0 0.0
    %1780 = vmatpush1.msra.mxu0 %v1726
    %1781 = vmatprep.subr.mxu0 0.0
    %1782 = vmatpush1.msra.mxu0 %v1727
    %1783 = vmatprep.subr.mxu0 0.0
    %1784 = vmatpush1.msra.mxu0 %v1728
    %1785 = vmatprep.subr.mxu0 0.0
    %1786 = vmatpush1.msra.mxu0 %v1729
    %1787 = vmatprep.subr.mxu0 0.0
    %1788 = vmatpush1.msra.mxu0 %v1730
    %1789 = vmatprep.subr.mxu0 0.0
    %1790 = vmatpush1.msra.mxu0 %v1731
    %1791 = vmatprep.subr.mxu0 0.0
    %1792 = vmatpush1.msra.mxu0 %v1732
    %1793 = vmatprep.subr.mxu0 0.0
    %1794 = vmatpush1.msra.mxu0 %v1733
    %1795 = vmatprep.subr.mxu0 0.0
    %1796 = vmatpush1.msra.mxu0 %v1734
    %1797 = vmatprep.subr.mxu0 0.0
    %1798 = vmatpush1.msra.mxu0 %v1735
    %1799 = vmatprep.subr.mxu0 0.0
    %1800 = vmatpush1.msra.mxu0 %v1736
    %1801 = vmatprep.mubr.f32.mxu0 %v1702
    %1802 = vmatmul.mubr.f32.gmra.mrb[0].mxu0 %v1701
    %v1803 = vpop.f32.mrb[0].mxu0
    %v1804 = vadd.f32 0.0, %v1803
    %v1805 = vpop.f32.mrb[0].mxu0
    %1806 = vmatprep.mubr.f32.mxu0 %v1704
    %1807 = vmatmul.mubr.f32.gmra.mrb[0].mxu0 %v1703
    %v1808 = vpop.f32.mrb[0].mxu0
    %v1809 = vadd.f32 0.0, %v1808
    %v1810 = vpop.f32.mrb[0].mxu0
    %1811 = vdwg.mxu0
    %v1812 = vadd.f32 %v1543, %v1804
    %v1813 = vadd.f32 %v1544, %v1809
    %s1814 = scalar_lea.vmem %s5, 1
    %v1815 = vld [vmem:[%s1814] sm:$0x1]
    %v1816 = vmul.f32 %v1812, %v1812
    %v1817 = vmul.f32 %v1813, %v1813
    %v1818 = vsel %vm86, %v1816, 0.0
    %1819 = vadd.xlane.f32.xlu0 %v1818
    %v1820 = vpop.xlane.xlu0 %1819
    %v1821 = vsel %vm86, %v1817, 0.0
    %1822 = vadd.xlane.f32.xlu0 %v1821
    %v1823 = vpop.xlane.xlu0 %1822
    %v1824 = vmul.f32 %v1820, %v93
    %v1825 = vmul.f32 %v1823, %v93
    %v1826 = vadd.f32 %v1824, 1e-08
    %v1827 = vadd.f32 %v1825, 1e-08
    %v1828 = vrsqrt.pop %v1826
    %v1829 = vrsqrt.pop %v1827
    %v1830 = vmul.f32 %v1812, %v1828
    %v1831 = vmul.f32 %v1813, %v1829
    %v1833 = vlaneseq
    %v1834 = vshrl.u32 %v1833, 7
    %v1835 = vsub.s32 0, %v1834
    %v1836 = vrot.slane %v1815, %v1835
    %v1838 = vmul.f32 %v1830, %v1836
    %v1839 = vmul.f32 %v1831, %v1836
    %s1840 = scalar_lea.vmem %s6, 64
    %v1841 = vld [vmem:[%s1840] sm:$0xff]
    %v1842 = vld [vmem:[%s1840 + $0x8] sm:$0xff]
    %v1843 = vld [vmem:[%s1840 + $0x10] sm:$0xff]
    %v1844 = vld [vmem:[%s1840 + $0x18] sm:$0xff]
    %v1845 = vld [vmem:[%s1840 + $0x20] sm:$0xff]
    %v1846 = vld [vmem:[%s1840 + $0x28] sm:$0xff]
    %v1847 = vld [vmem:[%s1840 + $0x30] sm:$0xff]
    %v1848 = vld [vmem:[%s1840 + $0x38] sm:$0xff]
    %v1850 = vsel %vm86, %v1838, 0
    %v1853 = vsel %vm86, %v1839, 0
    %1855 = vmatprep.subr.mxu0 0.0
    %1856 = vmatpush1.msra.mxu0 %v1841
    %1857 = vmatprep.subr.mxu0 0.0
    %1858 = vmatpush1.msra.mxu0 %v1842
    %1859 = vmatprep.subr.mxu0 0.0
    %1860 = vmatpush1.msra.mxu0 %v1843
    %1861 = vmatprep.subr.mxu0 0.0
    %1862 = vmatpush1.msra.mxu0 %v1844
    %1863 = vmatprep.subr.mxu0 0.0
    %1864 = vmatpush1.msra.mxu0 %v1845
    %1865 = vmatprep.subr.mxu0 0.0
    %1866 = vmatpush1.msra.mxu0 %v1846
    %1867 = vmatprep.subr.mxu0 0.0
    %1868 = vmatpush1.msra.mxu0 %v1847
    %1869 = vmatprep.subr.mxu0 0.0
    %1870 = vmatpush1.msra.mxu0 %v1848
    %1871 = vmatprep.subr.mxu0 0.0
    %1872 = vmatpush1.msra.mxu0 0.0
    %1873 = vmatprep.subr.mxu0 0.0
    %1874 = vmatpush1.msra.mxu0 0.0
    %1875 = vmatprep.subr.mxu0 0.0
    %1876 = vmatpush1.msra.mxu0 0.0
    %1877 = vmatprep.subr.mxu0 0.0
    %1878 = vmatpush1.msra.mxu0 0.0
    %1879 = vmatprep.subr.mxu0 0.0
    %1880 = vmatpush1.msra.mxu0 0.0
    %1881 = vmatprep.subr.mxu0 0.0
    %1882 = vmatpush1.msra.mxu0 0.0
    %1883 = vmatprep.subr.mxu0 0.0
    %1884 = vmatpush1.msra.mxu0 0.0
    %1885 = vmatprep.subr.mxu0 0.0
    %1886 = vmatpush1.msra.mxu0 0.0
    %1887 = vmatprep.subr.mxu0 0.0
    %1888 = vmatpush1.msra.mxu0 0.0
    %1889 = vmatprep.subr.mxu0 0.0
    %1890 = vmatpush1.msra.mxu0 0.0
    %1891 = vmatprep.subr.mxu0 0.0
    %1892 = vmatpush1.msra.mxu0 0.0
    %1893 = vmatprep.subr.mxu0 0.0
    %1894 = vmatpush1.msra.mxu0 0.0
    %1895 = vmatprep.subr.mxu0 0.0
    %1896 = vmatpush1.msra.mxu0 0.0
    %1897 = vmatprep.subr.mxu0 0.0
    %1898 = vmatpush1.msra.mxu0 0.0
    %1899 = vmatprep.subr.mxu0 0.0
    %1900 = vmatpush1.msra.mxu0 0.0
    %1901 = vmatprep.subr.mxu0 0.0
    %1902 = vmatpush1.msra.mxu0 0.0
    %1903 = vmatprep.subr.mxu0 0.0
    %1904 = vmatpush1.msra.mxu0 0.0
    %1905 = vmatprep.subr.mxu0 0.0
    %1906 = vmatpush1.msra.mxu0 0.0
    %1907 = vmatprep.subr.mxu0 0.0
    %1908 = vmatpush1.msra.mxu0 0.0
    %1909 = vmatprep.subr.mxu0 0.0
    %1910 = vmatpush1.msra.mxu0 0.0
    %1911 = vmatprep.subr.mxu0 0.0
    %1912 = vmatpush1.msra.mxu0 0.0
    %1913 = vmatprep.subr.mxu0 0.0
    %1914 = vmatpush1.msra.mxu0 0.0
    %1915 = vmatprep.subr.mxu0 0.0
    %1916 = vmatpush1.msra.mxu0 0.0
    %1917 = vmatprep.subr.mxu0 0.0
    %1918 = vmatpush1.msra.mxu0 0.0
    %1919 = vmatprep.mubr.f32.mxu0 0.0
    %1920 = vmatmul.mubr.f32.gmra.mrb[0].mxu0 %v1850
    %v1921 = vpop.f32.mrb[0].mxu0
    %v1922 = vadd.f32 0.0, %v1921
    %v1923 = vpop.f32.mrb[0].mxu0
    %1924 = vmatprep.mubr.f32.mxu0 0.0
    %1925 = vmatmul.mubr.f32.gmra.mrb[0].mxu0 %v1853
    %v1926 = vpop.f32.mrb[0].mxu0
    %v1927 = vadd.f32 0.0, %v1926
    %v1928 = vpop.f32.mrb[0].mxu0
    %1929 = vdwg.mxu0
    %s1930 = sld [smem:[#allocation2 + $0x1]]
    %v1931 = vmul.f32 %v1922, %v1922
    %v1932 = vmul.f32 %v1927, %v1927
    %v1933 = vsel %vm202, %v1931, 0.0
    %1934 = vadd.xlane.f32.xlu0 %v1933
    %v1935 = vpop.xlane.xlu0 %1934
    %v1936 = vsel %vm202, %v1932, 0.0
    %1937 = vadd.xlane.f32.xlu0 %v1936
    %v1938 = vpop.xlane.xlu0 %1937
    %v1939 = vmax.f32 %v1935, 1e-24
    %v1940 = vmax.f32 %v1938, 1e-24
    %v1941 = vrsqrt.pop %v1939
    %v1942 = vrsqrt.pop %v1940
    %v1943 = vmul.f32 %v1922, %v1941
    %v1944 = vmul.f32 %v1927, %v1942
    %1947 = vrot.lane.b32.xlu0 %v1931, 96
    %v1948 = vpop.permute.xlu0 %1947
    %1949 = vrot.lane.b32.xlu0 %v1932, 96
    %v1950 = vpop.permute.xlu0 %1949
    %v1953 = vsel %vm202, %v1948, 0.0
    %1954 = vadd.xlane.f32.xlu0 %v1953
    %v1955 = vpop.xlane.xlu0 %1954
    %v1956 = vsel %vm202, %v1950, 0.0
    %1957 = vadd.xlane.f32.xlu0 %v1956
    %v1958 = vpop.xlane.xlu0 %1957
    %v1959 = vmax.f32 %v1955, 1e-24
    %v1960 = vmax.f32 %v1958, 1e-24
    %v1961 = vrsqrt.pop %v1959
    %v1962 = vrsqrt.pop %v1960
    %v1963 = vmul.f32 %v1922, %v1961
    %v1964 = vmul.f32 %v1927, %v1962
    %1967 = vrot.lane.b32.xlu0 %v1963, 96
    %v1968 = vpop.permute.xlu0 %1967
    %1969 = vrot.lane.b32.xlu0 %v1964, 96
    %v1970 = vpop.permute.xlu0 %1969
    %v1972 = vsel %vm202, %v1943, 0
    %v1975 = vsel %vm202, %v1944, 0
    %v1977 = vsel %vm202, %v1968, 0
    %v1979 = vsel %vm202, %v1970, 0
    %1981 = vmatprep.subr.mxu0 0.0
    %1982 = vmatpush1.xpose.msra.mxu0 %v1977
    %1983 = vmatprep.subr.mxu0 0.0
    %1984 = vmatpush1.xpose.msra.mxu0 %v1979
    %1985 = vmatprep.subr.mxu0 0.0
    %1986 = vmatpush1.xpose.msra.mxu0 0.0
    %1987 = vmatprep.subr.mxu0 0.0
    %1988 = vmatpush1.xpose.msra.mxu0 0.0
    %1989 = vmatprep.subr.mxu0 0.0
    %1990 = vmatpush1.xpose.msra.mxu0 0.0
    %1991 = vmatprep.subr.mxu0 0.0
    %1992 = vmatpush1.xpose.msra.mxu0 0.0
    %1993 = vmatprep.subr.mxu0 0.0
    %1994 = vmatpush1.xpose.msra.mxu0 0.0
    %1995 = vmatprep.subr.mxu0 0.0
    %1996 = vmatpush1.xpose.msra.mxu0 0.0
    %1997 = vmatprep.subr.mxu0 0.0
    %1998 = vmatpush1.xpose.msra.mxu0 0.0
    %1999 = vmatprep.subr.mxu0 0.0
    %2000 = vmatpush1.xpose.msra.mxu0 0.0
    %2001 = vmatprep.subr.mxu0 0.0
    %2002 = vmatpush1.xpose.msra.mxu0 0.0
    %2003 = vmatprep.subr.mxu0 0.0
    %2004 = vmatpush1.xpose.msra.mxu0 0.0
    %2005 = vmatprep.subr.mxu0 0.0
    %2006 = vmatpush1.xpose.msra.mxu0 0.0
    %2007 = vmatprep.subr.mxu0 0.0
    %2008 = vmatpush1.xpose.msra.mxu0 0.0
    %2009 = vmatprep.subr.mxu0 0.0
    %2010 = vmatpush1.xpose.msra.mxu0 0.0
    %2011 = vmatprep.subr.mxu0 0.0
    %2012 = vmatpush1.xpose.msra.mxu0 0.0
    %2013 = vmatprep.subr.mxu0 0.0
    %2014 = vmatpush1.xpose.msra.mxu0 0.0
    %2015 = vmatprep.subr.mxu0 0.0
    %2016 = vmatpush1.xpose.msra.mxu0 0.0
    %2017 = vmatprep.subr.mxu0 0.0
    %2018 = vmatpush1.xpose.msra.mxu0 0.0
    %2019 = vmatprep.subr.mxu0 0.0
    %2020 = vmatpush1.xpose.msra.mxu0 0.0
    %2021 = vmatprep.subr.mxu0 0.0
    %2022 = vmatpush1.xpose.msra.mxu0 0.0
    %2023 = vmatprep.subr.mxu0 0.0
    %2024 = vmatpush1.xpose.msra.mxu0 0.0
    %2025 = vmatprep.subr.mxu0 0.0
    %2026 = vmatpush1.xpose.msra.mxu0 0.0
    %2027 = vmatprep.subr.mxu0 0.0
    %2028 = vmatpush1.xpose.msra.mxu0 0.0
    %2029 = vmatprep.subr.mxu0 0.0
    %2030 = vmatpush1.xpose.msra.mxu0 0.0
    %2031 = vmatprep.subr.mxu0 0.0
    %2032 = vmatpush1.xpose.msra.mxu0 0.0
    %2033 = vmatprep.subr.mxu0 0.0
    %2034 = vmatpush1.xpose.msra.mxu0 0.0
    %2035 = vmatprep.subr.mxu0 0.0
    %2036 = vmatpush1.xpose.msra.mxu0 0.0
    %2037 = vmatprep.subr.mxu0 0.0
    %2038 = vmatpush1.xpose.msra.mxu0 0.0
    %2039 = vmatprep.subr.mxu0 0.0
    %2040 = vmatpush1.xpose.msra.mxu0 0.0
    %2041 = vmatprep.subr.mxu0 0.0
    %2042 = vmatpush1.xpose.msra.mxu0 0.0
    %2043 = vmatprep.subr.mxu0 0.0
    %2044 = vmatpush1.xpose.msra.mxu0 0.0
    %2045 = vmatprep.mubr.f32.mxu0 0.0
    %2046 = vmatmul.mubr.f32.gmra.mrb[0].mxu0 %v1972
    %v2047 = vpop.f32.mrb[0].mxu0
    %v2048 = vadd.f32 0.0, %v2047
    %v2049 = vpop.f32.mrb[0].mxu0
    %2050 = vmatprep.mubr.f32.mxu0 0.0
    %2051 = vmatmul.mubr.f32.gmra.mrb[0].mxu0 %v1975
    %v2052 = vpop.f32.mrb[0].mxu0
    %v2053 = vadd.f32 0.0, %v2052
    %v2054 = vpop.f32.mrb[0].mxu0
    %2055 = vdwg.mxu0
    %v2056 = vstv %s1930
    %v2057 = vmul.f32 %v2048, %v2056
    %v2058 = vmul.f32 %v2053, %v2056
    %v2059 = vadd.f32 %v2057, %v329
    %v2060 = vadd.f32 %v2058, %v330
    %v2061 = vsel %vm202, %v2059, -inf
    %2062 = vmax.xlane.f32.xlu0 %v2061
    %v2063 = vpop.xlane.xlu0 %2062
    %v2064 = vsel %vm202, %v2060, -inf
    %2065 = vmax.xlane.f32.xlu0 %v2064
    %v2066 = vpop.xlane.xlu0 %2065
    %v2067 = vsub.f32 %v2059, %v2063
    %v2068 = vsub.f32 %v2060, %v2066
    %v2069 = vmul.f32 %v2067, 1.442695
    %v2070 = vpow.pop %v2069
    %v2071 = vmul.f32 %v2068, 1.442695
    %v2072 = vpow.pop %v2071
    %v2073 = vsel %vm202, %v2070, 0.0
    %2074 = vadd.xlane.f32.xlu0 %v2073
    %v2075 = vpop.xlane.xlu0 %2074
    %v2076 = vsel %vm202, %v2072, 0.0
    %2077 = vadd.xlane.f32.xlu0 %v2076
    %v2078 = vpop.xlane.xlu0 %2077
    %v2079 = vrcp.pop %v2075
    %v2080 = vrcp.pop %v2078
    %v2081 = vmul.f32 %v2070, %v2079
    %v2082 = vmul.f32 %v2072, %v2080
    %2085 = vrot.lane.b32.xlu0 %v1922, 64
    %v2086 = vpop.permute.xlu0 %2085
    %2087 = vrot.lane.b32.xlu0 %v1927, 64
    %v2088 = vpop.permute.xlu0 %2087
    %v2092 = vsel %vm202, %v2081, 0
    %v2095 = vsel %vm202, %v2082, 0
    %2097 = vmatprep.subr.mxu0 0.0
    %2098 = vmatpush1.msra.mxu0 %v2086
    %2099 = vmatprep.subr.mxu0 0.0
    %2100 = vmatpush1.msra.mxu0 %v2088
    %2101 = vmatprep.subr.mxu0 0.0
    %2102 = vmatpush1.msra.mxu0 0.0
    %2103 = vmatprep.subr.mxu0 0.0
    %2104 = vmatpush1.msra.mxu0 0.0
    %2105 = vmatprep.subr.mxu0 0.0
    %2106 = vmatpush1.msra.mxu0 0.0
    %2107 = vmatprep.subr.mxu0 0.0
    %2108 = vmatpush1.msra.mxu0 0.0
    %2109 = vmatprep.subr.mxu0 0.0
    %2110 = vmatpush1.msra.mxu0 0.0
    %2111 = vmatprep.subr.mxu0 0.0
    %2112 = vmatpush1.msra.mxu0 0.0
    %2113 = vmatprep.subr.mxu0 0.0
    %2114 = vmatpush1.msra.mxu0 0.0
    %2115 = vmatprep.subr.mxu0 0.0
    %2116 = vmatpush1.msra.mxu0 0.0
    %2117 = vmatprep.subr.mxu0 0.0
    %2118 = vmatpush1.msra.mxu0 0.0
    %2119 = vmatprep.subr.mxu0 0.0
    %2120 = vmatpush1.msra.mxu0 0.0
    %2121 = vmatprep.subr.mxu0 0.0
    %2122 = vmatpush1.msra.mxu0 0.0
    %2123 = vmatprep.subr.mxu0 0.0
    %2124 = vmatpush1.msra.mxu0 0.0
    %2125 = vmatprep.subr.mxu0 0.0
    %2126 = vmatpush1.msra.mxu0 0.0
    %2127 = vmatprep.subr.mxu0 0.0
    %2128 = vmatpush1.msra.mxu0 0.0
    %2129 = vmatprep.subr.mxu0 0.0
    %2130 = vmatpush1.msra.mxu0 0.0
    %2131 = vmatprep.subr.mxu0 0.0
    %2132 = vmatpush1.msra.mxu0 0.0
    %2133 = vmatprep.subr.mxu0 0.0
    %2134 = vmatpush1.msra.mxu0 0.0
    %2135 = vmatprep.subr.mxu0 0.0
    %2136 = vmatpush1.msra.mxu0 0.0
    %2137 = vmatprep.subr.mxu0 0.0
    %2138 = vmatpush1.msra.mxu0 0.0
    %2139 = vmatprep.subr.mxu0 0.0
    %2140 = vmatpush1.msra.mxu0 0.0
    %2141 = vmatprep.subr.mxu0 0.0
    %2142 = vmatpush1.msra.mxu0 0.0
    %2143 = vmatprep.subr.mxu0 0.0
    %2144 = vmatpush1.msra.mxu0 0.0
    %2145 = vmatprep.subr.mxu0 0.0
    %2146 = vmatpush1.msra.mxu0 0.0
    %2147 = vmatprep.subr.mxu0 0.0
    %2148 = vmatpush1.msra.mxu0 0.0
    %2149 = vmatprep.subr.mxu0 0.0
    %2150 = vmatpush1.msra.mxu0 0.0
    %2151 = vmatprep.subr.mxu0 0.0
    %2152 = vmatpush1.msra.mxu0 0.0
    %2153 = vmatprep.subr.mxu0 0.0
    %2154 = vmatpush1.msra.mxu0 0.0
    %2155 = vmatprep.subr.mxu0 0.0
    %2156 = vmatpush1.msra.mxu0 0.0
    %2157 = vmatprep.subr.mxu0 0.0
    %2158 = vmatpush1.msra.mxu0 0.0
    %2159 = vmatprep.subr.mxu0 0.0
    %2160 = vmatpush1.msra.mxu0 0.0
    %2161 = vmatprep.mubr.f32.mxu0 0.0
    %2162 = vmatmul.mubr.f32.gmra.mrb[0].mxu0 %v2092
    %v2163 = vpop.f32.mrb[0].mxu0
    %v2164 = vadd.f32 0.0, %v2163
    %v2165 = vpop.f32.mrb[0].mxu0
    %2166 = vmatprep.mubr.f32.mxu0 0.0
    %2167 = vmatmul.mubr.f32.gmra.mrb[0].mxu0 %v2095
    %v2168 = vpop.f32.mrb[0].mxu0
    %v2169 = vadd.f32 0.0, %v2168
    %v2170 = vpop.f32.mrb[0].mxu0
    %2171 = vdwg.mxu0
    %2172 = vrot.lane.b32.xlu0 %v1931, 112
    %v2173 = vpop.permute.xlu0 %2172
    %2174 = vrot.lane.b32.xlu0 %v1932, 112
    %v2175 = vpop.permute.xlu0 %2174
    %v2178 = vsel %vm202, %v2173, 0.0
    %2179 = vadd.xlane.f32.xlu0 %v2178
    %v2180 = vpop.xlane.xlu0 %2179
    %v2181 = vsel %vm202, %v2175, 0.0
    %2182 = vadd.xlane.f32.xlu0 %v2181
    %v2183 = vpop.xlane.xlu0 %2182
    %v2184 = vmax.f32 %v2180, 1e-24
    %v2185 = vmax.f32 %v2183, 1e-24
    %v2186 = vrsqrt.pop %v2184
    %v2187 = vrsqrt.pop %v2185
    %v2188 = vmul.f32 %v1922, %v2186
    %v2189 = vmul.f32 %v1927, %v2187
    %2190 = vrot.lane.b32.xlu0 %v1931, 80
    %v2191 = vpop.permute.xlu0 %2190
    %2192 = vrot.lane.b32.xlu0 %v1932, 80
    %v2193 = vpop.permute.xlu0 %2192
    %v2196 = vsel %vm202, %v2191, 0.0
    %2197 = vadd.xlane.f32.xlu0 %v2196
    %v2198 = vpop.xlane.xlu0 %2197
    %v2199 = vsel %vm202, %v2193, 0.0
    %2200 = vadd.xlane.f32.xlu0 %v2199
    %v2201 = vpop.xlane.xlu0 %2200
    %v2202 = vmax.f32 %v2198, 1e-24
    %v2203 = vmax.f32 %v2201, 1e-24
    %v2204 = vrsqrt.pop %v2202
    %v2205 = vrsqrt.pop %v2203
    %v2206 = vmul.f32 %v1922, %v2204
    %v2207 = vmul.f32 %v1927, %v2205
    %2210 = vrot.lane.b32.xlu0 %v2188, 112
    %v2211 = vpop.permute.xlu0 %2210
    %2212 = vrot.lane.b32.xlu0 %v2189, 112
    %v2213 = vpop.permute.xlu0 %2212
    %2216 = vrot.lane.b32.xlu0 %v2206, 80
    %v2217 = vpop.permute.xlu0 %2216
    %2218 = vrot.lane.b32.xlu0 %v2207, 80
    %v2219 = vpop.permute.xlu0 %2218
    %v2220 = vsel %vm202, %v2211, 0
    %v2222 = vsel %vm202, %v2213, 0
    %v2224 = vsel %vm202, %v2217, 0
    %v2226 = vsel %vm202, %v2219, 0
    %2228 = vmatprep.subr.mxu0 0.0
    %2229 = vmatpush1.xpose.msra.mxu0 %v2224
    %2230 = vmatprep.subr.mxu0 0.0
    %2231 = vmatpush1.xpose.msra.mxu0 %v2226
    %2232 = vmatprep.subr.mxu0 0.0
    %2233 = vmatpush1.xpose.msra.mxu0 0.0
    %2234 = vmatprep.subr.mxu0 0.0
    %2235 = vmatpush1.xpose.msra.mxu0 0.0
    %2236 = vmatprep.subr.mxu0 0.0
    %2237 = vmatpush1.xpose.msra.mxu0 0.0
    %2238 = vmatprep.subr.mxu0 0.0
    %2239 = vmatpush1.xpose.msra.mxu0 0.0
    %2240 = vmatprep.subr.mxu0 0.0
    %2241 = vmatpush1.xpose.msra.mxu0 0.0
    %2242 = vmatprep.subr.mxu0 0.0
    %2243 = vmatpush1.xpose.msra.mxu0 0.0
    %2244 = vmatprep.subr.mxu0 0.0
    %2245 = vmatpush1.xpose.msra.mxu0 0.0
    %2246 = vmatprep.subr.mxu0 0.0
    %2247 = vmatpush1.xpose.msra.mxu0 0.0
    %2248 = vmatprep.subr.mxu0 0.0
    %2249 = vmatpush1.xpose.msra.mxu0 0.0
    %2250 = vmatprep.subr.mxu0 0.0
    %2251 = vmatpush1.xpose.msra.mxu0 0.0
    %2252 = vmatprep.subr.mxu0 0.0
    %2253 = vmatpush1.xpose.msra.mxu0 0.0
    %2254 = vmatprep.subr.mxu0 0.0
    %2255 = vmatpush1.xpose.msra.mxu0 0.0
    %2256 = vmatprep.subr.mxu0 0.0
    %2257 = vmatpush1.xpose.msra.mxu0 0.0
    %2258 = vmatprep.subr.mxu0 0.0
    %2259 = vmatpush1.xpose.msra.mxu0 0.0
    %2260 = vmatprep.subr.mxu0 0.0
    %2261 = vmatpush1.xpose.msra.mxu0 0.0
    %2262 = vmatprep.subr.mxu0 0.0
    %2263 = vmatpush1.xpose.msra.mxu0 0.0
    %2264 = vmatprep.subr.mxu0 0.0
    %2265 = vmatpush1.xpose.msra.mxu0 0.0
    %2266 = vmatprep.subr.mxu0 0.0
    %2267 = vmatpush1.xpose.msra.mxu0 0.0
    %2268 = vmatprep.subr.mxu0 0.0
    %2269 = vmatpush1.xpose.msra.mxu0 0.0
    %2270 = vmatprep.subr.mxu0 0.0
    %2271 = vmatpush1.xpose.msra.mxu0 0.0
    %2272 = vmatprep.subr.mxu0 0.0
    %2273 = vmatpush1.xpose.msra.mxu0 0.0
    %2274 = vmatprep.subr.mxu0 0.0
    %2275 = vmatpush1.xpose.msra.mxu0 0.0
    %2276 = vmatprep.subr.mxu0 0.0
    %2277 = vmatpush1.xpose.msra.mxu0 0.0
    %2278 = vmatprep.subr.mxu0 0.0
    %2279 = vmatpush1.xpose.msra.mxu0 0.0
    %2280 = vmatprep.subr.mxu0 0.0
    %2281 = vmatpush1.xpose.msra.mxu0 0.0
    %2282 = vmatprep.subr.mxu0 0.0
    %2283 = vmatpush1.xpose.msra.mxu0 0.0
    %2284 = vmatprep.subr.mxu0 0.0
    %2285 = vmatpush1.xpose.msra.mxu0 0.0
    %2286 = vmatprep.subr.mxu0 0.0
    %2287 = vmatpush1.xpose.msra.mxu0 0.0
    %2288 = vmatprep.subr.mxu0 0.0
    %2289 = vmatpush1.xpose.msra.mxu0 0.0
    %2290 = vmatprep.subr.mxu0 0.0
    %2291 = vmatpush1.xpose.msra.mxu0 0.0
    %2292 = vmatprep.mubr.f32.mxu0 0.0
    %2293 = vmatmul.mubr.f32.gmra.mrb[0].mxu0 %v2220
    %v2294 = vpop.f32.mrb[0].mxu0
    %v2295 = vadd.f32 0.0, %v2294
    %v2296 = vpop.f32.mrb[0].mxu0
    %2297 = vmatprep.mubr.f32.mxu0 0.0
    %2298 = vmatmul.mubr.f32.gmra.mrb[0].mxu0 %v2222
    %v2299 = vpop.f32.mrb[0].mxu0
    %v2300 = vadd.f32 0.0, %v2299
    %v2301 = vpop.f32.mrb[0].mxu0
    %2302 = vdwg.mxu0
    %v2303 = vmul.f32 %v2295, %v2056
    %v2304 = vmul.f32 %v2300, %v2056
    %v2305 = vadd.f32 %v2303, %v578
    %v2306 = vadd.f32 %v2304, %v579
    %v2307 = vsel %vm202, %v2305, -inf
    %2308 = vmax.xlane.f32.xlu0 %v2307
    %v2309 = vpop.xlane.xlu0 %2308
    %v2310 = vsel %vm202, %v2306, -inf
    %2311 = vmax.xlane.f32.xlu0 %v2310
    %v2312 = vpop.xlane.xlu0 %2311
    %v2313 = vsub.f32 %v2305, %v2309
    %v2314 = vsub.f32 %v2306, %v2312
    %v2315 = vmul.f32 %v2313, 1.442695
    %v2316 = vpow.pop %v2315
    %v2317 = vmul.f32 %v2314, 1.442695
    %v2318 = vpow.pop %v2317
    %v2319 = vsel %vm202, %v2316, 0.0
    %2320 = vadd.xlane.f32.xlu0 %v2319
    %v2321 = vpop.xlane.xlu0 %2320
    %v2322 = vsel %vm202, %v2318, 0.0
    %2323 = vadd.xlane.f32.xlu0 %v2322
    %v2324 = vpop.xlane.xlu0 %2323
    %v2325 = vrcp.pop %v2321
    %v2326 = vrcp.pop %v2324
    %v2327 = vmul.f32 %v2316, %v2325
    %v2328 = vmul.f32 %v2318, %v2326
    %2329 = vrot.lane.b32.xlu0 %v1922, 48
    %v2330 = vpop.permute.xlu0 %2329
    %2331 = vrot.lane.b32.xlu0 %v1927, 48
    %v2332 = vpop.permute.xlu0 %2331
    %v2336 = vsel %vm202, %v2327, 0
    %v2339 = vsel %vm202, %v2328, 0
    %2341 = vmatprep.subr.mxu0 0.0
    %2342 = vmatpush1.msra.mxu0 %v2330
    %2343 = vmatprep.subr.mxu0 0.0
    %2344 = vmatpush1.msra.mxu0 %v2332
    %2345 = vmatprep.subr.mxu0 0.0
    %2346 = vmatpush1.msra.mxu0 0.0
    %2347 = vmatprep.subr.mxu0 0.0
    %2348 = vmatpush1.msra.mxu0 0.0
    %2349 = vmatprep.subr.mxu0 0.0
    %2350 = vmatpush1.msra.mxu0 0.0
    %2351 = vmatprep.subr.mxu0 0.0
    %2352 = vmatpush1.msra.mxu0 0.0
    %2353 = vmatprep.subr.mxu0 0.0
    %2354 = vmatpush1.msra.mxu0 0.0
    %2355 = vmatprep.subr.mxu0 0.0
    %2356 = vmatpush1.msra.mxu0 0.0
    %2357 = vmatprep.subr.mxu0 0.0
    %2358 = vmatpush1.msra.mxu0 0.0
    %2359 = vmatprep.subr.mxu0 0.0
    %2360 = vmatpush1.msra.mxu0 0.0
    %2361 = vmatprep.subr.mxu0 0.0
    %2362 = vmatpush1.msra.mxu0 0.0
    %2363 = vmatprep.subr.mxu0 0.0
    %2364 = vmatpush1.msra.mxu0 0.0
    %2365 = vmatprep.subr.mxu0 0.0
    %2366 = vmatpush1.msra.mxu0 0.0
    %2367 = vmatprep.subr.mxu0 0.0
    %2368 = vmatpush1.msra.mxu0 0.0
    %2369 = vmatprep.subr.mxu0 0.0
    %2370 = vmatpush1.msra.mxu0 0.0
    %2371 = vmatprep.subr.mxu0 0.0
    %2372 = vmatpush1.msra.mxu0 0.0
    %2373 = vmatprep.subr.mxu0 0.0
    %2374 = vmatpush1.msra.mxu0 0.0
    %2375 = vmatprep.subr.mxu0 0.0
    %2376 = vmatpush1.msra.mxu0 0.0
    %2377 = vmatprep.subr.mxu0 0.0
    %2378 = vmatpush1.msra.mxu0 0.0
    %2379 = vmatprep.subr.mxu0 0.0
    %2380 = vmatpush1.msra.mxu0 0.0
    %2381 = vmatprep.subr.mxu0 0.0
    %2382 = vmatpush1.msra.mxu0 0.0
    %2383 = vmatprep.subr.mxu0 0.0
    %2384 = vmatpush1.msra.mxu0 0.0
    %2385 = vmatprep.subr.mxu0 0.0
    %2386 = vmatpush1.msra.mxu0 0.0
    %2387 = vmatprep.subr.mxu0 0.0
    %2388 = vmatpush1.msra.mxu0 0.0
    %2389 = vmatprep.subr.mxu0 0.0
    %2390 = vmatpush1.msra.mxu0 0.0
    %2391 = vmatprep.subr.mxu0 0.0
    %2392 = vmatpush1.msra.mxu0 0.0
    %2393 = vmatprep.subr.mxu0 0.0
    %2394 = vmatpush1.msra.mxu0 0.0
    %2395 = vmatprep.subr.mxu0 0.0
    %2396 = vmatpush1.msra.mxu0 0.0
    %2397 = vmatprep.subr.mxu0 0.0
    %2398 = vmatpush1.msra.mxu0 0.0
    %2399 = vmatprep.subr.mxu0 0.0
    %2400 = vmatpush1.msra.mxu0 0.0
    %2401 = vmatprep.subr.mxu0 0.0
    %2402 = vmatpush1.msra.mxu0 0.0
    %2403 = vmatprep.subr.mxu0 0.0
    %2404 = vmatpush1.msra.mxu0 0.0
    %2405 = vmatprep.mubr.f32.mxu0 0.0
    %2406 = vmatmul.mubr.f32.gmra.mrb[0].mxu0 %v2336
    %v2407 = vpop.f32.mrb[0].mxu0
    %v2408 = vadd.f32 0.0, %v2407
    %v2409 = vpop.f32.mrb[0].mxu0
    %2410 = vmatprep.mubr.f32.mxu0 0.0
    %2411 = vmatmul.mubr.f32.gmra.mrb[0].mxu0 %v2339
    %v2412 = vpop.f32.mrb[0].mxu0
    %v2413 = vadd.f32 0.0, %v2412
    %v2414 = vpop.f32.mrb[0].mxu0
    %2415 = vdwg.mxu0
    %2418 = vrot.lane.b32.xlu0 %v2408, 16
    %v2419 = vpop.permute.xlu0 %2418
    %2420 = vrot.lane.b32.xlu0 %v2413, 16
    %v2421 = vpop.permute.xlu0 %2420
    %v2424 = vsel %vm202, %v2164, %v2419
    %v2425 = vsel %vm202, %v2169, %v2421
    %s2426 = scalar_lea.vmem %s7, 32
    %v2427 = vld [vmem:[%s2426] sm:$0xff]
    %v2428 = vld [vmem:[%s2426 + $0x8] sm:$0xff]
    %v2429 = vld [vmem:[%s2426 + $0x10] sm:$0xff]
    %v2430 = vld [vmem:[%s2426 + $0x18] sm:$0xff]
    %v2432 = vsel %vm705, %v2424, 0
    %v2435 = vsel %vm705, %v2425, 0
    %2437 = vmatprep.subr.mxu0 0.0
    %2438 = vmatpush1.msra.mxu0 %v2427
    %2439 = vmatprep.subr.mxu0 0.0
    %2440 = vmatpush1.msra.mxu0 %v2428
    %2441 = vmatprep.subr.mxu0 0.0
    %2442 = vmatpush1.msra.mxu0 %v2429
    %2443 = vmatprep.subr.mxu0 0.0
    %2444 = vmatpush1.msra.mxu0 %v2430
    %2445 = vmatprep.subr.mxu0 0.0
    %2446 = vmatpush1.msra.mxu0 0.0
    %2447 = vmatprep.subr.mxu0 0.0
    %2448 = vmatpush1.msra.mxu0 0.0
    %2449 = vmatprep.subr.mxu0 0.0
    %2450 = vmatpush1.msra.mxu0 0.0
    %2451 = vmatprep.subr.mxu0 0.0
    %2452 = vmatpush1.msra.mxu0 0.0
    %2453 = vmatprep.subr.mxu0 0.0
    %2454 = vmatpush1.msra.mxu0 0.0
    %2455 = vmatprep.subr.mxu0 0.0
    %2456 = vmatpush1.msra.mxu0 0.0
    %2457 = vmatprep.subr.mxu0 0.0
    %2458 = vmatpush1.msra.mxu0 0.0
    %2459 = vmatprep.subr.mxu0 0.0
    %2460 = vmatpush1.msra.mxu0 0.0
    %2461 = vmatprep.subr.mxu0 0.0
    %2462 = vmatpush1.msra.mxu0 0.0
    %2463 = vmatprep.subr.mxu0 0.0
    %2464 = vmatpush1.msra.mxu0 0.0
    %2465 = vmatprep.subr.mxu0 0.0
    %2466 = vmatpush1.msra.mxu0 0.0
    %2467 = vmatprep.subr.mxu0 0.0
    %2468 = vmatpush1.msra.mxu0 0.0
    %2469 = vmatprep.subr.mxu0 0.0
    %2470 = vmatpush1.msra.mxu0 0.0
    %2471 = vmatprep.subr.mxu0 0.0
    %2472 = vmatpush1.msra.mxu0 0.0
    %2473 = vmatprep.subr.mxu0 0.0
    %2474 = vmatpush1.msra.mxu0 0.0
    %2475 = vmatprep.subr.mxu0 0.0
    %2476 = vmatpush1.msra.mxu0 0.0
    %2477 = vmatprep.subr.mxu0 0.0
    %2478 = vmatpush1.msra.mxu0 0.0
    %2479 = vmatprep.subr.mxu0 0.0
    %2480 = vmatpush1.msra.mxu0 0.0
    %2481 = vmatprep.subr.mxu0 0.0
    %2482 = vmatpush1.msra.mxu0 0.0
    %2483 = vmatprep.subr.mxu0 0.0
    %2484 = vmatpush1.msra.mxu0 0.0
    %2485 = vmatprep.subr.mxu0 0.0
    %2486 = vmatpush1.msra.mxu0 0.0
    %2487 = vmatprep.subr.mxu0 0.0
    %2488 = vmatpush1.msra.mxu0 0.0
    %2489 = vmatprep.subr.mxu0 0.0
    %2490 = vmatpush1.msra.mxu0 0.0
    %2491 = vmatprep.subr.mxu0 0.0
    %2492 = vmatpush1.msra.mxu0 0.0
    %2493 = vmatprep.subr.mxu0 0.0
    %2494 = vmatpush1.msra.mxu0 0.0
    %2495 = vmatprep.subr.mxu0 0.0
    %2496 = vmatpush1.msra.mxu0 0.0
    %2497 = vmatprep.subr.mxu0 0.0
    %2498 = vmatpush1.msra.mxu0 0.0
    %2499 = vmatprep.subr.mxu0 0.0
    %2500 = vmatpush1.msra.mxu0 0.0
    %2501 = vmatprep.mubr.f32.mxu0 0.0
    %2502 = vmatmul.mubr.f32.gmra.mrb[0].mxu0 %v2432
    %v2503 = vpop.f32.mrb[0].mxu0
    %v2504 = vadd.f32 0.0, %v2503
    %v2505 = vpop.f32.mrb[0].mxu0
    %2506 = vmatprep.mubr.f32.mxu0 0.0
    %2507 = vmatmul.mubr.f32.gmra.mrb[0].mxu0 %v2435
    %v2508 = vpop.f32.mrb[0].mxu0
    %v2509 = vadd.f32 0.0, %v2508
    %v2510 = vpop.f32.mrb[0].mxu0
    %2511 = vdwg.mxu0
    %v2512 = vadd.f32 %v1812, %v2504
    %v2513 = vadd.f32 %v1813, %v2509
    %2516 = vrot.lane.b32.xlu0 %v2206, 96
    %v2517 = vpop.permute.xlu0 %2516
    %2518 = vrot.lane.b32.xlu0 %v2207, 96
    %v2519 = vpop.permute.xlu0 %2518
    %v2522 = vsel %vm202, %v1968, %v2517
    %v2523 = vsel %vm202, %v1970, %v2519
    %s2524 = scalar_lea.vmem %s8, 1
    %v2525 = vld [vmem:[%s2524] sm:$0x1]
    %v2526 = vmul.f32 %v2512, %v2512
    %v2527 = vmul.f32 %v2513, %v2513
    %v2528 = vsel %vm86, %v2526, 0.0
    %2529 = vadd.xlane.f32.xlu0 %v2528
    %v2530 = vpop.xlane.xlu0 %2529
    %v2531 = vsel %vm86, %v2527, 0.0
    %2532 = vadd.xlane.f32.xlu0 %v2531
    %v2533 = vpop.xlane.xlu0 %2532
    %v2534 = vmul.f32 %v2530, %v93
    %v2535 = vmul.f32 %v2533, %v93
    %v2536 = vadd.f32 %v2534, 1e-08
    %v2537 = vadd.f32 %v2535, 1e-08
    %v2538 = vrsqrt.pop %v2536
    %v2539 = vrsqrt.pop %v2537
    %v2540 = vmul.f32 %v2512, %v2538
    %v2541 = vmul.f32 %v2513, %v2539
    %v2543 = vlaneseq
    %v2544 = vshrl.u32 %v2543, 7
    %v2545 = vsub.s32 0, %v2544
    %v2546 = vrot.slane %v2525, %v2545
    %v2548 = vmul.f32 %v2540, %v2546
    %v2549 = vmul.f32 %v2541, %v2546
    %s2550 = scalar_lea.vmem %s9, 64
    %v2551 = vld [vmem:[%s2550] sm:$0xff]
    %v2552 = vld [vmem:[%s2550 + $0x8] sm:$0xff]
    %v2553 = vld [vmem:[%s2550 + $0x10] sm:$0xff]
    %v2554 = vld [vmem:[%s2550 + $0x18] sm:$0xff]
    %v2555 = vld [vmem:[%s2550 + $0x20] sm:$0xff]
    %v2556 = vld [vmem:[%s2550 + $0x28] sm:$0xff]
    %v2557 = vld [vmem:[%s2550 + $0x30] sm:$0xff]
    %v2558 = vld [vmem:[%s2550 + $0x38] sm:$0xff]
    %v2560 = vsel %vm86, %v2548, 0
    %v2563 = vsel %vm86, %v2549, 0
    %2565 = vmatprep.subr.mxu0 0.0
    %2566 = vmatpush1.msra.mxu0 %v2551
    %2567 = vmatprep.subr.mxu0 0.0
    %2568 = vmatpush1.msra.mxu0 %v2552
    %2569 = vmatprep.subr.mxu0 0.0
    %2570 = vmatpush1.msra.mxu0 %v2553
    %2571 = vmatprep.subr.mxu0 0.0
    %2572 = vmatpush1.msra.mxu0 %v2554
    %2573 = vmatprep.subr.mxu0 0.0
    %2574 = vmatpush1.msra.mxu0 %v2555
    %2575 = vmatprep.subr.mxu0 0.0
    %2576 = vmatpush1.msra.mxu0 %v2556
    %2577 = vmatprep.subr.mxu0 0.0
    %2578 = vmatpush1.msra.mxu0 %v2557
    %2579 = vmatprep.subr.mxu0 0.0
    %2580 = vmatpush1.msra.mxu0 %v2558
    %2581 = vmatprep.subr.mxu0 0.0
    %2582 = vmatpush1.msra.mxu0 0.0
    %2583 = vmatprep.subr.mxu0 0.0
    %2584 = vmatpush1.msra.mxu0 0.0
    %2585 = vmatprep.subr.mxu0 0.0
    %2586 = vmatpush1.msra.mxu0 0.0
    %2587 = vmatprep.subr.mxu0 0.0
    %2588 = vmatpush1.msra.mxu0 0.0
    %2589 = vmatprep.subr.mxu0 0.0
    %2590 = vmatpush1.msra.mxu0 0.0
    %2591 = vmatprep.subr.mxu0 0.0
    %2592 = vmatpush1.msra.mxu0 0.0
    %2593 = vmatprep.subr.mxu0 0.0
    %2594 = vmatpush1.msra.mxu0 0.0
    %2595 = vmatprep.subr.mxu0 0.0
    %2596 = vmatpush1.msra.mxu0 0.0
    %2597 = vmatprep.subr.mxu0 0.0
    %2598 = vmatpush1.msra.mxu0 0.0
    %2599 = vmatprep.subr.mxu0 0.0
    %2600 = vmatpush1.msra.mxu0 0.0
    %2601 = vmatprep.subr.mxu0 0.0
    %2602 = vmatpush1.msra.mxu0 0.0
    %2603 = vmatprep.subr.mxu0 0.0
    %2604 = vmatpush1.msra.mxu0 0.0
    %2605 = vmatprep.subr.mxu0 0.0
    %2606 = vmatpush1.msra.mxu0 0.0
    %2607 = vmatprep.subr.mxu0 0.0
    %2608 = vmatpush1.msra.mxu0 0.0
    %2609 = vmatprep.subr.mxu0 0.0
    %2610 = vmatpush1.msra.mxu0 0.0
    %2611 = vmatprep.subr.mxu0 0.0
    %2612 = vmatpush1.msra.mxu0 0.0
    %2613 = vmatprep.subr.mxu0 0.0
    %2614 = vmatpush1.msra.mxu0 0.0
    %2615 = vmatprep.subr.mxu0 0.0
    %2616 = vmatpush1.msra.mxu0 0.0
    %2617 = vmatprep.subr.mxu0 0.0
    %2618 = vmatpush1.msra.mxu0 0.0
    %2619 = vmatprep.subr.mxu0 0.0
    %2620 = vmatpush1.msra.mxu0 0.0
    %2621 = vmatprep.subr.mxu0 0.0
    %2622 = vmatpush1.msra.mxu0 0.0
    %2623 = vmatprep.subr.mxu0 0.0
    %2624 = vmatpush1.msra.mxu0 0.0
    %2625 = vmatprep.subr.mxu0 0.0
    %2626 = vmatpush1.msra.mxu0 0.0
    %2627 = vmatprep.subr.mxu0 0.0
    %2628 = vmatpush1.msra.mxu0 0.0
    %2629 = vmatprep.mubr.f32.mxu0 0.0
    %2630 = vmatmul.mubr.f32.gmra.mrb[0].mxu0 %v2560
    %v2631 = vpop.f32.mrb[0].mxu0
    %v2632 = vadd.f32 0.0, %v2631
    %v2633 = vpop.f32.mrb[0].mxu0
    %2634 = vmatprep.mubr.f32.mxu0 0.0
    %2635 = vmatmul.mubr.f32.gmra.mrb[0].mxu0 %v2563
    %v2636 = vpop.f32.mrb[0].mxu0
    %v2637 = vadd.f32 0.0, %v2636
    %v2638 = vpop.f32.mrb[0].mxu0
    %2639 = vdwg.mxu0
    %s2640 = scalar_lea.vmem %s10, 64
    %v2641 = vld [vmem:[%s2640] sm:$0xff]
    %v2642 = vld [vmem:[%s2640 + $0x8] sm:$0xff]
    %v2643 = vld [vmem:[%s2640 + $0x10] sm:$0xff]
    %v2644 = vld [vmem:[%s2640 + $0x18] sm:$0xff]
    %v2645 = vld [vmem:[%s2640 + $0x20] sm:$0xff]
    %v2646 = vld [vmem:[%s2640 + $0x28] sm:$0xff]
    %v2647 = vld [vmem:[%s2640 + $0x30] sm:$0xff]
    %v2648 = vld [vmem:[%s2640 + $0x38] sm:$0xff]
    %2649 = vmatprep.subr.mxu0 0.0
    %2650 = vmatpush1.msra.mxu0 %v2641
    %2651 = vmatprep.subr.mxu0 0.0
    %2652 = vmatpush1.msra.mxu0 %v2642
    %2653 = vmatprep.subr.mxu0 0.0
    %2654 = vmatpush1.msra.mxu0 %v2643
    %2655 = vmatprep.subr.mxu0 0.0
    %2656 = vmatpush1.msra.mxu0 %v2644
    %2657 = vmatprep.subr.mxu0 0.0
    %2658 = vmatpush1.msra.mxu0 %v2645
    %2659 = vmatprep.subr.mxu0 0.0
    %2660 = vmatpush1.msra.mxu0 %v2646
    %2661 = vmatprep.subr.mxu0 0.0
    %2662 = vmatpush1.msra.mxu0 %v2647
    %2663 = vmatprep.subr.mxu0 0.0
    %2664 = vmatpush1.msra.mxu0 %v2648
    %2665 = vmatprep.subr.mxu0 0.0
    %2666 = vmatpush1.msra.mxu0 0.0
    %2667 = vmatprep.subr.mxu0 0.0
    %2668 = vmatpush1.msra.mxu0 0.0
    %2669 = vmatprep.subr.mxu0 0.0
    %2670 = vmatpush1.msra.mxu0 0.0
    %2671 = vmatprep.subr.mxu0 0.0
    %2672 = vmatpush1.msra.mxu0 0.0
    %2673 = vmatprep.subr.mxu0 0.0
    %2674 = vmatpush1.msra.mxu0 0.0
    %2675 = vmatprep.subr.mxu0 0.0
    %2676 = vmatpush1.msra.mxu0 0.0
    %2677 = vmatprep.subr.mxu0 0.0
    %2678 = vmatpush1.msra.mxu0 0.0
    %2679 = vmatprep.subr.mxu0 0.0
    %2680 = vmatpush1.msra.mxu0 0.0
    %2681 = vmatprep.subr.mxu0 0.0
    %2682 = vmatpush1.msra.mxu0 0.0
    %2683 = vmatprep.subr.mxu0 0.0
    %2684 = vmatpush1.msra.mxu0 0.0
    %2685 = vmatprep.subr.mxu0 0.0
    %2686 = vmatpush1.msra.mxu0 0.0
    %2687 = vmatprep.subr.mxu0 0.0
    %2688 = vmatpush1.msra.mxu0 0.0
    %2689 = vmatprep.subr.mxu0 0.0
    %2690 = vmatpush1.msra.mxu0 0.0
    %2691 = vmatprep.subr.mxu0 0.0
    %2692 = vmatpush1.msra.mxu0 0.0
    %2693 = vmatprep.subr.mxu0 0.0
    %2694 = vmatpush1.msra.mxu0 0.0
    %2695 = vmatprep.subr.mxu0 0.0
    %2696 = vmatpush1.msra.mxu0 0.0
    %2697 = vmatprep.subr.mxu0 0.0
    %2698 = vmatpush1.msra.mxu0 0.0
    %2699 = vmatprep.subr.mxu0 0.0
    %2700 = vmatpush1.msra.mxu0 0.0
    %2701 = vmatprep.subr.mxu0 0.0
    %2702 = vmatpush1.msra.mxu0 0.0
    %2703 = vmatprep.subr.mxu0 0.0
    %2704 = vmatpush1.msra.mxu0 0.0
    %2705 = vmatprep.subr.mxu0 0.0
    %2706 = vmatpush1.msra.mxu0 0.0
    %2707 = vmatprep.subr.mxu0 0.0
    %2708 = vmatpush1.msra.mxu0 0.0
    %2709 = vmatprep.subr.mxu0 0.0
    %2710 = vmatpush1.msra.mxu0 0.0
    %2711 = vmatprep.subr.mxu0 0.0
    %2712 = vmatpush1.msra.mxu0 0.0
    %2713 = vmatprep.mubr.f32.mxu0 0.0
    %2714 = vmatmul.mubr.f32.gmra.mrb[0].mxu0 %v922
    %v2715 = vpop.f32.mrb[0].mxu0
    %v2716 = vadd.f32 0.0, %v2715
    %v2717 = vpop.f32.mrb[0].mxu0
    %2718 = vmatprep.mubr.f32.mxu0 0.0
    %2719 = vmatmul.mubr.f32.gmra.mrb[0].mxu0 %v925
    %v2720 = vpop.f32.mrb[0].mxu0
    %v2721 = vadd.f32 0.0, %v2720
    %v2722 = vpop.f32.mrb[0].mxu0
    %2723 = vmatprep.mubr.f32.mxu0 0.0
    %2724 = vmatmul.mubr.f32.gmra.mrb[0].mxu0 %v928
    %v2725 = vpop.f32.mrb[0].mxu0
    %v2726 = vadd.f32 0.0, %v2725
    %v2727 = vpop.f32.mrb[0].mxu0
    %2728 = vmatprep.mubr.f32.mxu0 0.0
    %2729 = vmatmul.mubr.f32.gmra.mrb[0].mxu0 %v931
    %v2730 = vpop.f32.mrb[0].mxu0
    %v2731 = vadd.f32 0.0, %v2730
    %v2732 = vpop.f32.mrb[0].mxu0
    %2733 = vdwg.mxu0
    %v2735 = vsel %vm202, %v2632, 0
    %v2738 = vsel %vm202, %v2637, 0
    %v2741 = vsel %vm202, %v2716, 0
    %v2744 = vsel %vm202, %v2721, 0
    %v2747 = vsel %vm202, %v2726, 0
    %v2750 = vsel %vm202, %v2731, 0
    %2752 = vmatprep.subr.mxu0 0.0
    %2753 = vmatpush1.xpose.msra.mxu0 %v2741
    %2754 = vmatprep.subr.mxu0 0.0
    %2755 = vmatpush1.xpose.msra.mxu0 %v2744
    %2756 = vmatprep.subr.mxu0 0.0
    %2757 = vmatpush1.xpose.msra.mxu0 %v2747
    %2758 = vmatprep.subr.mxu0 0.0
    %2759 = vmatpush1.xpose.msra.mxu0 %v2750
    %2760 = vmatprep.subr.mxu0 0.0
    %2761 = vmatpush1.xpose.msra.mxu0 0.0
    %2762 = vmatprep.subr.mxu0 0.0
    %2763 = vmatpush1.xpose.msra.mxu0 0.0
    %2764 = vmatprep.subr.mxu0 0.0
    %2765 = vmatpush1.xpose.msra.mxu0 0.0
    %2766 = vmatprep.subr.mxu0 0.0
    %2767 = vmatpush1.xpose.msra.mxu0 0.0
    %2768 = vmatprep.subr.mxu0 0.0
    %2769 = vmatpush1.xpose.msra.mxu0 0.0
    %2770 = vmatprep.subr.mxu0 0.0
    %2771 = vmatpush1.xpose.msra.mxu0 0.0
    %2772 = vmatprep.subr.mxu0 0.0
    %2773 = vmatpush1.xpose.msra.mxu0 0.0
    %2774 = vmatprep.subr.mxu0 0.0
    %2775 = vmatpush1.xpose.msra.mxu0 0.0
    %2776 = vmatprep.subr.mxu0 0.0
    %2777 = vmatpush1.xpose.msra.mxu0 0.0
    %2778 = vmatprep.subr.mxu0 0.0
    %2779 = vmatpush1.xpose.msra.mxu0 0.0
    %2780 = vmatprep.subr.mxu0 0.0
    %2781 = vmatpush1.xpose.msra.mxu0 0.0
    %2782 = vmatprep.subr.mxu0 0.0
    %2783 = vmatpush1.xpose.msra.mxu0 0.0
    %2784 = vmatprep.subr.mxu0 0.0
    %2785 = vmatpush1.xpose.msra.mxu0 0.0
    %2786 = vmatprep.subr.mxu0 0.0
    %2787 = vmatpush1.xpose.msra.mxu0 0.0
    %2788 = vmatprep.subr.mxu0 0.0
    %2789 = vmatpush1.xpose.msra.mxu0 0.0
    %2790 = vmatprep.subr.mxu0 0.0
    %2791 = vmatpush1.xpose.msra.mxu0 0.0
    %2792 = vmatprep.subr.mxu0 0.0
    %2793 = vmatpush1.xpose.msra.mxu0 0.0
    %2794 = vmatprep.subr.mxu0 0.0
    %2795 = vmatpush1.xpose.msra.mxu0 0.0
    %2796 = vmatprep.subr.mxu0 0.0
    %2797 = vmatpush1.xpose.msra.mxu0 0.0
    %2798 = vmatprep.subr.mxu0 0.0
    %2799 = vmatpush1.xpose.msra.mxu0 0.0
    %2800 = vmatprep.subr.mxu0 0.0
    %2801 = vmatpush1.xpose.msra.mxu0 0.0
    %2802 = vmatprep.subr.mxu0 0.0
    %2803 = vmatpush1.xpose.msra.mxu0 0.0
    %2804 = vmatprep.subr.mxu0 0.0
    %2805 = vmatpush1.xpose.msra.mxu0 0.0
    %2806 = vmatprep.subr.mxu0 0.0
    %2807 = vmatpush1.xpose.msra.mxu0 0.0
    %2808 = vmatprep.subr.mxu0 0.0
    %2809 = vmatpush1.xpose.msra.mxu0 0.0
    %2810 = vmatprep.subr.mxu0 0.0
    %2811 = vmatpush1.xpose.msra.mxu0 0.0
    %2812 = vmatprep.subr.mxu0 0.0
    %2813 = vmatpush1.xpose.msra.mxu0 0.0
    %2814 = vmatprep.subr.mxu0 0.0
    %2815 = vmatpush1.xpose.msra.mxu0 0.0
    %2816 = vmatprep.mubr.f32.mxu0 0.0
    %2817 = vmatmul.mubr.f32.gmra.mrb[0].mxu0 %v2735
    %v2818 = vpop.f32.mrb[0].mxu0
    %v2819 = vadd.f32 0.0, %v2818
    %v2820 = vpop.f32.mrb[0].mxu0
    %2821 = vmatprep.mubr.f32.mxu0 0.0
    %2822 = vmatmul.mubr.f32.gmra.mrb[0].mxu0 %v2738
    %v2823 = vpop.f32.mrb[0].mxu0
    %v2824 = vadd.f32 0.0, %v2823
    %v2825 = vpop.f32.mrb[0].mxu0
    %2826 = vdwg.mxu0
    %v2827 = vmul.f32 %v2819, 0.25
    %v2828 = vmul.f32 %v2824, 0.25
    %v2829 = vadd.f32 %v2827, %v81
    %v2830 = vadd.f32 %v2828, %v82
    %v2831 = vsel %vm705, %v2829, -inf
    %2832 = vmax.xlane.f32.xlu0 %v2831
    %v2833 = vpop.xlane.xlu0 %2832
    %v2834 = vsel %vm705, %v2830, -inf
    %2835 = vmax.xlane.f32.xlu0 %v2834
    %v2836 = vpop.xlane.xlu0 %2835
    %v2837 = vsub.f32 %v2829, %v2833
    %v2838 = vsub.f32 %v2830, %v2836
    %v2839 = vmul.f32 %v2837, 1.442695
    %v2840 = vpow.pop %v2839
    %v2841 = vmul.f32 %v2838, 1.442695
    %v2842 = vpow.pop %v2841
    %v2843 = vsel %vm705, %v2840, 0.0
    %2844 = vadd.xlane.f32.xlu0 %v2843
    %v2845 = vpop.xlane.xlu0 %2844
    %v2846 = vsel %vm705, %v2842, 0.0
    %2847 = vadd.xlane.f32.xlu0 %v2846
    %v2848 = vpop.xlane.xlu0 %2847
    %v2849 = vrcp.pop %v2845
    %v2850 = vrcp.pop %v2848
    %v2851 = vmul.f32 %v2840, %v2849
    %v2852 = vmul.f32 %v2842, %v2850
    %2853 = vrot.lane.b32.xlu0 %v2716, 96
    %v2854 = vpop.permute.xlu0 %2853
    %2855 = vrot.lane.b32.xlu0 %v2721, 96
    %v2856 = vpop.permute.xlu0 %2855
    %2857 = vrot.lane.b32.xlu0 %v2726, 96
    %v2858 = vpop.permute.xlu0 %2857
    %2859 = vrot.lane.b32.xlu0 %v2731, 96
    %v2860 = vpop.permute.xlu0 %2859
    %v2866 = vsel %vm705, %v2851, 0
    %v2869 = vsel %vm705, %v2852, 0
    %2871 = vmatprep.subr.mxu0 0.0
    %2872 = vmatpush1.msra.mxu0 %v2854
    %2873 = vmatprep.subr.mxu0 0.0
    %2874 = vmatpush1.msra.mxu0 %v2856
    %2875 = vmatprep.subr.mxu0 0.0
    %2876 = vmatpush1.msra.mxu0 %v2858
    %2877 = vmatprep.subr.mxu0 0.0
    %2878 = vmatpush1.msra.mxu0 %v2860
    %2879 = vmatprep.subr.mxu0 0.0
    %2880 = vmatpush1.msra.mxu0 0.0
    %2881 = vmatprep.subr.mxu0 0.0
    %2882 = vmatpush1.msra.mxu0 0.0
    %2883 = vmatprep.subr.mxu0 0.0
    %2884 = vmatpush1.msra.mxu0 0.0
    %2885 = vmatprep.subr.mxu0 0.0
    %2886 = vmatpush1.msra.mxu0 0.0
    %2887 = vmatprep.subr.mxu0 0.0
    %2888 = vmatpush1.msra.mxu0 0.0
    %2889 = vmatprep.subr.mxu0 0.0
    %2890 = vmatpush1.msra.mxu0 0.0
    %2891 = vmatprep.subr.mxu0 0.0
    %2892 = vmatpush1.msra.mxu0 0.0
    %2893 = vmatprep.subr.mxu0 0.0
    %2894 = vmatpush1.msra.mxu0 0.0
    %2895 = vmatprep.subr.mxu0 0.0
    %2896 = vmatpush1.msra.mxu0 0.0
    %2897 = vmatprep.subr.mxu0 0.0
    %2898 = vmatpush1.msra.mxu0 0.0
    %2899 = vmatprep.subr.mxu0 0.0
    %2900 = vmatpush1.msra.mxu0 0.0
    %2901 = vmatprep.subr.mxu0 0.0
    %2902 = vmatpush1.msra.mxu0 0.0
    %2903 = vmatprep.subr.mxu0 0.0
    %2904 = vmatpush1.msra.mxu0 0.0
    %2905 = vmatprep.subr.mxu0 0.0
    %2906 = vmatpush1.msra.mxu0 0.0
    %2907 = vmatprep.subr.mxu0 0.0
    %2908 = vmatpush1.msra.mxu0 0.0
    %2909 = vmatprep.subr.mxu0 0.0
    %2910 = vmatpush1.msra.mxu0 0.0
    %2911 = vmatprep.subr.mxu0 0.0
    %2912 = vmatpush1.msra.mxu0 0.0
    %2913 = vmatprep.subr.mxu0 0.0
    %2914 = vmatpush1.msra.mxu0 0.0
    %2915 = vmatprep.subr.mxu0 0.0
    %2916 = vmatpush1.msra.mxu0 0.0
    %2917 = vmatprep.subr.mxu0 0.0
    %2918 = vmatpush1.msra.mxu0 0.0
    %2919 = vmatprep.subr.mxu0 0.0
    %2920 = vmatpush1.msra.mxu0 0.0
    %2921 = vmatprep.subr.mxu0 0.0
    %2922 = vmatpush1.msra.mxu0 0.0
    %2923 = vmatprep.subr.mxu0 0.0
    %2924 = vmatpush1.msra.mxu0 0.0
    %2925 = vmatprep.subr.mxu0 0.0
    %2926 = vmatpush1.msra.mxu0 0.0
    %2927 = vmatprep.subr.mxu0 0.0
    %2928 = vmatpush1.msra.mxu0 0.0
    %2929 = vmatprep.subr.mxu0 0.0
    %2930 = vmatpush1.msra.mxu0 0.0
    %2931 = vmatprep.subr.mxu0 0.0
    %2932 = vmatpush1.msra.mxu0 0.0
    %2933 = vmatprep.subr.mxu0 0.0
    %2934 = vmatpush1.msra.mxu0 0.0
    %2935 = vmatprep.mubr.f32.mxu0 0.0
    %2936 = vmatmul.mubr.f32.gmra.mrb[0].mxu0 %v2866
    %v2937 = vpop.f32.mrb[0].mxu0
    %v2938 = vadd.f32 0.0, %v2937
    %v2939 = vpop.f32.mrb[0].mxu0
    %2940 = vmatprep.mubr.f32.mxu0 0.0
    %2941 = vmatmul.mubr.f32.gmra.mrb[0].mxu0 %v2869
    %v2942 = vpop.f32.mrb[0].mxu0
    %v2943 = vadd.f32 0.0, %v2942
    %v2944 = vpop.f32.mrb[0].mxu0
    %2945 = vdwg.mxu0
    %2946 = vrot.lane.b32.xlu0 %v2632, 112
    %v2947 = vpop.permute.xlu0 %2946
    %2948 = vrot.lane.b32.xlu0 %v2637, 112
    %v2949 = vpop.permute.xlu0 %2948
    %2950 = vrot.lane.b32.xlu0 %v2716, 112
    %v2951 = vpop.permute.xlu0 %2950
    %2952 = vrot.lane.b32.xlu0 %v2721, 112
    %v2953 = vpop.permute.xlu0 %2952
    %2954 = vrot.lane.b32.xlu0 %v2726, 112
    %v2955 = vpop.permute.xlu0 %2954
    %2956 = vrot.lane.b32.xlu0 %v2731, 112
    %v2957 = vpop.permute.xlu0 %2956
    %v2958 = vsel %vm202, %v2947, 0
    %v2960 = vsel %vm202, %v2949, 0
    %v2962 = vsel %vm202, %v2951, 0
    %v2964 = vsel %vm202, %v2953, 0
    %v2966 = vsel %vm202, %v2955, 0
    %v2968 = vsel %vm202, %v2957, 0
    %2970 = vmatprep.subr.mxu0 0.0
    %2971 = vmatpush1.xpose.msra.mxu0 %v2962
    %2972 = vmatprep.subr.mxu0 0.0
    %2973 = vmatpush1.xpose.msra.mxu0 %v2964
    %2974 = vmatprep.subr.mxu0 0.0
    %2975 = vmatpush1.xpose.msra.mxu0 %v2966
    %2976 = vmatprep.subr.mxu0 0.0
    %2977 = vmatpush1.xpose.msra.mxu0 %v2968
    %2978 = vmatprep.subr.mxu0 0.0
    %2979 = vmatpush1.xpose.msra.mxu0 0.0
    %2980 = vmatprep.subr.mxu0 0.0
    %2981 = vmatpush1.xpose.msra.mxu0 0.0
    %2982 = vmatprep.subr.mxu0 0.0
    %2983 = vmatpush1.xpose.msra.mxu0 0.0
    %2984 = vmatprep.subr.mxu0 0.0
    %2985 = vmatpush1.xpose.msra.mxu0 0.0
    %2986 = vmatprep.subr.mxu0 0.0
    %2987 = vmatpush1.xpose.msra.mxu0 0.0
    %2988 = vmatprep.subr.mxu0 0.0
    %2989 = vmatpush1.xpose.msra.mxu0 0.0
    %2990 = vmatprep.subr.mxu0 0.0
    %2991 = vmatpush1.xpose.msra.mxu0 0.0
    %2992 = vmatprep.subr.mxu0 0.0
    %2993 = vmatpush1.xpose.msra.mxu0 0.0
    %2994 = vmatprep.subr.mxu0 0.0
    %2995 = vmatpush1.xpose.msra.mxu0 0.0
    %2996 = vmatprep.subr.mxu0 0.0
    %2997 = vmatpush1.xpose.msra.mxu0 0.0
    %2998 = vmatprep.subr.mxu0 0.0
    %2999 = vmatpush1.xpose.msra.mxu0 0.0
    %3000 = vmatprep.subr.mxu0 0.0
    %3001 = vmatpush1.xpose.msra.mxu0 0.0
    %3002 = vmatprep.subr.mxu0 0.0
    %3003 = vmatpush1.xpose.msra.mxu0 0.0
    %3004 = vmatprep.subr.mxu0 0.0
    %3005 = vmatpush1.xpose.msra.mxu0 0.0
    %3006 = vmatprep.subr.mxu0 0.0
    %3007 = vmatpush1.xpose.msra.mxu0 0.0
    %3008 = vmatprep.subr.mxu0 0.0
    %3009 = vmatpush1.xpose.msra.mxu0 0.0
    %3010 = vmatprep.subr.mxu0 0.0
    %3011 = vmatpush1.xpose.msra.mxu0 0.0
    %3012 = vmatprep.subr.mxu0 0.0
    %3013 = vmatpush1.xpose.msra.mxu0 0.0
    %3014 = vmatprep.subr.mxu0 0.0
    %3015 = vmatpush1.xpose.msra.mxu0 0.0
    %3016 = vmatprep.subr.mxu0 0.0
    %3017 = vmatpush1.xpose.msra.mxu0 0.0
    %3018 = vmatprep.subr.mxu0 0.0
    %3019 = vmatpush1.xpose.msra.mxu0 0.0
    %3020 = vmatprep.subr.mxu0 0.0
    %3021 = vmatpush1.xpose.msra.mxu0 0.0
    %3022 = vmatprep.subr.mxu0 0.0
    %3023 = vmatpush1.xpose.msra.mxu0 0.0
    %3024 = vmatprep.subr.mxu0 0.0
    %3025 = vmatpush1.xpose.msra.mxu0 0.0
    %3026 = vmatprep.subr.mxu0 0.0
    %3027 = vmatpush1.xpose.msra.mxu0 0.0
    %3028 = vmatprep.subr.mxu0 0.0
    %3029 = vmatpush1.xpose.msra.mxu0 0.0
    %3030 = vmatprep.subr.mxu0 0.0
    %3031 = vmatpush1.xpose.msra.mxu0 0.0
    %3032 = vmatprep.subr.mxu0 0.0
    %3033 = vmatpush1.xpose.msra.mxu0 0.0
    %3034 = vmatprep.mubr.f32.mxu0 0.0
    %3035 = vmatmul.mubr.f32.gmra.mrb[0].mxu0 %v2958
    %v3036 = vpop.f32.mrb[0].mxu0
    %v3037 = vadd.f32 0.0, %v3036
    %v3038 = vpop.f32.mrb[0].mxu0
    %3039 = vmatprep.mubr.f32.mxu0 0.0
    %3040 = vmatmul.mubr.f32.gmra.mrb[0].mxu0 %v2960
    %v3041 = vpop.f32.mrb[0].mxu0
    %v3042 = vadd.f32 0.0, %v3041
    %v3043 = vpop.f32.mrb[0].mxu0
    %3044 = vdwg.mxu0
    %v3045 = vmul.f32 %v3037, 0.25
    %v3046 = vmul.f32 %v3042, 0.25
    %v3047 = vadd.f32 %v3045, %v81
    %v3048 = vadd.f32 %v3046, %v82
    %v3049 = vsel %vm705, %v3047, -inf
    %3050 = vmax.xlane.f32.xlu0 %v3049
    %v3051 = vpop.xlane.xlu0 %3050
    %v3052 = vsel %vm705, %v3048, -inf
    %3053 = vmax.xlane.f32.xlu0 %v3052
    %v3054 = vpop.xlane.xlu0 %3053
    %v3055 = vsub.f32 %v3047, %v3051
    %v3056 = vsub.f32 %v3048, %v3054
    %v3057 = vmul.f32 %v3055, 1.442695
    %v3058 = vpow.pop %v3057
    %v3059 = vmul.f32 %v3056, 1.442695
    %v3060 = vpow.pop %v3059
    %v3061 = vsel %vm705, %v3058, 0.0
    %3062 = vadd.xlane.f32.xlu0 %v3061
    %v3063 = vpop.xlane.xlu0 %3062
    %v3064 = vsel %vm705, %v3060, 0.0
    %3065 = vadd.xlane.f32.xlu0 %v3064
    %v3066 = vpop.xlane.xlu0 %3065
    %v3067 = vrcp.pop %v3063
    %v3068 = vrcp.pop %v3066
    %v3069 = vmul.f32 %v3058, %v3067
    %v3070 = vmul.f32 %v3060, %v3068
    %3071 = vrot.lane.b32.xlu0 %v2716, 80
    %v3072 = vpop.permute.xlu0 %3071
    %3073 = vrot.lane.b32.xlu0 %v2721, 80
    %v3074 = vpop.permute.xlu0 %3073
    %3075 = vrot.lane.b32.xlu0 %v2726, 80
    %v3076 = vpop.permute.xlu0 %3075
    %3077 = vrot.lane.b32.xlu0 %v2731, 80
    %v3078 = vpop.permute.xlu0 %3077
    %v3084 = vsel %vm705, %v3069, 0
    %v3087 = vsel %vm705, %v3070, 0
    %3089 = vmatprep.subr.mxu0 0.0
    %3090 = vmatpush1.msra.mxu0 %v3072
    %3091 = vmatprep.subr.mxu0 0.0
    %3092 = vmatpush1.msra.mxu0 %v3074
    %3093 = vmatprep.subr.mxu0 0.0
    %3094 = vmatpush1.msra.mxu0 %v3076
    %3095 = vmatprep.subr.mxu0 0.0
    %3096 = vmatpush1.msra.mxu0 %v3078
    %3097 = vmatprep.subr.mxu0 0.0
    %3098 = vmatpush1.msra.mxu0 0.0
    %3099 = vmatprep.subr.mxu0 0.0
    %3100 = vmatpush1.msra.mxu0 0.0
    %3101 = vmatprep.subr.mxu0 0.0
    %3102 = vmatpush1.msra.mxu0 0.0
    %3103 = vmatprep.subr.mxu0 0.0
    %3104 = vmatpush1.msra.mxu0 0.0
    %3105 = vmatprep.subr.mxu0 0.0
    %3106 = vmatpush1.msra.mxu0 0.0
    %3107 = vmatprep.subr.mxu0 0.0
    %3108 = vmatpush1.msra.mxu0 0.0
    %3109 = vmatprep.subr.mxu0 0.0
    %3110 = vmatpush1.msra.mxu0 0.0
    %3111 = vmatprep.subr.mxu0 0.0
    %3112 = vmatpush1.msra.mxu0 0.0
    %3113 = vmatprep.subr.mxu0 0.0
    %3114 = vmatpush1.msra.mxu0 0.0
    %3115 = vmatprep.subr.mxu0 0.0
    %3116 = vmatpush1.msra.mxu0 0.0
    %3117 = vmatprep.subr.mxu0 0.0
    %3118 = vmatpush1.msra.mxu0 0.0
    %3119 = vmatprep.subr.mxu0 0.0
    %3120 = vmatpush1.msra.mxu0 0.0
    %3121 = vmatprep.subr.mxu0 0.0
    %3122 = vmatpush1.msra.mxu0 0.0
    %3123 = vmatprep.subr.mxu0 0.0
    %3124 = vmatpush1.msra.mxu0 0.0
    %3125 = vmatprep.subr.mxu0 0.0
    %3126 = vmatpush1.msra.mxu0 0.0
    %3127 = vmatprep.subr.mxu0 0.0
    %3128 = vmatpush1.msra.mxu0 0.0
    %3129 = vmatprep.subr.mxu0 0.0
    %3130 = vmatpush1.msra.mxu0 0.0
    %3131 = vmatprep.subr.mxu0 0.0
    %3132 = vmatpush1.msra.mxu0 0.0
    %3133 = vmatprep.subr.mxu0 0.0
    %3134 = vmatpush1.msra.mxu0 0.0
    %3135 = vmatprep.subr.mxu0 0.0
    %3136 = vmatpush1.msra.mxu0 0.0
    %3137 = vmatprep.subr.mxu0 0.0
    %3138 = vmatpush1.msra.mxu0 0.0
    %3139 = vmatprep.subr.mxu0 0.0
    %3140 = vmatpush1.msra.mxu0 0.0
    %3141 = vmatprep.subr.mxu0 0.0
    %3142 = vmatpush1.msra.mxu0 0.0
    %3143 = vmatprep.subr.mxu0 0.0
    %3144 = vmatpush1.msra.mxu0 0.0
    %3145 = vmatprep.subr.mxu0 0.0
    %3146 = vmatpush1.msra.mxu0 0.0
    %3147 = vmatprep.subr.mxu0 0.0
    %3148 = vmatpush1.msra.mxu0 0.0
    %3149 = vmatprep.subr.mxu0 0.0
    %3150 = vmatpush1.msra.mxu0 0.0
    %3151 = vmatprep.subr.mxu0 0.0
    %3152 = vmatpush1.msra.mxu0 0.0
    %3153 = vmatprep.mubr.f32.mxu0 0.0
    %3154 = vmatmul.mubr.f32.gmra.mrb[0].mxu0 %v3084
    %v3155 = vpop.f32.mrb[0].mxu0
    %v3156 = vadd.f32 0.0, %v3155
    %v3157 = vpop.f32.mrb[0].mxu0
    %3158 = vmatprep.mubr.f32.mxu0 0.0
    %3159 = vmatmul.mubr.f32.gmra.mrb[0].mxu0 %v3087
    %v3160 = vpop.f32.mrb[0].mxu0
    %v3161 = vadd.f32 0.0, %v3160
    %v3162 = vpop.f32.mrb[0].mxu0
    %3163 = vdwg.mxu0
    %3166 = vrot.lane.b32.xlu0 %v3156, 16
    %v3167 = vpop.permute.xlu0 %3166
    %3168 = vrot.lane.b32.xlu0 %v3161, 16
    %v3169 = vpop.permute.xlu0 %3168
    %v3172 = vsel %vm202, %v2938, %v3167
    %v3173 = vsel %vm202, %v2943, %v3169
    %s3174 = scalar_lea.vmem %s11, 32
    %v3175 = vld [vmem:[%s3174] sm:$0xff]
    %v3176 = vld [vmem:[%s3174 + $0x8] sm:$0xff]
    %v3177 = vld [vmem:[%s3174 + $0x10] sm:$0xff]
    %v3178 = vld [vmem:[%s3174 + $0x18] sm:$0xff]
    %v3180 = vsel %vm705, %v3172, 0
    %v3183 = vsel %vm705, %v3173, 0
    %3185 = vmatprep.subr.mxu0 0.0
    %3186 = vmatpush1.msra.mxu0 %v3175
    %3187 = vmatprep.subr.mxu0 0.0
    %3188 = vmatpush1.msra.mxu0 %v3176
    %3189 = vmatprep.subr.mxu0 0.0
    %3190 = vmatpush1.msra.mxu0 %v3177
    %3191 = vmatprep.subr.mxu0 0.0
    %3192 = vmatpush1.msra.mxu0 %v3178
    %3193 = vmatprep.subr.mxu0 0.0
    %3194 = vmatpush1.msra.mxu0 0.0
    %3195 = vmatprep.subr.mxu0 0.0
    %3196 = vmatpush1.msra.mxu0 0.0
    %3197 = vmatprep.subr.mxu0 0.0
    %3198 = vmatpush1.msra.mxu0 0.0
    %3199 = vmatprep.subr.mxu0 0.0
    %3200 = vmatpush1.msra.mxu0 0.0
    %3201 = vmatprep.subr.mxu0 0.0
    %3202 = vmatpush1.msra.mxu0 0.0
    %3203 = vmatprep.subr.mxu0 0.0
    %3204 = vmatpush1.msra.mxu0 0.0
    %3205 = vmatprep.subr.mxu0 0.0
    %3206 = vmatpush1.msra.mxu0 0.0
    %3207 = vmatprep.subr.mxu0 0.0
    %3208 = vmatpush1.msra.mxu0 0.0
    %3209 = vmatprep.subr.mxu0 0.0
    %3210 = vmatpush1.msra.mxu0 0.0
    %3211 = vmatprep.subr.mxu0 0.0
    %3212 = vmatpush1.msra.mxu0 0.0
    %3213 = vmatprep.subr.mxu0 0.0
    %3214 = vmatpush1.msra.mxu0 0.0
    %3215 = vmatprep.subr.mxu0 0.0
    %3216 = vmatpush1.msra.mxu0 0.0
    %3217 = vmatprep.subr.mxu0 0.0
    %3218 = vmatpush1.msra.mxu0 0.0
    %3219 = vmatprep.subr.mxu0 0.0
    %3220 = vmatpush1.msra.mxu0 0.0
    %3221 = vmatprep.subr.mxu0 0.0
    %3222 = vmatpush1.msra.mxu0 0.0
    %3223 = vmatprep.subr.mxu0 0.0
    %3224 = vmatpush1.msra.mxu0 0.0
    %3225 = vmatprep.subr.mxu0 0.0
    %3226 = vmatpush1.msra.mxu0 0.0
    %3227 = vmatprep.subr.mxu0 0.0
    %3228 = vmatpush1.msra.mxu0 0.0
    %3229 = vmatprep.subr.mxu0 0.0
    %3230 = vmatpush1.msra.mxu0 0.0
    %3231 = vmatprep.subr.mxu0 0.0
    %3232 = vmatpush1.msra.mxu0 0.0
    %3233 = vmatprep.subr.mxu0 0.0
    %3234 = vmatpush1.msra.mxu0 0.0
    %3235 = vmatprep.subr.mxu0 0.0
    %3236 = vmatpush1.msra.mxu0 0.0
    %3237 = vmatprep.subr.mxu0 0.0
    %3238 = vmatpush1.msra.mxu0 0.0
    %3239 = vmatprep.subr.mxu0 0.0
    %3240 = vmatpush1.msra.mxu0 0.0
    %3241 = vmatprep.subr.mxu0 0.0
    %3242 = vmatpush1.msra.mxu0 0.0
    %3243 = vmatprep.subr.mxu0 0.0
    %3244 = vmatpush1.msra.mxu0 0.0
    %3245 = vmatprep.subr.mxu0 0.0
    %3246 = vmatpush1.msra.mxu0 0.0
    %3247 = vmatprep.subr.mxu0 0.0
    %3248 = vmatpush1.msra.mxu0 0.0
    %3249 = vmatprep.mubr.f32.mxu0 0.0
    %3250 = vmatmul.mubr.f32.gmra.mrb[0].mxu0 %v3180
    %v3251 = vpop.f32.mrb[0].mxu0
    %v3252 = vadd.f32 0.0, %v3251
    %v3253 = vpop.f32.mrb[0].mxu0
    %3254 = vmatprep.mubr.f32.mxu0 0.0
    %3255 = vmatmul.mubr.f32.gmra.mrb[0].mxu0 %v3183
    %v3256 = vpop.f32.mrb[0].mxu0
    %v3257 = vadd.f32 0.0, %v3256
    %v3258 = vpop.f32.mrb[0].mxu0
    %3259 = vdwg.mxu0
    %v3260 = vadd.f32 %v2512, %v3252
    %v3261 = vadd.f32 %v2513, %v3257
    %s3262 = scalar_lea.vmem %s12, 1
    %v3263 = vld [vmem:[%s3262] sm:$0x1]
    %v3264 = vmul.f32 %v3260, %v3260
    %v3265 = vmul.f32 %v3261, %v3261
    %v3266 = vsel %vm86, %v3264, 0.0
    %3267 = vadd.xlane.f32.xlu0 %v3266
    %v3268 = vpop.xlane.xlu0 %3267
    %v3269 = vsel %vm86, %v3265, 0.0
    %3270 = vadd.xlane.f32.xlu0 %v3269
    %v3271 = vpop.xlane.xlu0 %3270
    %v3272 = vmul.f32 %v3268, %v93
    %v3273 = vmul.f32 %v3271, %v93
    %v3274 = vadd.f32 %v3272, 1e-08
    %v3275 = vadd.f32 %v3273, 1e-08
    %v3276 = vrsqrt.pop %v3274
    %v3277 = vrsqrt.pop %v3275
    %v3278 = vmul.f32 %v3260, %v3276
    %v3279 = vmul.f32 %v3261, %v3277
    %v3281 = vlaneseq
    %v3282 = vshrl.u32 %v3281, 7
    %v3283 = vsub.s32 0, %v3282
    %v3284 = vrot.slane %v3263, %v3283
    %v3286 = vmul.f32 %v3278, %v3284
    %v3287 = vmul.f32 %v3279, %v3284
    %s3288 = scalar_lea.vmem %s13, 128
    %v3289 = vld [vmem:[%s3288] sm:$0xff]
    %v3290 = vld [vmem:[%s3288 + $0x8] sm:$0xff]
    %v3291 = vld [vmem:[%s3288 + $0x10] sm:$0xff]
    %v3292 = vld [vmem:[%s3288 + $0x18] sm:$0xff]
    %v3293 = vld [vmem:[%s3288 + $0x20] sm:$0xff]
    %v3294 = vld [vmem:[%s3288 + $0x28] sm:$0xff]
    %v3295 = vld [vmem:[%s3288 + $0x30] sm:$0xff]
    %v3296 = vld [vmem:[%s3288 + $0x38] sm:$0xff]
    %v3297 = vld [vmem:[%s3288 + $0x40] sm:$0xff]
    %v3298 = vld [vmem:[%s3288 + $0x48] sm:$0xff]
    %v3299 = vld [vmem:[%s3288 + $0x50] sm:$0xff]
    %v3300 = vld [vmem:[%s3288 + $0x58] sm:$0xff]
    %v3301 = vld [vmem:[%s3288 + $0x60] sm:$0xff]
    %v3302 = vld [vmem:[%s3288 + $0x68] sm:$0xff]
    %v3303 = vld [vmem:[%s3288 + $0x70] sm:$0xff]
    %v3304 = vld [vmem:[%s3288 + $0x78] sm:$0xff]
    %v3306 = vsel %vm86, %v3286, 0
    %v3309 = vsel %vm86, %v3287, 0
    %3311 = vmatprep.subr.mxu0 %v3290
    %3312 = vmatpush1.msra.mxu0 %v3289
    %3313 = vmatprep.subr.mxu0 %v3292
    %3314 = vmatpush1.msra.mxu0 %v3291
    %3315 = vmatprep.subr.mxu0 %v3294
    %3316 = vmatpush1.msra.mxu0 %v3293
    %3317 = vmatprep.subr.mxu0 %v3296
    %3318 = vmatpush1.msra.mxu0 %v3295
    %3319 = vmatprep.subr.mxu0 %v3298
    %3320 = vmatpush1.msra.mxu0 %v3297
    %3321 = vmatprep.subr.mxu0 %v3300
    %3322 = vmatpush1.msra.mxu0 %v3299
    %3323 = vmatprep.subr.mxu0 %v3302
    %3324 = vmatpush1.msra.mxu0 %v3301
    %3325 = vmatprep.subr.mxu0 %v3304
    %3326 = vmatpush1.msra.mxu0 %v3303
    %3327 = vmatprep.subr.mxu0 0.0
    %3328 = vmatpush1.msra.mxu0 0.0
    %3329 = vmatprep.subr.mxu0 0.0
    %3330 = vmatpush1.msra.mxu0 0.0
    %3331 = vmatprep.subr.mxu0 0.0
    %3332 = vmatpush1.msra.mxu0 0.0
    %3333 = vmatprep.subr.mxu0 0.0
    %3334 = vmatpush1.msra.mxu0 0.0
    %3335 = vmatprep.subr.mxu0 0.0
    %3336 = vmatpush1.msra.mxu0 0.0
    %3337 = vmatprep.subr.mxu0 0.0
    %3338 = vmatpush1.msra.mxu0 0.0
    %3339 = vmatprep.subr.mxu0 0.0
    %3340 = vmatpush1.msra.mxu0 0.0
    %3341 = vmatprep.subr.mxu0 0.0
    %3342 = vmatpush1.msra.mxu0 0.0
    %3343 = vmatprep.subr.mxu0 0.0
    %3344 = vmatpush1.msra.mxu0 0.0
    %3345 = vmatprep.subr.mxu0 0.0
    %3346 = vmatpush1.msra.mxu0 0.0
    %3347 = vmatprep.subr.mxu0 0.0
    %3348 = vmatpush1.msra.mxu0 0.0
    %3349 = vmatprep.subr.mxu0 0.0
    %3350 = vmatpush1.msra.mxu0 0.0
    %3351 = vmatprep.subr.mxu0 0.0
    %3352 = vmatpush1.msra.mxu0 0.0
    %3353 = vmatprep.subr.mxu0 0.0
    %3354 = vmatpush1.msra.mxu0 0.0
    %3355 = vmatprep.subr.mxu0 0.0
    %3356 = vmatpush1.msra.mxu0 0.0
    %3357 = vmatprep.subr.mxu0 0.0
    %3358 = vmatpush1.msra.mxu0 0.0
    %3359 = vmatprep.subr.mxu0 0.0
    %3360 = vmatpush1.msra.mxu0 0.0
    %3361 = vmatprep.subr.mxu0 0.0
    %3362 = vmatpush1.msra.mxu0 0.0
    %3363 = vmatprep.subr.mxu0 0.0
    %3364 = vmatpush1.msra.mxu0 0.0
    %3365 = vmatprep.subr.mxu0 0.0
    %3366 = vmatpush1.msra.mxu0 0.0
    %3367 = vmatprep.subr.mxu0 0.0
    %3368 = vmatpush1.msra.mxu0 0.0
    %3369 = vmatprep.subr.mxu0 0.0
    %3370 = vmatpush1.msra.mxu0 0.0
    %3371 = vmatprep.subr.mxu0 0.0
    %3372 = vmatpush1.msra.mxu0 0.0
    %3373 = vmatprep.subr.mxu0 0.0
    %3374 = vmatpush1.msra.mxu0 0.0
    %3375 = vmatprep.mubr.f32.mxu0 0.0
    %3376 = vmatmul.mubr.f32.gmra.mrb[0].mxu0 %v3306
    %v3377 = vpop.f32.mrb[0].mxu0
    %v3378 = vadd.f32 0.0, %v3377
    %v3379 = vpop.f32.mrb[0].mxu0
    %v3380 = vadd.f32 0.0, %v3379
    %3381 = vmatprep.mubr.f32.mxu0 0.0
    %3382 = vmatmul.mubr.f32.gmra.mrb[0].mxu0 %v3309
    %v3383 = vpop.f32.mrb[0].mxu0
    %v3384 = vadd.f32 0.0, %v3383
    %v3385 = vpop.f32.mrb[0].mxu0
    %v3386 = vadd.f32 0.0, %v3385
    %3387 = vdwg.mxu0
    %v3388 = vmul.f32 %v3378, %v3378
    %v3389 = vmul.f32 %v3380, %v3380
    %v3390 = vmul.f32 %v3384, %v3384
    %v3391 = vmul.f32 %v3386, %v3386
    %v3392 = vmul.f32 %v3378, %v3388
    %v3393 = vmul.f32 %v3380, %v3389
    %v3394 = vmul.f32 %v3384, %v3390
    %v3395 = vmul.f32 %v3386, %v3391
    %v3396 = vmul.f32 %v3392, 0.044715
    %v3397 = vmul.f32 %v3393, 0.044715
    %v3398 = vmul.f32 %v3394, 0.044715
    %v3399 = vmul.f32 %v3395, 0.044715
    %v3400 = vadd.f32 %v3378, %v3396
    %v3401 = vadd.f32 %v3380, %v3397
    %v3402 = vadd.f32 %v3384, %v3398
    %v3403 = vadd.f32 %v3386, %v3399
    %v3404 = vmul.f32 %v3400, 0.7978846
    %v3405 = vmul.f32 %v3401, 0.7978846
    %v3406 = vmul.f32 %v3402, 0.7978846
    %v3407 = vmul.f32 %v3403, 0.7978846
    %v3408 = vtanh.pop %v3404
    %v3409 = vtanh.pop %v3405
    %v3410 = vtanh.pop %v3406
    %v3411 = vtanh.pop %v3407
    %v3412 = vadd.f32 %v3408, 1.0
    %v3413 = vadd.f32 %v3409, 1.0
    %v3414 = vadd.f32 %v3410, 1.0
    %v3415 = vadd.f32 %v3411, 1.0
    %v3416 = vmul.f32 %v3412, 0.5
    %v3417 = vmul.f32 %v3413, 0.5
    %v3418 = vmul.f32 %v3414, 0.5
    %v3419 = vmul.f32 %v3415, 0.5
    %v3420 = vmul.f32 %v3378, %v3416
    %v3421 = vmul.f32 %v3380, %v3417
    %v3422 = vmul.f32 %v3384, %v3418
    %v3423 = vmul.f32 %v3386, %v3419
    %s3424 = scalar_lea.vmem %s14, 256
    %v3425 = vld [vmem:[%s3424] sm:$0xff]
    %v3426 = vld [vmem:[%s3424 + $0x8] sm:$0xff]
    %v3427 = vld [vmem:[%s3424 + $0x10] sm:$0xff]
    %v3428 = vld [vmem:[%s3424 + $0x18] sm:$0xff]
    %v3429 = vld [vmem:[%s3424 + $0x20] sm:$0xff]
    %v3430 = vld [vmem:[%s3424 + $0x28] sm:$0xff]
    %v3431 = vld [vmem:[%s3424 + $0x30] sm:$0xff]
    %v3432 = vld [vmem:[%s3424 + $0x38] sm:$0xff]
    %v3433 = vld [vmem:[%s3424 + $0x40] sm:$0xff]
    %v3434 = vld [vmem:[%s3424 + $0x48] sm:$0xff]
    %v3435 = vld [vmem:[%s3424 + $0x50] sm:$0xff]
    %v3436 = vld [vmem:[%s3424 + $0x58] sm:$0xff]
    %v3437 = vld [vmem:[%s3424 + $0x60] sm:$0xff]
    %v3438 = vld [vmem:[%s3424 + $0x68] sm:$0xff]
    %v3439 = vld [vmem:[%s3424 + $0x70] sm:$0xff]
    %v3440 = vld [vmem:[%s3424 + $0x78] sm:$0xff]
    %v3441 = vld [vmem:[%s3424 + $0x80] sm:$0xff]
    %v3442 = vld [vmem:[%s3424 + $0x88] sm:$0xff]
    %v3443 = vld [vmem:[%s3424 + $0x90] sm:$0xff]
    %v3444 = vld [vmem:[%s3424 + $0x98] sm:$0xff]
    %v3445 = vld [vmem:[%s3424 + $0xa0] sm:$0xff]
    %v3446 = vld [vmem:[%s3424 + $0xa8] sm:$0xff]
    %v3447 = vld [vmem:[%s3424 + $0xb0] sm:$0xff]
    %v3448 = vld [vmem:[%s3424 + $0xb8] sm:$0xff]
    %v3449 = vld [vmem:[%s3424 + $0xc0] sm:$0xff]
    %v3450 = vld [vmem:[%s3424 + $0xc8] sm:$0xff]
    %v3451 = vld [vmem:[%s3424 + $0xd0] sm:$0xff]
    %v3452 = vld [vmem:[%s3424 + $0xd8] sm:$0xff]
    %v3453 = vld [vmem:[%s3424 + $0xe0] sm:$0xff]
    %v3454 = vld [vmem:[%s3424 + $0xe8] sm:$0xff]
    %v3455 = vld [vmem:[%s3424 + $0xf0] sm:$0xff]
    %v3456 = vld [vmem:[%s3424 + $0xf8] sm:$0xff]
    %3457 = vmatprep.subr.mxu0 0.0
    %3458 = vmatpush1.msra.mxu0 %v3425
    %3459 = vmatprep.subr.mxu0 0.0
    %3460 = vmatpush1.msra.mxu0 %v3426
    %3461 = vmatprep.subr.mxu0 0.0
    %3462 = vmatpush1.msra.mxu0 %v3427
    %3463 = vmatprep.subr.mxu0 0.0
    %3464 = vmatpush1.msra.mxu0 %v3428
    %3465 = vmatprep.subr.mxu0 0.0
    %3466 = vmatpush1.msra.mxu0 %v3429
    %3467 = vmatprep.subr.mxu0 0.0
    %3468 = vmatpush1.msra.mxu0 %v3430
    %3469 = vmatprep.subr.mxu0 0.0
    %3470 = vmatpush1.msra.mxu0 %v3431
    %3471 = vmatprep.subr.mxu0 0.0
    %3472 = vmatpush1.msra.mxu0 %v3432
    %3473 = vmatprep.subr.mxu0 0.0
    %3474 = vmatpush1.msra.mxu0 %v3433
    %3475 = vmatprep.subr.mxu0 0.0
    %3476 = vmatpush1.msra.mxu0 %v3434
    %3477 = vmatprep.subr.mxu0 0.0
    %3478 = vmatpush1.msra.mxu0 %v3435
    %3479 = vmatprep.subr.mxu0 0.0
    %3480 = vmatpush1.msra.mxu0 %v3436
    %3481 = vmatprep.subr.mxu0 0.0
    %3482 = vmatpush1.msra.mxu0 %v3437
    %3483 = vmatprep.subr.mxu0 0.0
    %3484 = vmatpush1.msra.mxu0 %v3438
    %3485 = vmatprep.subr.mxu0 0.0
    %3486 = vmatpush1.msra.mxu0 %v3439
    %3487 = vmatprep.subr.mxu0 0.0
    %3488 = vmatpush1.msra.mxu0 %v3440
    %3489 = vmatprep.subr.mxu0 0.0
    %3490 = vmatpush1.msra.mxu0 %v3441
    %3491 = vmatprep.subr.mxu0 0.0
    %3492 = vmatpush1.msra.mxu0 %v3442
    %3493 = vmatprep.subr.mxu0 0.0
    %3494 = vmatpush1.msra.mxu0 %v3443
    %3495 = vmatprep.subr.mxu0 0.0
    %3496 = vmatpush1.msra.mxu0 %v3444
    %3497 = vmatprep.subr.mxu0 0.0
    %3498 = vmatpush1.msra.mxu0 %v3445
    %3499 = vmatprep.subr.mxu0 0.0
    %3500 = vmatpush1.msra.mxu0 %v3446
    %3501 = vmatprep.subr.mxu0 0.0
    %3502 = vmatpush1.msra.mxu0 %v3447
    %3503 = vmatprep.subr.mxu0 0.0
    %3504 = vmatpush1.msra.mxu0 %v3448
    %3505 = vmatprep.subr.mxu0 0.0
    %3506 = vmatpush1.msra.mxu0 %v3449
    %3507 = vmatprep.subr.mxu0 0.0
    %3508 = vmatpush1.msra.mxu0 %v3450
    %3509 = vmatprep.subr.mxu0 0.0
    %3510 = vmatpush1.msra.mxu0 %v3451
    %3511 = vmatprep.subr.mxu0 0.0
    %3512 = vmatpush1.msra.mxu0 %v3452
    %3513 = vmatprep.subr.mxu0 0.0
    %3514 = vmatpush1.msra.mxu0 %v3453
    %3515 = vmatprep.subr.mxu0 0.0
    %3516 = vmatpush1.msra.mxu0 %v3454
    %3517 = vmatprep.subr.mxu0 0.0
    %3518 = vmatpush1.msra.mxu0 %v3455
    %3519 = vmatprep.subr.mxu0 0.0
    %3520 = vmatpush1.msra.mxu0 %v3456
    %3521 = vmatprep.mubr.f32.mxu0 %v3421
    %3522 = vmatmul.mubr.f32.gmra.mrb[0].mxu0 %v3420
    %v3523 = vpop.f32.mrb[0].mxu0
    %v3524 = vadd.f32 0.0, %v3523
    %v3525 = vpop.f32.mrb[0].mxu0
    %3526 = vmatprep.mubr.f32.mxu0 %v3423
    %3527 = vmatmul.mubr.f32.gmra.mrb[0].mxu0 %v3422
    %v3528 = vpop.f32.mrb[0].mxu0
    %v3529 = vadd.f32 0.0, %v3528
    %v3530 = vpop.f32.mrb[0].mxu0
    %3531 = vdwg.mxu0
    %v3532 = vadd.f32 %v3260, %v3524
    %v3533 = vadd.f32 %v3261, %v3529
    %v3534 = vld [vmem:[%s15] sm:$0x1]
    %v3535 = vmul.f32 %v3532, %v3532
    %v3536 = vmul.f32 %v3533, %v3533
    %v3537 = vsel %vm86, %v3535, 0.0
    %3538 = vadd.xlane.f32.xlu0 %v3537
    %v3539 = vpop.xlane.xlu0 %3538
    %v3540 = vsel %vm86, %v3536, 0.0
    %3541 = vadd.xlane.f32.xlu0 %v3540
    %v3542 = vpop.xlane.xlu0 %3541
    %v3543 = vmul.f32 %v3539, %v93
    %v3544 = vmul.f32 %v3542, %v93
    %v3545 = vadd.f32 %v3543, 1e-08
    %v3546 = vadd.f32 %v3544, 1e-08
    %v3547 = vrsqrt.pop %v3545
    %v3548 = vrsqrt.pop %v3546
    %v3549 = vmul.f32 %v3532, %v3547
    %v3550 = vmul.f32 %v3533, %v3548
    %v3552 = vlaneseq
    %v3553 = vshrl.u32 %v3552, 7
    %v3554 = vsub.s32 0, %v3553
    %v3555 = vrot.slane %v3534, %v3554
    %v3557 = vmul.f32 %v3549, %v3555
    %v3558 = vmul.f32 %v3550, %v3555
    %v3559 = vld [vmem:[%s16] sm:$0xff]
    %v3560 = vld [vmem:[%s16 + $0x8] sm:$0xff]
    %v3561 = vld [vmem:[%s16 + $0x10] sm:$0xff]
    %v3562 = vld [vmem:[%s16 + $0x18] sm:$0xff]
    %v3563 = vld [vmem:[%s16 + $0x20] sm:$0xff]
    %v3564 = vld [vmem:[%s16 + $0x28] sm:$0xff]
    %v3565 = vld [vmem:[%s16 + $0x30] sm:$0xff]
    %v3566 = vld [vmem:[%s16 + $0x38] sm:$0xff]
    %v3567 = vld [vmem:[%s17] sm:$0x1]
    %v3569 = vlaneseq
    %v3570 = vshrl.u32 %v3569, 7
    %v3571 = vsub.s32 0, %v3570
    %v3572 = vrot.slane %v3567, %v3571
    %v3575 = vsel %vm86, %v3557, 0
    %v3578 = vsel %vm86, %v3558, 0
    %3580 = vmatprep.subr.mxu0 0.0
    %3581 = vmatpush1.msra.mxu0 %v3559
    %3582 = vmatprep.subr.mxu0 0.0
    %3583 = vmatpush1.msra.mxu0 %v3560
    %3584 = vmatprep.subr.mxu0 0.0
    %3585 = vmatpush1.msra.mxu0 %v3561
    %3586 = vmatprep.subr.mxu0 0.0
    %3587 = vmatpush1.msra.mxu0 %v3562
    %3588 = vmatprep.subr.mxu0 0.0
    %3589 = vmatpush1.msra.mxu0 %v3563
    %3590 = vmatprep.subr.mxu0 0.0
    %3591 = vmatpush1.msra.mxu0 %v3564
    %3592 = vmatprep.subr.mxu0 0.0
    %3593 = vmatpush1.msra.mxu0 %v3565
    %3594 = vmatprep.subr.mxu0 0.0
    %3595 = vmatpush1.msra.mxu0 %v3566
    %3596 = vmatprep.subr.mxu0 0.0
    %3597 = vmatpush1.msra.mxu0 0.0
    %3598 = vmatprep.subr.mxu0 0.0
    %3599 = vmatpush1.msra.mxu0 0.0
    %3600 = vmatprep.subr.mxu0 0.0
    %3601 = vmatpush1.msra.mxu0 0.0
    %3602 = vmatprep.subr.mxu0 0.0
    %3603 = vmatpush1.msra.mxu0 0.0
    %3604 = vmatprep.subr.mxu0 0.0
    %3605 = vmatpush1.msra.mxu0 0.0
    %3606 = vmatprep.subr.mxu0 0.0
    %3607 = vmatpush1.msra.mxu0 0.0
    %3608 = vmatprep.subr.mxu0 0.0
    %3609 = vmatpush1.msra.mxu0 0.0
    %3610 = vmatprep.subr.mxu0 0.0
    %3611 = vmatpush1.msra.mxu0 0.0
    %3612 = vmatprep.subr.mxu0 0.0
    %3613 = vmatpush1.msra.mxu0 0.0
    %3614 = vmatprep.subr.mxu0 0.0
    %3615 = vmatpush1.msra.mxu0 0.0
    %3616 = vmatprep.subr.mxu0 0.0
    %3617 = vmatpush1.msra.mxu0 0.0
    %3618 = vmatprep.subr.mxu0 0.0
    %3619 = vmatpush1.msra.mxu0 0.0
    %3620 = vmatprep.subr.mxu0 0.0
    %3621 = vmatpush1.msra.mxu0 0.0
    %3622 = vmatprep.subr.mxu0 0.0
    %3623 = vmatpush1.msra.mxu0 0.0
    %3624 = vmatprep.subr.mxu0 0.0
    %3625 = vmatpush1.msra.mxu0 0.0
    %3626 = vmatprep.subr.mxu0 0.0
    %3627 = vmatpush1.msra.mxu0 0.0
    %3628 = vmatprep.subr.mxu0 0.0
    %3629 = vmatpush1.msra.mxu0 0.0
    %3630 = vmatprep.subr.mxu0 0.0
    %3631 = vmatpush1.msra.mxu0 0.0
    %3632 = vmatprep.subr.mxu0 0.0
    %3633 = vmatpush1.msra.mxu0 0.0
    %3634 = vmatprep.subr.mxu0 0.0
    %3635 = vmatpush1.msra.mxu0 0.0
    %3636 = vmatprep.subr.mxu0 0.0
    %3637 = vmatpush1.msra.mxu0 0.0
    %3638 = vmatprep.subr.mxu0 0.0
    %3639 = vmatpush1.msra.mxu0 0.0
    %3640 = vmatprep.subr.mxu0 0.0
    %3641 = vmatpush1.msra.mxu0 0.0
    %3642 = vmatprep.subr.mxu0 0.0
    %3643 = vmatpush1.msra.mxu0 0.0
    %3644 = vmatprep.mubr.f32.mxu0 0.0
    %3645 = vmatmul.mubr.f32.gmra.mrb[0].mxu0 %v3575
    %v3646 = vpop.f32.mrb[0].mxu0
    %v3647 = vadd.f32 %v3572, %v3646
    %v3648 = vpop.f32.mrb[0].mxu0
    %3649 = vmatprep.mubr.f32.mxu0 0.0
    %3650 = vmatmul.mubr.f32.gmra.mrb[0].mxu0 %v3578
    %v3651 = vpop.f32.mrb[0].mxu0
    %v3652 = vadd.f32 %v3572, %v3651
    %v3653 = vpop.f32.mrb[0].mxu0
    %3654 = vdwg.mxu0
    %3655 = vst [vmem:[#allocation5] sm:$0xff] %v3647
    %3656 = vst [vmem:[#allocation5 + $0x8] sm:$0xff] %v3652
    %3657 = vrot.lane.b32.xlu0 %v191, 96
    %v3658 = vpop.permute.xlu0 %3657
    %3659 = vrot.lane.b32.xlu0 %v196, 96
    %v3660 = vpop.permute.xlu0 %3659
    %3665 = vrot.lane.b32.xlu0 %v2522, 64
    %v3666 = vpop.permute.xlu0 %3665
    %3667 = vrot.lane.b32.xlu0 %v2523, 64
    %v3668 = vpop.permute.xlu0 %3667
    %3671 = vrot.lane.b32.xlu0 %v1922, 32
    %v3672 = vpop.permute.xlu0 %3671
    %3673 = vrot.lane.b32.xlu0 %v1927, 32
    %v3674 = vpop.permute.xlu0 %3673
    %v3677 = vsel %vm705, %v797, %v3658
    %v3678 = vsel %vm705, %v798, %v3660
    %v3679 = vsel %vm86, %v3677, %v3666
    %v3680 = vsel %vm86, %v3678, %v3668
    %vm3681 = vcmask 785408
    %v3682 = vsel %vm3681, %v3679, %v3672
    %v3683 = vsel %vm3681, %v3680, %v3674
    %3684 = vst [vmem:[%s19] sm:$0xff] %v3682
    %3685 = vst [vmem:[%s19 + $0x8] sm:$0xff] %v3683
    // Predicated region
    $region78: #{cross_attn_decoder_forward.1} parent=1 // pred_check
      _
    $region79: #{cross_attn_decoder_forward.1} parent=1 // pred_check_branch
      %3687 = sbr.rel (0) target = $region81
    $region80: #{cross_attn_decoder_forward.1} parent=1 // pred_region
      %s3689 = ssub.s32 256, 256
      %3690 = vsyncadd [#allocation3], %s3689
      %s3691 = sshll.u32 [#allocation5], 4
      %s3692 = int_to_ptr.vmem [resolvable:$true] %s3691
      %3697 = dma.vmem_to_hbm [thread:$0]  %s3692, 256, %s18, [#allocation3], 128, 128, 8
    $region81: #{cross_attn_decoder_forward.1} parent=1 // pred_fallthru
      _
    // Predicated region
    $region82: #{cross_attn_decoder_forward.1} parent=1 // pred_check
      _
    $region83: #{cross_attn_decoder_forward.1} parent=1 // pred_check_branch
      %3699 = sbr.rel (0) target = $region85
    $region84: #{cross_attn_decoder_forward.1} parent=1 // pred_region
      _
    $region85: #{cross_attn_decoder_forward.1} parent=1 // pred_fallthru
      _
    // Predicated region
    $region86: #{cross_attn_decoder_forward.1} parent=1 // pred_check
      _
    $region87: #{cross_attn_decoder_forward.1} parent=1 // pred_check_branch
      %3701 = sbr.rel (0) target = $region89
    $region88: #{cross_attn_decoder_forward.1} parent=1 // pred_region
      %3702 = dma.done [#allocation3], 256
    $region89: #{cross_attn_decoder_forward.1} parent=1 // pred_fallthru
      _
    // Predicated region
    $region90: #{cross_attn_decoder_forward.1} parent=1 // pred_check
      _
    $region91: #{cross_attn_decoder_forward.1} parent=1 // pred_check_branch
      %3704 = sbr.rel (0) target = $region93
    $region92: #{cross_attn_decoder_forward.1} parent=1 // pred_region
      _
    $region93: #{cross_attn_decoder_forward.1} parent=1 // pred_fallthru
      _
    %3705 = vsyncpa [#allocation3], 1
    %3706 = vsyncpa [#allocation4], 1

</llo_original>
